<compile_context>
chip_gen: v7x
topology: tpu7x:2x2x1
jax: 0.10.0
libtpu: 0.0.40
codegen_flags: <defaults>
</compile_context>

<pallas_src>
import functools

import jax
import jax.numpy as jnp
from jax.experimental import pallas as pl
from jax.experimental.pallas import tpu as pltpu

_NEG_BIG = -1e30          # finite "-inf" mask value: exp() can never NaN
_EPS = 1e-5


def _vmem_limit_and_default_tq():
    """Per-generation VMEM limit / q-tile default (v5e/v6e: 128 MiB, v7x: 64 MiB)."""
    cap = 64 << 20
    try:
        cap = int(getattr(pltpu.get_tpu_info(), "vmem_capacity_bytes", cap))
    except Exception:
        pass
    vmem_limit = min((cap * 3) // 4, 96 << 20)   # 96 MiB on v5e/v6e, 48 MiB on v7x
    default_tq = 256 if cap >= (100 << 20) else 128
    return vmem_limit, default_tq


# --------------------------------------------------------------------------
# Kernel 1: LayerNorm1 + fused QKV projection for one (1, TQ, C) tile
# --------------------------------------------------------------------------
def _ln_qkv_kernel(x_ref, g_ref, b_ref, wqkv_ref, qkv_ref):
    x = x_ref[0].astype(jnp.float32)                        # (TQ, C)
    mu = jnp.mean(x, axis=-1, keepdims=True)
    var = jnp.mean(jnp.square(x - mu), axis=-1, keepdims=True)
    h = (x - mu) * jax.lax.rsqrt(var + _EPS)
    h = h * g_ref[0] + b_ref[0]
    # one wide MXU matmul instead of 3 (bf16 operands, f32 accumulation)
    qkv = jnp.dot(h.astype(jnp.bfloat16), wqkv_ref[...],
                  preferred_element_type=jnp.float32)       # (TQ, 3C)
    qkv_ref[0] = qkv.astype(qkv_ref.dtype)


# --------------------------------------------------------------------------
# Kernel 2: flash attention + out-proj + residual + LN2 + FFN + residual
# --------------------------------------------------------------------------
def _attn_ffn_kernel(x_ref, q_ref, k_ref, v_ref,
                     wp_ref, bp_ref, ln2_g_ref, ln2_b_ref,
                     w1_ref, b1_ref, w2_ref, b2_ref,
                     o_ref,
                     m_ref, l_ref, acc_ref,
                     *, n_head: int):
    qi = pl.program_id(1)
    kvi = pl.program_id(2)
    TQ, C = acc_ref.shape
    TKV = k_ref.shape[1]
    D = C // n_head
    scale = jnp.float32(D) ** -0.5

    @pl.when(kvi == 0)
    def _init():
        m_ref[...] = jnp.full_like(m_ref, _NEG_BIG)
        l_ref[...] = jnp.zeros_like(l_ref)
        acc_ref[...] = jnp.zeros_like(acc_ref)

    def flash_step(masked):
        q = q_ref[0]                                        # (TQ, C)  bf16
        k = k_ref[0]                                        # (TKV, C) bf16
        v = v_ref[0]                                        # (TKV, C) bf16

        # Per-head QK^T on lane-contiguous column slices (contraction K = D).
        # NOTE: D < 128 underfills the 256-deep v6e/v7x MXU; this path is only
        # MXU-efficient for D >= 128.  Acceptable here: attention is a small
        # fraction of the block FLOPs next to the fused proj/FFN matmuls.
        s = jnp.stack(
            [jax.lax.dot_general(
                 q[:, h * D:(h + 1) * D], k[:, h * D:(h + 1) * D],
                 dimension_numbers=(((1,), (1,)), ((), ())),
                 preferred_element_type=jnp.float32)
             for h in range(n_head)], axis=0) * scale       # (H, TQ, TKV)

        if masked:
            # Only the diagonal block needs masking; with TQ == TKV the mask
            # is the purely local lower triangle (no global row/col indices).
            causal = (jax.lax.broadcasted_iota(jnp.int32, (TQ, TKV), 1)
                      <= jax.lax.broadcasted_iota(jnp.int32, (TQ, TKV), 0))
            s = jnp.where(causal, s, _NEG_BIG)

        # Online softmax bookkeeping, batched over heads; whole-ref writes
        # (no per-head masked sub-writes).
        m_prev = m_ref[...]                                  # (H, TQ, 1)
        m_new = jnp.maximum(m_prev, jnp.max(s, axis=-1, keepdims=True))
        alpha = jnp.exp(m_prev - m_new)                      # (H, TQ, 1)
        p = jnp.exp(s - m_new)                               # (H, TQ, TKV)
        l_ref[...] = alpha * l_ref[...] + jnp.sum(p, axis=-1, keepdims=True)
        m_ref[...] = m_new

        # Per-head PV, concatenated along lanes into a single (TQ, C) tile so
        # the accumulator gets ONE unmasked, lane-dense read-modify-write.
        p_bf = p.astype(jnp.bfloat16)
        pv = jnp.concatenate(
            [jnp.dot(p_bf[h], v[:, h * D:(h + 1) * D],
                     preferred_element_type=jnp.float32)
             for h in range(n_head)], axis=1)                # (TQ, C)
        alpha_full = jnp.concatenate(
            [jnp.broadcast_to(alpha[h], (TQ, D)) for h in range(n_head)],
            axis=1)                                          # (TQ, C)
        acc_ref[...] = alpha_full * acc_ref[...] + pv

    # Fully-below-diagonal KV blocks: no mask construction at all.
    @pl.when(kvi < qi)
    def _full_block():
        flash_step(masked=False)

    # Diagonal block (with TQ == TKV this is the last contributing kv block):
    # masked step, then the fused out-proj / LN2 / FFN / residual epilogue.
    @pl.when(kvi == qi)
    def _diag_and_epilogue():
        flash_step(masked=True)

        # Softmax normalization: one lane-dense (TQ, C) multiply; reciprocal
        # goes to the EUP (approx) instead of the VALU.
        inv = pl.reciprocal(l_ref[...], approx=True)         # (H, TQ, 1)
        inv_full = jnp.concatenate(
            [jnp.broadcast_to(inv[h], (TQ, D)) for h in range(n_head)],
            axis=1)                                          # (TQ, C)
        att = (acc_ref[...] * inv_full).astype(jnp.bfloat16)

        proj = jnp.dot(att, wp_ref[...],
                       preferred_element_type=jnp.float32) + bp_ref[0]
        x1 = x_ref[0].astype(jnp.float32) + proj             # residual 1

        mu = jnp.mean(x1, axis=-1, keepdims=True)
        var = jnp.mean(jnp.square(x1 - mu), axis=-1, keepdims=True)
        h2 = (x1 - mu) * jax.lax.rsqrt(var + _EPS)
        h2 = h2 * ln2_g_ref[0] + ln2_b_ref[0]

        f = jnp.dot(h2.astype(jnp.bfloat16), w1_ref[...],
                    preferred_element_type=jnp.float32) + b1_ref[0]
        f = jax.nn.gelu(f, approximate=False)   # exact erf == torch.nn.GELU()
        y = jnp.dot(f.astype(jnp.bfloat16), w2_ref[...],
                    preferred_element_type=jnp.float32) + b2_ref[0]

        o_ref[0] = (x1 + y).astype(o_ref.dtype)              # residual 2


# --------------------------------------------------------------------------
# Wrapper
# --------------------------------------------------------------------------
def block_forward(x, params, n_head, *, tq=None):
    B, T, C = x.shape
    H = 4 * C
    (ln1_g, ln1_b, wq, wk, wv, wp, bp, ln2_g, ln2_b, w1, b1, w2, b2) = params

    assert C % 128 == 0, "n_embed must be a multiple of 128 (lane-dense tiles)"
    assert C % n_head == 0

    vmem_limit, default_tq = _vmem_limit_and_default_tq()
    if tq is None:
        tq = default_tq
    tq = min(tq, T)
    assert T % tq == 0 and tq % 8 == 0
    nq = T // tq

    bf = jnp.bfloat16
    w_qkv = jnp.concatenate([wq, wk, wv], axis=1).astype(bf)   # fused (C, 3C)
    wp_b, w1_b, w2_b = wp.astype(bf), w1.astype(bf), w2.astype(bf)

    # Grid-invariant (resident) operands: single-buffered -> no pointless 2x
    # VMEM for blocks whose index never changes.
    def const(shape):
        idx = lambda *_: (0,) * len(shape)
        try:
            return pl.BlockSpec(shape, idx, pipeline_mode=pl.Buffered(1))
        except Exception:                      # older jax without pipeline_mode
            return pl.BlockSpec(shape, idx)

    # ---------------- kernel 1: LN1 + fused QKV ----------------
    qkv = pl.pallas_call(
        _ln_qkv_kernel,
        out_shape=jax.ShapeDtypeStruct((B, T, 3 * C), bf),
        grid_spec=pltpu.PrefetchScalarGridSpec(
            num_scalar_prefetch=0,
            grid=(B, nq),
            in_specs=[
                pl.BlockSpec((1, tq, C), lambda b, t: (b, t, 0)),
                const((1, C)), const((1, C)),              # ln1 gamma, beta
                const((C, 3 * C)),                          # fused qkv weight
            ],
            out_specs=pl.BlockSpec((1, tq, 3 * C), lambda b, t: (b, t, 0)),
        ),
        compiler_params=pltpu.CompilerParams(
            dimension_semantics=("parallel", "parallel"),
            vmem_limit_bytes=vmem_limit),
        cost_estimate=pl.CostEstimate(
            flops=2 * B * T * C * 3 * C,
            transcendentals=B * T,
            bytes_accessed=(B * T * C * 4 + B * T * 3 * C * 2
                            + 3 * C * C * 2 + 2 * C * 4)),
    )(x, ln1_g, ln1_b, w_qkv)

    # ------- kernel 2: flash attention + proj + LN2 + FFN (+ residuals) -----
    kernel = functools.partial(_attn_ffn_kernel, n_head=n_head)
    attn_flops = 2 * B * T * T * C                 # QK^T + PV, causal-halved
    mm_flops = 2 * B * T * C * C + 16 * B * T * C * C
    kv_bytes = 2 * B * (nq * (nq + 1) // 2) * tq * C * 2   # K/V re-read factor
    bytes_accessed = (2 * B * T * C * 4            # x in (f32) + out (f32)
                      + B * T * C * 2              # Q read once per q tile
                      + kv_bytes
                      + (C * C + 8 * C * C) * 2    # wp + w1 + w2 (bf16)
                      + (4 * C + 4 * C) * 4)       # biases / LN params (f32)

    return pl.pallas_call(
        kernel,
        out_shape=jax.ShapeDtypeStruct((B, T, C), x.dtype),
        grid_spec=pltpu.PrefetchScalarGridSpec(
            num_scalar_prefetch=0,
            grid=(B, nq, nq),
            in_specs=[
                # raw x tile (residual input), resident across the kv axis
                pl.BlockSpec((1, tq, C), lambda b, q, k: (b, q, 0)),
                # q / k / v views of the packed (B, T, 3C) qkv array.
                # kv block index is clamped to q: blocks above the causal
                # diagonal re-use the already-fetched block (no extra DMA).
                pl.BlockSpec((1, tq, C), lambda b, q, k: (b, q, 0)),
                pl.BlockSpec((1, tq, C),
                             lambda b, q, k: (b, jnp.minimum(k, q), 1)),
                pl.BlockSpec((1, tq, C),
                             lambda b, q, k: (b, jnp.minimum(k, q), 2)),
                const((C, C)), const((1, C)),              # wp, bp
                const((1, C)), const((1, C)),              # ln2 gamma, beta
                const((C, H)), const((1, H)),              # w1, b1
                const((H, C)), const((1, C)),              # w2, b2
            ],
            out_specs=pl.BlockSpec((1, tq, C), lambda b, q, k: (b, q, 0)),
            scratch_shapes=[
                pltpu.VMEM((n_head, tq, 1), jnp.float32),  # running max  m
                pltpu.VMEM((n_head, tq, 1), jnp.float32),  # running sum  l
                pltpu.VMEM((tq, C), jnp.float32),          # PV accumulator
            ],
        ),
        compiler_params=pltpu.CompilerParams(
            # B and nq axes are "parallel" -> sharded across the two v7x TCs.
            dimension_semantics=("parallel", "parallel", "arbitrary"),
            vmem_limit_bytes=vmem_limit),
        cost_estimate=pl.CostEstimate(
            flops=attn_flops + mm_flops,
            transcendentals=B * n_head * T * T // 2 + B * T * 4 * C + B * T,
            bytes_accessed=bytes_accessed),
    )(x, qkv, qkv, qkv, wp_b, bp, ln2_g, ln2_b, w1_b, b1, w2_b, b2)


# --------------------------------------------------------------------------
# Pure-JAX f32 reference (matches the PyTorch Block in eval mode)
# --------------------------------------------------------------------------
def _reference(x, params, n_head):
    (ln1_g, ln1_b, wq, wk, wv, wp, bp, ln2_g, ln2_b, w1, b1, w2, b2) = params
    B, T, C = x.shape
    D = C // n_head

    def ln(z, g, b):
        mu = jnp.mean(z, -1, keepdims=True)
        var = jnp.mean((z - mu) ** 2, -1, keepdims=True)
        return (z - mu) * jax.lax.rsqrt(var + _EPS) * g[0] + b[0]

    h = ln(x, ln1_g, ln1_b)
    q = (h @ wq).reshape(B, T, n_head, D).transpose(0, 2, 1, 3)
    k = (h @ wk).reshape(B, T, n_head, D).transpose(0, 2, 1, 3)
    v = (h @ wv).reshape(B, T, n_head, D).transpose(0, 2, 1, 3)
    wei = (q @ jnp.swapaxes(k, -2, -1)) * D ** -0.5
    mask = jnp.tril(jnp.ones((T, T), bool))
    wei = jnp.where(mask, wei, -jnp.inf)
    wei = jax.nn.softmax(wei, -1)
    att = (wei @ v).transpose(0, 2, 1, 3).reshape(B, T, C)
    att = att @ wp + bp[0]
    x1 = x + att
    h2 = ln(x1, ln2_g, ln2_b)
    f = jax.nn.gelu(h2 @ w1 + b1[0], approximate=False) @ w2 + b2[0]
    return x1 + f


if __name__ == "__main__":
    # Shapes consistent with the module's Config: n_embed=384, n_head=6,
    # block_size=256 (small batch).
    B, T, C, n_head = 2, 256, 384, 6
    H = 4 * C

    key = jax.random.PRNGKey(0)
    ks = jax.random.split(key, 10)
    s = 0.02
    x = jax.random.normal(ks[0], (B, T, C), jnp.float32)

    params = (
        jnp.ones((1, C), jnp.float32),                          # ln1 gamma
        jnp.zeros((1, C), jnp.float32),                         # ln1 beta
        jax.random.normal(ks[1], (C, C), jnp.float32) * s,      # wq (pre-transposed)
        jax.random.normal(ks[2], (C, C), jnp.float32) * s,      # wk
        jax.random.normal(ks[3], (C, C), jnp.float32) * s,      # wv
        jax.random.normal(ks[4], (C, C), jnp.float32) * s,      # wp
        jax.random.normal(ks[5], (1, C), jnp.float32) * s,      # bp
        jnp.ones((1, C), jnp.float32),                          # ln2 gamma
        jnp.zeros((1, C), jnp.float32),                         # ln2 beta
        jax.random.normal(ks[6], (C, H), jnp.float32) * s,      # w1
        jax.random.normal(ks[7], (1, H), jnp.float32) * s,      # b1
        jax.random.normal(ks[8], (H, C), jnp.float32) * s,      # w2
        jax.random.normal(ks[9], (1, C), jnp.float32) * s,      # b2
    )

    # tq=128 -> 2x2 (q, kv) tile grid: exercises the flash KV loop, the causal
    # block-skip / DMA-dedup path and the mask-only-on-diagonal branch.
    out = block_forward(x, params, n_head, tq=128)
    out = jax.block_until_ready(out)

    ref = _reference(x, params, n_head)
    assert out.shape == (B, T, C)
    err = float(jnp.max(jnp.abs(out - ref)))
    # bf16 matmul operands (f32 accumulation) + approx reciprocal => loose tol
    assert jnp.allclose(out, ref, atol=2e-2, rtol=2e-2), \
        f"mismatch vs reference, max abs err = {err}"

    print("KERNEL_OK")
</pallas_src>

<mosaic_0001>
module attributes {stable_mosaic.version = 11 : i64} {
  func.func @_ln_qkv_kernel(%arg0: i32, %arg1: i32, %arg2: memref<1x128x384xf32, #tpu.memory_space<vmem>>, %arg3: memref<1x384xf32, #tpu.memory_space<vmem>>, %arg4: memref<1x384xf32, #tpu.memory_space<vmem>>, %arg5: memref<384x1152xbf16, #tpu.memory_space<vmem>>, %arg6: memref<1x128x1152xbf16, #tpu.memory_space<vmem>>) attributes {dimension_semantics = [#tpu.dimension_semantics<parallel>, #tpu.dimension_semantics<parallel>], iteration_bounds = array<i64: 2, 2>, scalar_prefetch = 0 : i64, scratch_operands = 0 : i64, tpu.core_type = #tpu.core_type<tc>, window_params = [{transform_indices = @transform_0, window_bounds = array<i64: 1, 128, 384>}, {pipeline_mode = #tpu.pipeline_mode<synchronous>, transform_indices = @transform_1, window_bounds = array<i64: 1, 384>}, {pipeline_mode = #tpu.pipeline_mode<synchronous>, transform_indices = @transform_2, window_bounds = array<i64: 1, 384>}, {pipeline_mode = #tpu.pipeline_mode<synchronous>, transform_indices = @transform_3, window_bounds = array<i64: 384, 1152>}, {transform_indices = @transform_4, window_bounds = array<i64: 1, 128, 1152>}]} {
    %c0 = arith.constant 0 : index
    %c0_0 = arith.constant 0 : index
    %c0_1 = arith.constant 0 : index
    %0 = vector.load %arg2[%c0, %c0_0, %c0_1] : memref<1x128x384xf32, #tpu.memory_space<vmem>>, vector<1x128x384xf32>
    %1 = vector.shape_cast %0 : vector<1x128x384xf32> to vector<128x384xf32>
    %cst = arith.constant dense<0.000000e+00> : vector<128xf32>
    %2 = vector.multi_reduction <add>, %1, %cst [1] : vector<128x384xf32> to vector<128xf32>
    %3 = vector.shape_cast %2 : vector<128xf32> to vector<128x1xf32>
    %cst_2 = arith.constant 3.840000e+02 : f32
    %4 = vector.broadcast %cst_2 : f32 to vector<128x1xf32>
    %5 = arith.divf %3, %4 : vector<128x1xf32>
    %6 = vector.broadcast %5 : vector<128x1xf32> to vector<128x384xf32>
    %7 = arith.subf %1, %6 : vector<128x384xf32>
    %8 = arith.mulf %7, %7 : vector<128x384xf32>
    %cst_3 = arith.constant dense<0.000000e+00> : vector<128xf32>
    %9 = vector.multi_reduction <add>, %8, %cst_3 [1] : vector<128x384xf32> to vector<128xf32>
    %10 = vector.shape_cast %9 : vector<128xf32> to vector<128x1xf32>
    %cst_4 = arith.constant 3.840000e+02 : f32
    %11 = vector.broadcast %cst_4 : f32 to vector<128x1xf32>
    %12 = arith.divf %10, %11 : vector<128x1xf32>
    %13 = vector.broadcast %5 : vector<128x1xf32> to vector<128x384xf32>
    %14 = arith.subf %1, %13 : vector<128x384xf32>
    %cst_5 = arith.constant 9.99999974E-6 : f32
    %15 = vector.broadcast %cst_5 : f32 to vector<128x1xf32>
    %16 = arith.addf %12, %15 : vector<128x1xf32>
    %17 = math.rsqrt %16 : vector<128x1xf32>
    %18 = vector.broadcast %17 : vector<128x1xf32> to vector<128x384xf32>
    %19 = arith.mulf %14, %18 : vector<128x384xf32>
    %c0_6 = arith.constant 0 : index
    %c0_7 = arith.constant 0 : index
    %20 = vector.load %arg3[%c0_6, %c0_7] : memref<1x384xf32, #tpu.memory_space<vmem>>, vector<1x384xf32>
    %21 = vector.shape_cast %20 : vector<1x384xf32> to vector<384xf32>
    %22 = vector.shape_cast %21 : vector<384xf32> to vector<1x384xf32>
    %23 = vector.broadcast %22 : vector<1x384xf32> to vector<128x384xf32>
    %24 = arith.mulf %19, %23 : vector<128x384xf32>
    %c0_8 = arith.constant 0 : index
    %c0_9 = arith.constant 0 : index
    %25 = vector.load %arg4[%c0_8, %c0_9] : memref<1x384xf32, #tpu.memory_space<vmem>>, vector<1x384xf32>
    %26 = vector.shape_cast %25 : vector<1x384xf32> to vector<384xf32>
    %27 = vector.shape_cast %26 : vector<384xf32> to vector<1x384xf32>
    %28 = vector.broadcast %27 : vector<1x384xf32> to vector<128x384xf32>
    %29 = arith.addf %24, %28 : vector<128x384xf32>
    %30 = arith.truncf %29 : vector<128x384xf32> to vector<128x384xbf16>
    %c0_10 = arith.constant 0 : index
    %c0_11 = arith.constant 0 : index
    %31 = vector.load %arg5[%c0_10, %c0_11] : memref<384x1152xbf16, #tpu.memory_space<vmem>>, vector<384x1152xbf16>
    %cst_12 = arith.constant dense<0.000000e+00> : vector<128x1152xf32>
    %32 = tpu.matmul %30, %31, %cst_12 {dimension_numbers = #tpu.dot_dimension_numbers<[1], [0], [0], [1], [0, 0, 1, 1], [], []>} : vector<128x384xbf16>, vector<384x1152xbf16>, vector<128x1152xf32> -> vector<128x1152xf32>
    %33 = arith.truncf %32 : vector<128x1152xf32> to vector<128x1152xbf16>
    %c0_13 = arith.constant 0 : index
    %c0_14 = arith.constant 0 : index
    %c0_15 = arith.constant 0 : index
    %34 = vector.load %arg6[%c0_13, %c0_14, %c0_15] : memref<1x128x1152xbf16, #tpu.memory_space<vmem>>, vector<1x128x1152xbf16>
    %35 = vector.shape_cast %34 : vector<1x128x1152xbf16> to vector<128x1152xbf16>
    %36 = vector.shape_cast %33 : vector<128x1152xbf16> to vector<1x128x1152xbf16>
    tpu.vector_store %arg6[%c0_13, %c0_14, %c0_15], %36 {strides = array<i32>} : memref<1x128x1152xbf16, #tpu.memory_space<vmem>>, vector<1x128x1152xbf16>,
    return
  }
  func.func @transform_0(%arg0: i32, %arg1: i32) -> (i32, i32, i32) {
    %c0_i32 = arith.constant 0 : i32
    %c0_i32_0 = arith.constant 0 : i32
    return %arg0, %arg1, %c0_i32 : i32, i32, i32
  }
  func.func @transform_1(%arg0: i32, %arg1: i32) -> (i32, i32) {
    %c0_i32 = arith.constant 0 : i32
    %c0_i32_0 = arith.constant 0 : i32
    %c0_i32_1 = arith.constant 0 : i32
    return %c0_i32, %c0_i32_0 : i32, i32
  }
  func.func @transform_2(%arg0: i32, %arg1: i32) -> (i32, i32) {
    %c0_i32 = arith.constant 0 : i32
    %c0_i32_0 = arith.constant 0 : i32
    %c0_i32_1 = arith.constant 0 : i32
    return %c0_i32, %c0_i32_0 : i32, i32
  }
  func.func @transform_3(%arg0: i32, %arg1: i32) -> (i32, i32) {
    %c0_i32 = arith.constant 0 : i32
    %c0_i32_0 = arith.constant 0 : i32
    %c0_i32_1 = arith.constant 0 : i32
    return %c0_i32, %c0_i32_0 : i32, i32
  }
  func.func @transform_4(%arg0: i32, %arg1: i32) -> (i32, i32, i32) {
    %c0_i32 = arith.constant 0 : i32
    %c0_i32_0 = arith.constant 0 : i32
    return %arg0, %arg1, %c0_i32 : i32, i32, i32
  }
}

</mosaic_0001>

<llo_original>
// kernel: tpu_custom_call.1
$region0: #{tpu_custom_call.1}
  #allocation0 [shape = 'u32[]', space=smem, size = 0x4, offset = 0x4, fixed_abs, tag = 'smem constant byte address 0x4 - core index']
  #allocation1 [shape = 'u32[144,128]{1,0:T(1,128)}', space=vmem, size = 0x12000, scoped, tag = 'internal scratch']
  %s0 = inlined_call_operand.hbm [shape: f32[2,256,384], index: 0, kind: input, shape index: {}]
  %s1 = inlined_call_operand.hbm [shape: f32[1,384], index: 1, kind: input, shape index: {}]
  %s2 = inlined_call_operand.hbm [shape: f32[1,384], index: 2, kind: input, shape index: {}]
  %s3 = inlined_call_operand.hbm [shape: bf16[384,1152], index: 3, kind: input, shape index: {}]
  %s4 = inlined_call_operand.hbm [shape: bf16[2,256,1152], index: 4, kind: output, shape index: {}]
  %s5 = sld [smem:[#allocation0]]
  $region65: #{tpu_custom_call.1} parent=0
    _
  %s7 = ssub.s32 1, %s5
  %s8 = scalar_select 0, %s7, %s5
  $region1: #{tpu_custom_call.1} parent=0
    #allocation2 [shape = 'u8[393216]{0}', space=vmem, size = 0x60000, scoped, tag = 'input window, operand 0']
    #allocation3 [shape = 's32[2]{0}', space=sflag, size = 0x8, scoped, tag = 'scoped memory for tpu_custom_call.1']
    #allocation4 [shape = 's32[2]{0}', space=sflag, size = 0x8, scoped, tag = 'scoped memory for tpu_custom_call.1']
    #allocation5 [shape = 'u8[1536]{0}', space=vmem, size = 0x800, scoped, tag = 'input window, operand 1, single buffered']
    #allocation6 [shape = 's32[1]{0}', space=sflag, size = 0x4, scoped, tag = 'scoped memory for tpu_custom_call.1']
    #allocation7 [shape = 'u8[1536]{0}', space=vmem, size = 0x800, scoped, tag = 'input window, operand 2, single buffered']
    #allocation8 [shape = 'u8[884736]{0}', space=vmem, size = 0xd8000, scoped, tag = 'input window, operand 3, single buffered']
    #allocation9 [shape = 's32[1]{0}', space=sflag, size = 0x4, scoped, tag = 'scoped memory for tpu_custom_call.1']
    #allocation10 [shape = 'u8[589824]{0}', space=vmem, size = 0x90000, scoped, tag = 'output window, operand 0']
    %9 = vsyncpa [#allocation3], 0
    %s10 = scalar_lea.sflag [#allocation3], 1
    %11 = vsyncpa %s10, 0
    %12 = vsyncpa [#allocation6], 0
    %13 = vsyncpa [#allocation9], 0
    %14 = vsyncpa [#allocation4], 0
    %s15 = scalar_lea.sflag [#allocation4], 1
    %16 = vsyncpa %s15, 0
    loop: start=0, step=1, limit=6
    $region2: #{tpu_custom_call.1} parent=1 // loop_pre_header
      _
    $region3: #{tpu_custom_call.1} parent=1 // loop_header
      %s18 = sphi 0, %s22
      %p19 = scmp.ge.s32.totalorder %s18, 6
      %s25 = sphi 0, %s37
      %s26 = sphi 0, %s33
      %s27 = sphi 0, %s25
      %s28 = sphi 0, %s26
      %s29 = sphi 0, %s27
      %s30 = sphi 0, %s28
      %s42 = sphi 0, %s44
      %s45 = sphi 0, %s42
      %s46 = sphi 0, %s45
      %s62 = sphi 0, %s46
      %s66 = sphi 0, %s66
      %s68 = sphi 0, %s66
      %s69 = sphi 0, %s68
      %s83 = sphi 0, %s69
      %s87 = sphi 0, %s87
      %s89 = sphi 0, %s87
      %s90 = sphi 0, %s89
      %s104 = sphi 0, %s90
      %s108 = sphi 0, %s108
      %s110 = sphi 0, %s108
      %s111 = sphi 0, %s110
      %s125 = sphi 0, %s111
      %s133 = sphi 0, %s135
      %s136 = sphi 0, %s133
      %s137 = sphi 0, %s136
      %s153 = sphi 0, %s137
    $region4: #{tpu_custom_call.1} parent=1 // loop_header_branch
      %21 = sbr.rel (%p19) target = $region8
    $region5: #{tpu_custom_call.1} parent=1 // loop_body
      %s23 = ssub.s32 %s18, 1
      %s24 = ssub.s32 %s18, 2
      %s31 = sadd.s32 1, %s26
      %p32 = scmp.ge.s32.totalorder %s31, 2
      %s33 = scalar_select %p32, 0, %s31
      %s34 = sadd.s32 1, %s25
      %s35 = scalar_select %p32, %s34, %s25
      %p36 = scmp.ge.s32.totalorder %s35, 2
      %s37 = scalar_select %p36, 0, %s35
      %s38 = ssub.s32 %s25, %s37
      %s39 = ssub.s32 %s26, %s33
      %s40 = sor.u32 %s38, %s39
      %p41 = scmp.eq.s32.totalorder %s40, 0
      %s43 = sadd.s32 %s42, 1
      %s44 = scalar_select %p41, %s42, %s43
      %p47 = pneg %p41
      %p48 = scmp.eq.s32.totalorder %s18, 3
      %p49 = por %p47, %p48
      %p50 = scmp.ne.s32.totalorder %s42, %s45
      %p51 = scmp.eq.s32.totalorder %s18, 0
      %p52 = por %p50, %p51
      %p53 = scmp.ne.s32.totalorder %s42, %s45
      %p54 = scmp.eq.s32.totalorder %s23, 3
      %p55 = por %p53, %p54
      %p56 = scmp.ne.s32.totalorder %s45, %s46
      %p57 = scmp.eq.s32.totalorder %s23, 0
      %p58 = por %p56, %p57
      %p59 = scmp.ne.s32.totalorder %s45, %s46
      %p60 = scmp.eq.s32.totalorder %s24, 3
      %p61 = por %p59, %p60
      %p63 = scmp.ne.s32.totalorder %s46, %s62
      %p64 = scmp.eq.s32.totalorder %s24, 0
      %p65 = por %p63, %p64
      %s67 = sadd.s32 %s66, 1
      %p70 = scmp.eq.s32.totalorder %s18, 3
      %p71 = scmp.ne.s32.totalorder %s66, %s68
      %p72 = scmp.eq.s32.totalorder %s18, 0
      %p73 = por %p71, %p72
      %p74 = scmp.ne.s32.totalorder %s66, %s68
      %p75 = scmp.eq.s32.totalorder %s23, 3
      %p76 = por %p74, %p75
      %p77 = scmp.ne.s32.totalorder %s68, %s69
      %p78 = scmp.eq.s32.totalorder %s23, 0
      %p79 = por %p77, %p78
      %p80 = scmp.ne.s32.totalorder %s68, %s69
      %p81 = scmp.eq.s32.totalorder %s24, 3
      %p82 = por %p80, %p81
      %p84 = scmp.ne.s32.totalorder %s69, %s83
      %p85 = scmp.eq.s32.totalorder %s24, 0
      %p86 = por %p84, %p85
      %s88 = sadd.s32 %s87, 1
      %p91 = scmp.eq.s32.totalorder %s18, 3
      %p92 = scmp.ne.s32.totalorder %s87, %s89
      %p93 = scmp.eq.s32.totalorder %s18, 0
      %p94 = por %p92, %p93
      %p95 = scmp.ne.s32.totalorder %s87, %s89
      %p96 = scmp.eq.s32.totalorder %s23, 3
      %p97 = por %p95, %p96
      %p98 = scmp.ne.s32.totalorder %s89, %s90
      %p99 = scmp.eq.s32.totalorder %s23, 0
      %p100 = por %p98, %p99
      %p101 = scmp.ne.s32.totalorder %s89, %s90
      %p102 = scmp.eq.s32.totalorder %s24, 3
      %p103 = por %p101, %p102
      %p105 = scmp.ne.s32.totalorder %s90, %s104
      %p106 = scmp.eq.s32.totalorder %s24, 0
      %p107 = por %p105, %p106
      %s109 = sadd.s32 %s108, 1
      %p112 = scmp.eq.s32.totalorder %s18, 3
      %p113 = scmp.ne.s32.totalorder %s108, %s110
      %p114 = scmp.eq.s32.totalorder %s18, 0
      %p115 = por %p113, %p114
      %p116 = scmp.ne.s32.totalorder %s108, %s110
      %p117 = scmp.eq.s32.totalorder %s23, 3
      %p118 = por %p116, %p117
      %p119 = scmp.ne.s32.totalorder %s110, %s111
      %p120 = scmp.eq.s32.totalorder %s23, 0
      %p121 = por %p119, %p120
      %p122 = scmp.ne.s32.totalorder %s110, %s111
      %p123 = scmp.eq.s32.totalorder %s24, 3
      %p124 = por %p122, %p123
      %p126 = scmp.ne.s32.totalorder %s111, %s125
      %p127 = scmp.eq.s32.totalorder %s24, 0
      %p128 = por %p126, %p127
      %s129 = ssub.s32 %s25, %s37
      %s130 = ssub.s32 %s26, %s33
      %s131 = sor.u32 %s129, %s130
      %p132 = scmp.eq.s32.totalorder %s131, 0
      %s134 = sadd.s32 %s133, 1
      %s135 = scalar_select %p132, %s133, %s134
      %p138 = pneg %p132
      %p139 = scmp.eq.s32.totalorder %s18, 3
      %p140 = por %p138, %p139
      %p141 = scmp.ne.s32.totalorder %s133, %s136
      %p142 = scmp.eq.s32.totalorder %s18, 0
      %p143 = por %p141, %p142
      %p144 = scmp.ne.s32.totalorder %s133, %s136
      %p145 = scmp.eq.s32.totalorder %s23, 3
      %p146 = por %p144, %p145
      %p147 = scmp.ne.s32.totalorder %s136, %s137
      %p148 = scmp.eq.s32.totalorder %s23, 0
      %p149 = por %p147, %p148
      %p150 = scmp.ne.s32.totalorder %s136, %s137
      %p151 = scmp.eq.s32.totalorder %s24, 3
      %p152 = por %p150, %p151
      %p154 = scmp.ne.s32.totalorder %s137, %s153
      %p155 = scmp.eq.s32.totalorder %s24, 0
      %p156 = por %p154, %p155
      %p157 = scmp.le.s32.totalorder 1, %s18
      %p158 = scmp.lt.s32.totalorder %s18, 5
      %p159 = pnand %p157, %p158
      %p160 = pneg %p159
      // Predicated region
      $region9: #{tpu_custom_call.1} parent=5 // pred_check
        _
      $region10: #{tpu_custom_call.1} parent=5 // pred_check_branch
        %162 = sbr.rel (%p159) target = $region12
      $region11: #{tpu_custom_call.1} parent=5 // pred_region
        %s163 = ssub.s32 %s18, 1
        // Predicated region
        $region13: #{tpu_custom_call.1} parent=11 // pred_check
          %p164 = pneg %p79
        $region14: #{tpu_custom_call.1} parent=11 // pred_check_branch
          %166 = sbr.rel (%p164) target = $region16
        $region15: #{tpu_custom_call.1} parent=11 // pred_region
          %s168 = ssub.s32 48, 48
          %169 = vsyncadd [#allocation6], %s168
          %s171 = sshll.u32 [#allocation5], 4
          %s172 = int_to_ptr.vmem [resolvable:$true] %s171
          %174 = dma.hbm_to_vmem [thread:$0]  %s1, 48, %s172, [#allocation6]
        $region16: #{tpu_custom_call.1} parent=11 // pred_fallthru
          _
        // Predicated region
        $region17: #{tpu_custom_call.1} parent=11 // pred_check
          %p175 = pneg %p100
        $region18: #{tpu_custom_call.1} parent=11 // pred_check_branch
          %177 = sbr.rel (%p175) target = $region20
        $region19: #{tpu_custom_call.1} parent=11 // pred_region
          %s179 = ssub.s32 48, 48
          %180 = vsyncadd [#allocation6], %s179
          %s182 = sshll.u32 [#allocation7], 4
          %s183 = int_to_ptr.vmem [resolvable:$true] %s182
          %185 = dma.hbm_to_vmem [thread:$0]  %s2, 48, %s183, [#allocation6]
        $region20: #{tpu_custom_call.1} parent=11 // pred_fallthru
          _
        // Predicated region
        $region21: #{tpu_custom_call.1} parent=11 // pred_check
          %p186 = pneg %p121
        $region22: #{tpu_custom_call.1} parent=11 // pred_check_branch
          %188 = sbr.rel (%p186) target = $region24
        $region23: #{tpu_custom_call.1} parent=11 // pred_region
          %s190 = ssub.s32 27648, 27648
          %191 = vsyncadd [#allocation9], %s190
          %s192 = sshll.u32 [#allocation8], 4
          %s193 = int_to_ptr.vmem [resolvable:$true] %s192
          %198 = dma.hbm_to_vmem [thread:$0]  %s3, 27648, %s193, [#allocation9], 576, 576, 36
        $region24: #{tpu_custom_call.1} parent=11 // pred_fallthru
          _
      $region12: #{tpu_custom_call.1} parent=5 // pred_fallthru
        _
      %p199 = scmp.lt.s32.totalorder %s18, 4
      // Predicated region
      $region25: #{tpu_custom_call.1} parent=5 // pred_check
        %p200 = pneg %p199
      $region26: #{tpu_custom_call.1} parent=5 // pred_check_branch
        %202 = sbr.rel (%p200) target = $region28
      $region27: #{tpu_custom_call.1} parent=5 // pred_region
        // Predicated region
        $region29: #{tpu_custom_call.1} parent=27 // pred_check
          %p203 = pneg %p52
        $region30: #{tpu_custom_call.1} parent=27 // pred_check_branch
          %205 = sbr.rel (%p203) target = $region32
        $region31: #{tpu_custom_call.1} parent=27 // pred_region
          %s206 = sand.u32 %s42, 1
          %s207 = scalar_lea.sflag [#allocation3], %s206
          %s208 = sand.u32 %s42, 1
          %s209 = smul.addr %s208, 384
          %s210 = scalar_lea.vmem [#allocation2], %s209
          %s211 = smul.u32 16, %s26
          %s213 = ssub.s32 6144, 6144
          %214 = vsyncadd %s207, %s213
          %s215 = smul.addr %s211, 3
          %s216 = smul.addr %s25, 96
          %s217 = sadd.s32 %s215, %s216
          %s218 = smul.addr %s217, 128
          %s219 = scalar_lea.hbm %s0, %s218
          %s220 = sshll.u32 %s210, 4
          %s221 = int_to_ptr.vmem [resolvable:$true] %s220
          %226 = dma.hbm_to_vmem [thread:$0]  %s219, 6144, %s221, %s207, 384, 384, 24
        $region32: #{tpu_custom_call.1} parent=27 // pred_fallthru
          _
      $region28: #{tpu_custom_call.1} parent=5 // pred_fallthru
        _
      %p227 = scmp.le.s32.totalorder 1, %s18
      %p228 = scmp.lt.s32.totalorder %s18, 5
      %p229 = pnand %p227, %p228
      %p230 = pneg %p229
      // Predicated region
      $region33: #{tpu_custom_call.1} parent=5 // pred_check
        _
      $region34: #{tpu_custom_call.1} parent=5 // pred_check_branch
        %232 = sbr.rel (%p229) target = $region36
      $region35: #{tpu_custom_call.1} parent=5 // pred_region
        %s233 = ssub.s32 %s18, 1
        %s234 = sand.u32 %s45, 1
        %s235 = scalar_lea.sflag [#allocation3], %s234
        %s236 = sand.u32 %s45, 1
        %s237 = smul.addr %s236, 384
        %s238 = scalar_lea.vmem [#allocation2], %s237
        // Predicated region
        $region37: #{tpu_custom_call.1} parent=35 // pred_check
          %p239 = pneg %p58
        $region38: #{tpu_custom_call.1} parent=35 // pred_check_branch
          %241 = sbr.rel (%p239) target = $region40
        $region39: #{tpu_custom_call.1} parent=35 // pred_region
          %242 = dma.done %s235, 6144
        $region40: #{tpu_custom_call.1} parent=35 // pred_fallthru
          _
        // Predicated region
        $region41: #{tpu_custom_call.1} parent=35 // pred_check
          %p243 = pneg %p79
        $region42: #{tpu_custom_call.1} parent=35 // pred_check_branch
          %245 = sbr.rel (%p243) target = $region44
        $region43: #{tpu_custom_call.1} parent=35 // pred_region
          %246 = dma.done [#allocation6], 48
        $region44: #{tpu_custom_call.1} parent=35 // pred_fallthru
          _
        // Predicated region
        $region45: #{tpu_custom_call.1} parent=35 // pred_check
          %p247 = pneg %p100
        $region46: #{tpu_custom_call.1} parent=35 // pred_check_branch
          %249 = sbr.rel (%p247) target = $region48
        $region47: #{tpu_custom_call.1} parent=35 // pred_region
          %250 = dma.done [#allocation6], 48
        $region48: #{tpu_custom_call.1} parent=35 // pred_fallthru
          _
        // Predicated region
        $region49: #{tpu_custom_call.1} parent=35 // pred_check
          %p251 = pneg %p121
        $region50: #{tpu_custom_call.1} parent=35 // pred_check_branch
          %253 = sbr.rel (%p251) target = $region52
        $region51: #{tpu_custom_call.1} parent=35 // pred_region
          %254 = dma.done [#allocation9], 27648
        $region52: #{tpu_custom_call.1} parent=35 // pred_fallthru
          _
        %s255 = sand.u32 %s45, 1
        %s256 = scalar_lea.sflag [#allocation3], %s255
        %s257 = sand.u32 %s45, 1
        %s258 = smul.addr %s257, 384
        %s259 = scalar_lea.vmem [#allocation2], %s258
        %p260 = pneg %p58
        %p261 = pneg %p55
        %p262 = pneg %p79
        %p263 = pneg %p76
        %p264 = pneg %p100
        %p265 = pneg %p97
        %p266 = pneg %p121
        %p267 = pneg %p118
        %p268 = pneg %p149
        %p269 = pneg %p146
        %s270 = sand.u32 %s136, 1
        %s271 = scalar_lea.sflag [#allocation4], %s270
        %s272 = sand.u32 %s136, 1
        %s273 = smul.addr %s272, 576
        %s274 = scalar_lea.vmem [#allocation10], %s273
        %s275 = smul.u32 16, %s28
        %s276 = smul.u32 16, %s28
        %v278 = vld [vmem:[%s238] sm:$0xff]
        %v279 = vld [vmem:[%s238 + $0x8] sm:$0xff]
        %v280 = vld [vmem:[%s238 + $0x10] sm:$0xff]
        %v281 = vld [vmem:[%s238 + $0x18] sm:$0xff]
        %v282 = vld [vmem:[%s238 + $0x20] sm:$0xff]
        %v283 = vld [vmem:[%s238 + $0x28] sm:$0xff]
        %v284 = vld [vmem:[%s238 + $0x30] sm:$0xff]
        %v285 = vld [vmem:[%s238 + $0x38] sm:$0xff]
        %v286 = vld [vmem:[%s238 + $0x40] sm:$0xff]
        %v287 = vld [vmem:[%s238 + $0x48] sm:$0xff]
        %v288 = vld [vmem:[%s238 + $0x50] sm:$0xff]
        %v289 = vld [vmem:[%s238 + $0x58] sm:$0xff]
        %v290 = vld [vmem:[%s238 + $0x60] sm:$0xff]
        %v291 = vld [vmem:[%s238 + $0x68] sm:$0xff]
        %v292 = vld [vmem:[%s238 + $0x70] sm:$0xff]
        %v293 = vld [vmem:[%s238 + $0x78] sm:$0xff]
        %v294 = vld [vmem:[%s238 + $0x80] sm:$0xff]
        %v295 = vld [vmem:[%s238 + $0x88] sm:$0xff]
        %v296 = vld [vmem:[%s238 + $0x90] sm:$0xff]
        %v297 = vld [vmem:[%s238 + $0x98] sm:$0xff]
        %v298 = vld [vmem:[%s238 + $0xa0] sm:$0xff]
        %v299 = vld [vmem:[%s238 + $0xa8] sm:$0xff]
        %v300 = vld [vmem:[%s238 + $0xb0] sm:$0xff]
        %v301 = vld [vmem:[%s238 + $0xb8] sm:$0xff]
        %v302 = vld [vmem:[%s238 + $0xc0] sm:$0xff]
        %v303 = vld [vmem:[%s238 + $0xc8] sm:$0xff]
        %v304 = vld [vmem:[%s238 + $0xd0] sm:$0xff]
        %v305 = vld [vmem:[%s238 + $0xd8] sm:$0xff]
        %v306 = vld [vmem:[%s238 + $0xe0] sm:$0xff]
        %v307 = vld [vmem:[%s238 + $0xe8] sm:$0xff]
        %v308 = vld [vmem:[%s238 + $0xf0] sm:$0xff]
        %v309 = vld [vmem:[%s238 + $0xf8] sm:$0xff]
        %v310 = vld [vmem:[%s238 + $0x100] sm:$0xff]
        %v311 = vld [vmem:[%s238 + $0x108] sm:$0xff]
        %v312 = vld [vmem:[%s238 + $0x110] sm:$0xff]
        %v313 = vld [vmem:[%s238 + $0x118] sm:$0xff]
        %v314 = vld [vmem:[%s238 + $0x120] sm:$0xff]
        %v315 = vld [vmem:[%s238 + $0x128] sm:$0xff]
        %v316 = vld [vmem:[%s238 + $0x130] sm:$0xff]
        %v317 = vld [vmem:[%s238 + $0x138] sm:$0xff]
        %v318 = vld [vmem:[%s238 + $0x140] sm:$0xff]
        %v319 = vld [vmem:[%s238 + $0x148] sm:$0xff]
        %v320 = vld [vmem:[%s238 + $0x150] sm:$0xff]
        %v321 = vld [vmem:[%s238 + $0x158] sm:$0xff]
        %v322 = vld [vmem:[%s238 + $0x160] sm:$0xff]
        %v323 = vld [vmem:[%s238 + $0x168] sm:$0xff]
        %v324 = vld [vmem:[%s238 + $0x170] sm:$0xff]
        %v325 = vld [vmem:[%s238 + $0x178] sm:$0xff]
        %v326 = vadd.f32 %v278, %v279
        %v327 = vadd.f32 %v326, %v280
        %328 = vadd.xlane.f32.xlu0 %v327
        %v329 = vpop.xlane.xlu0 %328
        %v330 = vadd.f32 %v281, %v282
        %v331 = vadd.f32 %v330, %v283
        %332 = vadd.xlane.f32.xlu0 %v331
        %v333 = vpop.xlane.xlu0 %332
        %v334 = vadd.f32 %v284, %v285
        %v335 = vadd.f32 %v334, %v286
        %336 = vadd.xlane.f32.xlu0 %v335
        %v337 = vpop.xlane.xlu0 %336
        %v338 = vadd.f32 %v287, %v288
        %v339 = vadd.f32 %v338, %v289
        %340 = vadd.xlane.f32.xlu0 %v339
        %v341 = vpop.xlane.xlu0 %340
        %v342 = vadd.f32 %v290, %v291
        %v343 = vadd.f32 %v342, %v292
        %344 = vadd.xlane.f32.xlu0 %v343
        %v345 = vpop.xlane.xlu0 %344
        %v346 = vadd.f32 %v293, %v294
        %v347 = vadd.f32 %v346, %v295
        %348 = vadd.xlane.f32.xlu0 %v347
        %v349 = vpop.xlane.xlu0 %348
        %v350 = vadd.f32 %v296, %v297
        %v351 = vadd.f32 %v350, %v298
        %352 = vadd.xlane.f32.xlu0 %v351
        %v353 = vpop.xlane.xlu0 %352
        %v354 = vadd.f32 %v299, %v300
        %v355 = vadd.f32 %v354, %v301
        %356 = vadd.xlane.f32.xlu0 %v355
        %v357 = vpop.xlane.xlu0 %356
        %v358 = vadd.f32 %v302, %v303
        %v359 = vadd.f32 %v358, %v304
        %360 = vadd.xlane.f32.xlu0 %v359
        %v361 = vpop.xlane.xlu0 %360
        %v362 = vadd.f32 %v305, %v306
        %v363 = vadd.f32 %v362, %v307
        %364 = vadd.xlane.f32.xlu0 %v363
        %v365 = vpop.xlane.xlu0 %364
        %v366 = vadd.f32 %v308, %v309
        %v367 = vadd.f32 %v366, %v310
        %368 = vadd.xlane.f32.xlu0 %v367
        %v369 = vpop.xlane.xlu0 %368
        %v370 = vadd.f32 %v311, %v312
        %v371 = vadd.f32 %v370, %v313
        %372 = vadd.xlane.f32.xlu0 %v371
        %v373 = vpop.xlane.xlu0 %372
        %v374 = vadd.f32 %v314, %v315
        %v375 = vadd.f32 %v374, %v316
        %376 = vadd.xlane.f32.xlu0 %v375
        %v377 = vpop.xlane.xlu0 %376
        %v378 = vadd.f32 %v317, %v318
        %v379 = vadd.f32 %v378, %v319
        %380 = vadd.xlane.f32.xlu0 %v379
        %v381 = vpop.xlane.xlu0 %380
        %v382 = vadd.f32 %v320, %v321
        %v383 = vadd.f32 %v382, %v322
        %384 = vadd.xlane.f32.xlu0 %v383
        %v385 = vpop.xlane.xlu0 %384
        %v386 = vadd.f32 %v323, %v324
        %v387 = vadd.f32 %v386, %v325
        %388 = vadd.xlane.f32.xlu0 %v387
        %v389 = vpop.xlane.xlu0 %388
        %v390 = vrcp.pop 384.0
        %v391 = vmul.f32 %v329, %v390
        %v392 = vmul.f32 %v333, %v390
        %v393 = vmul.f32 %v337, %v390
        %v394 = vmul.f32 %v341, %v390
        %v395 = vmul.f32 %v345, %v390
        %v396 = vmul.f32 %v349, %v390
        %v397 = vmul.f32 %v353, %v390
        %v398 = vmul.f32 %v357, %v390
        %v399 = vmul.f32 %v361, %v390
        %v400 = vmul.f32 %v365, %v390
        %v401 = vmul.f32 %v369, %v390
        %v402 = vmul.f32 %v373, %v390
        %v403 = vmul.f32 %v377, %v390
        %v404 = vmul.f32 %v381, %v390
        %v405 = vmul.f32 %v385, %v390
        %v406 = vmul.f32 %v389, %v390
        %v407 = vsub.f32 %v278, %v391
        %v408 = vsub.f32 %v279, %v391
        %v409 = vsub.f32 %v280, %v391
        %v410 = vsub.f32 %v281, %v392
        %v411 = vsub.f32 %v282, %v392
        %v412 = vsub.f32 %v283, %v392
        %v413 = vsub.f32 %v284, %v393
        %v414 = vsub.f32 %v285, %v393
        %v415 = vsub.f32 %v286, %v393
        %v416 = vsub.f32 %v287, %v394
        %v417 = vsub.f32 %v288, %v394
        %v418 = vsub.f32 %v289, %v394
        %v419 = vsub.f32 %v290, %v395
        %v420 = vsub.f32 %v291, %v395
        %v421 = vsub.f32 %v292, %v395
        %v422 = vsub.f32 %v293, %v396
        %v423 = vsub.f32 %v294, %v396
        %v424 = vsub.f32 %v295, %v396
        %v425 = vsub.f32 %v296, %v397
        %v426 = vsub.f32 %v297, %v397
        %v427 = vsub.f32 %v298, %v397
        %v428 = vsub.f32 %v299, %v398
        %v429 = vsub.f32 %v300, %v398
        %v430 = vsub.f32 %v301, %v398
        %v431 = vsub.f32 %v302, %v399
        %v432 = vsub.f32 %v303, %v399
        %v433 = vsub.f32 %v304, %v399
        %v434 = vsub.f32 %v305, %v400
        %v435 = vsub.f32 %v306, %v400
        %v436 = vsub.f32 %v307, %v400
        %v437 = vsub.f32 %v308, %v401
        %v438 = vsub.f32 %v309, %v401
        %v439 = vsub.f32 %v310, %v401
        %v440 = vsub.f32 %v311, %v402
        %v441 = vsub.f32 %v312, %v402
        %v442 = vsub.f32 %v313, %v402
        %v443 = vsub.f32 %v314, %v403
        %v444 = vsub.f32 %v315, %v403
        %v445 = vsub.f32 %v316, %v403
        %v446 = vsub.f32 %v317, %v404
        %v447 = vsub.f32 %v318, %v404
        %v448 = vsub.f32 %v319, %v404
        %v449 = vsub.f32 %v320, %v405
        %v450 = vsub.f32 %v321, %v405
        %v451 = vsub.f32 %v322, %v405
        %v452 = vsub.f32 %v323, %v406
        %v453 = vsub.f32 %v324, %v406
        %v454 = vsub.f32 %v325, %v406
        %v455 = vmul.f32 %v407, %v407
        %v456 = vmul.f32 %v408, %v408
        %v457 = vmul.f32 %v409, %v409
        %v458 = vmul.f32 %v410, %v410
        %v459 = vmul.f32 %v411, %v411
        %v460 = vmul.f32 %v412, %v412
        %v461 = vmul.f32 %v413, %v413
        %v462 = vmul.f32 %v414, %v414
        %v463 = vmul.f32 %v415, %v415
        %v464 = vmul.f32 %v416, %v416
        %v465 = vmul.f32 %v417, %v417
        %v466 = vmul.f32 %v418, %v418
        %v467 = vmul.f32 %v419, %v419
        %v468 = vmul.f32 %v420, %v420
        %v469 = vmul.f32 %v421, %v421
        %v470 = vmul.f32 %v422, %v422
        %v471 = vmul.f32 %v423, %v423
        %v472 = vmul.f32 %v424, %v424
        %v473 = vmul.f32 %v425, %v425
        %v474 = vmul.f32 %v426, %v426
        %v475 = vmul.f32 %v427, %v427
        %v476 = vmul.f32 %v428, %v428
        %v477 = vmul.f32 %v429, %v429
        %v478 = vmul.f32 %v430, %v430
        %v479 = vmul.f32 %v431, %v431
        %v480 = vmul.f32 %v432, %v432
        %v481 = vmul.f32 %v433, %v433
        %v482 = vmul.f32 %v434, %v434
        %v483 = vmul.f32 %v435, %v435
        %v484 = vmul.f32 %v436, %v436
        %v485 = vmul.f32 %v437, %v437
        %v486 = vmul.f32 %v438, %v438
        %v487 = vmul.f32 %v439, %v439
        %v488 = vmul.f32 %v440, %v440
        %v489 = vmul.f32 %v441, %v441
        %v490 = vmul.f32 %v442, %v442
        %v491 = vmul.f32 %v443, %v443
        %v492 = vmul.f32 %v444, %v444
        %v493 = vmul.f32 %v445, %v445
        %v494 = vmul.f32 %v446, %v446
        %v495 = vmul.f32 %v447, %v447
        %v496 = vmul.f32 %v448, %v448
        %v497 = vmul.f32 %v449, %v449
        %v498 = vmul.f32 %v450, %v450
        %v499 = vmul.f32 %v451, %v451
        %v500 = vmul.f32 %v452, %v452
        %v501 = vmul.f32 %v453, %v453
        %v502 = vmul.f32 %v454, %v454
        %v503 = vadd.f32 %v455, %v456
        %v504 = vadd.f32 %v503, %v457
        %505 = vadd.xlane.f32.xlu0 %v504
        %v506 = vpop.xlane.xlu0 %505
        %v507 = vadd.f32 %v458, %v459
        %v508 = vadd.f32 %v507, %v460
        %509 = vadd.xlane.f32.xlu0 %v508
        %v510 = vpop.xlane.xlu0 %509
        %v511 = vadd.f32 %v461, %v462
        %v512 = vadd.f32 %v511, %v463
        %513 = vadd.xlane.f32.xlu0 %v512
        %v514 = vpop.xlane.xlu0 %513
        %v515 = vadd.f32 %v464, %v465
        %v516 = vadd.f32 %v515, %v466
        %517 = vadd.xlane.f32.xlu0 %v516
        %v518 = vpop.xlane.xlu0 %517
        %v519 = vadd.f32 %v467, %v468
        %v520 = vadd.f32 %v519, %v469
        %521 = vadd.xlane.f32.xlu0 %v520
        %v522 = vpop.xlane.xlu0 %521
        %v523 = vadd.f32 %v470, %v471
        %v524 = vadd.f32 %v523, %v472
        %525 = vadd.xlane.f32.xlu0 %v524
        %v526 = vpop.xlane.xlu0 %525
        %v527 = vadd.f32 %v473, %v474
        %v528 = vadd.f32 %v527, %v475
        %529 = vadd.xlane.f32.xlu0 %v528
        %v530 = vpop.xlane.xlu0 %529
        %v531 = vadd.f32 %v476, %v477
        %v532 = vadd.f32 %v531, %v478
        %533 = vadd.xlane.f32.xlu0 %v532
        %v534 = vpop.xlane.xlu0 %533
        %v535 = vadd.f32 %v479, %v480
        %v536 = vadd.f32 %v535, %v481
        %537 = vadd.xlane.f32.xlu0 %v536
        %v538 = vpop.xlane.xlu0 %537
        %v539 = vadd.f32 %v482, %v483
        %v540 = vadd.f32 %v539, %v484
        %541 = vadd.xlane.f32.xlu0 %v540
        %v542 = vpop.xlane.xlu0 %541
        %v543 = vadd.f32 %v485, %v486
        %v544 = vadd.f32 %v543, %v487
        %545 = vadd.xlane.f32.xlu0 %v544
        %v546 = vpop.xlane.xlu0 %545
        %v547 = vadd.f32 %v488, %v489
        %v548 = vadd.f32 %v547, %v490
        %549 = vadd.xlane.f32.xlu0 %v548
        %v550 = vpop.xlane.xlu0 %549
        %v551 = vadd.f32 %v491, %v492
        %v552 = vadd.f32 %v551, %v493
        %553 = vadd.xlane.f32.xlu0 %v552
        %v554 = vpop.xlane.xlu0 %553
        %v555 = vadd.f32 %v494, %v495
        %v556 = vadd.f32 %v555, %v496
        %557 = vadd.xlane.f32.xlu0 %v556
        %v558 = vpop.xlane.xlu0 %557
        %v559 = vadd.f32 %v497, %v498
        %v560 = vadd.f32 %v559, %v499
        %561 = vadd.xlane.f32.xlu0 %v560
        %v562 = vpop.xlane.xlu0 %561
        %v563 = vadd.f32 %v500, %v501
        %v564 = vadd.f32 %v563, %v502
        %565 = vadd.xlane.f32.xlu0 %v564
        %v566 = vpop.xlane.xlu0 %565
        %v567 = vmul.f32 %v506, %v390
        %v568 = vmul.f32 %v510, %v390
        %v569 = vmul.f32 %v514, %v390
        %v570 = vmul.f32 %v518, %v390
        %v571 = vmul.f32 %v522, %v390
        %v572 = vmul.f32 %v526, %v390
        %v573 = vmul.f32 %v530, %v390
        %v574 = vmul.f32 %v534, %v390
        %v575 = vmul.f32 %v538, %v390
        %v576 = vmul.f32 %v542, %v390
        %v577 = vmul.f32 %v546, %v390
        %v578 = vmul.f32 %v550, %v390
        %v579 = vmul.f32 %v554, %v390
        %v580 = vmul.f32 %v558, %v390
        %v581 = vmul.f32 %v562, %v390
        %v582 = vmul.f32 %v566, %v390
        %v583 = vadd.f32 %v567, 1e-05
        %v584 = vadd.f32 %v568, 1e-05
        %v585 = vadd.f32 %v569, 1e-05
        %v586 = vadd.f32 %v570, 1e-05
        %v587 = vadd.f32 %v571, 1e-05
        %v588 = vadd.f32 %v572, 1e-05
        %v589 = vadd.f32 %v573, 1e-05
        %v590 = vadd.f32 %v574, 1e-05
        %v591 = vadd.f32 %v575, 1e-05
        %v592 = vadd.f32 %v576, 1e-05
        %v593 = vadd.f32 %v577, 1e-05
        %v594 = vadd.f32 %v578, 1e-05
        %v595 = vadd.f32 %v579, 1e-05
        %v596 = vadd.f32 %v580, 1e-05
        %v597 = vadd.f32 %v581, 1e-05
        %v598 = vadd.f32 %v582, 1e-05
        %v599 = vrsqrt.pop %v583
        %v600 = vrsqrt.pop %v584
        %v601 = vrsqrt.pop %v585
        %v602 = vrsqrt.pop %v586
        %v603 = vrsqrt.pop %v587
        %v604 = vrsqrt.pop %v588
        %v605 = vrsqrt.pop %v589
        %v606 = vrsqrt.pop %v590
        %v607 = vrsqrt.pop %v591
        %v608 = vrsqrt.pop %v592
        %v609 = vrsqrt.pop %v593
        %v610 = vrsqrt.pop %v594
        %v611 = vrsqrt.pop %v595
        %v612 = vrsqrt.pop %v596
        %v613 = vrsqrt.pop %v597
        %v614 = vrsqrt.pop %v598
        %v615 = vmul.f32 %v407, %v599
        %v616 = vmul.f32 %v408, %v599
        %v617 = vmul.f32 %v409, %v599
        %v618 = vmul.f32 %v410, %v600
        %v619 = vmul.f32 %v411, %v600
        %v620 = vmul.f32 %v412, %v600
        %v621 = vmul.f32 %v413, %v601
        %v622 = vmul.f32 %v414, %v601
        %v623 = vmul.f32 %v415, %v601
        %v624 = vmul.f32 %v416, %v602
        %v625 = vmul.f32 %v417, %v602
        %v626 = vmul.f32 %v418, %v602
        %v627 = vmul.f32 %v419, %v603
        %v628 = vmul.f32 %v420, %v603
        %v629 = vmul.f32 %v421, %v603
        %v630 = vmul.f32 %v422, %v604
        %v631 = vmul.f32 %v423, %v604
        %v632 = vmul.f32 %v424, %v604
        %v633 = vmul.f32 %v425, %v605
        %v634 = vmul.f32 %v426, %v605
        %v635 = vmul.f32 %v427, %v605
        %v636 = vmul.f32 %v428, %v606
        %v637 = vmul.f32 %v429, %v606
        %v638 = vmul.f32 %v430, %v606
        %v639 = vmul.f32 %v431, %v607
        %v640 = vmul.f32 %v432, %v607
        %v641 = vmul.f32 %v433, %v607
        %v642 = vmul.f32 %v434, %v608
        %v643 = vmul.f32 %v435, %v608
        %v644 = vmul.f32 %v436, %v608
        %v645 = vmul.f32 %v437, %v609
        %v646 = vmul.f32 %v438, %v609
        %v647 = vmul.f32 %v439, %v609
        %v648 = vmul.f32 %v440, %v610
        %v649 = vmul.f32 %v441, %v610
        %v650 = vmul.f32 %v442, %v610
        %v651 = vmul.f32 %v443, %v611
        %v652 = vmul.f32 %v444, %v611
        %v653 = vmul.f32 %v445, %v611
        %v654 = vmul.f32 %v446, %v612
        %v655 = vmul.f32 %v447, %v612
        %v656 = vmul.f32 %v448, %v612
        %v657 = vmul.f32 %v449, %v613
        %v658 = vmul.f32 %v450, %v613
        %v659 = vmul.f32 %v451, %v613
        %v660 = vmul.f32 %v452, %v614
        %v661 = vmul.f32 %v453, %v614
        %v662 = vmul.f32 %v454, %v614
        %v663 = vld [vmem:[#allocation5] sm:$0x7]
        %v665 = vlaneseq
        %v666 = vshrl.u32 %v665, 7
        %v667 = vsub.s32 0, %v666
        %v668 = vrot.slane %v663, %v667
        %v669 = vlaneseq
        %v670 = vshrl.u32 %v669, 7
        %v671 = vsub.s32 1, %v670
        %v672 = vrot.slane %v663, %v671
        %v673 = vlaneseq
        %v674 = vshrl.u32 %v673, 7
        %v675 = vsub.s32 2, %v674
        %v676 = vrot.slane %v663, %v675
        %v680 = vmul.f32 %v615, %v668
        %v681 = vmul.f32 %v616, %v672
        %v682 = vmul.f32 %v617, %v676
        %v683 = vmul.f32 %v618, %v668
        %v684 = vmul.f32 %v619, %v672
        %v685 = vmul.f32 %v620, %v676
        %v686 = vmul.f32 %v621, %v668
        %v687 = vmul.f32 %v622, %v672
        %v688 = vmul.f32 %v623, %v676
        %v689 = vmul.f32 %v624, %v668
        %v690 = vmul.f32 %v625, %v672
        %v691 = vmul.f32 %v626, %v676
        %v692 = vmul.f32 %v627, %v668
        %v693 = vmul.f32 %v628, %v672
        %v694 = vmul.f32 %v629, %v676
        %v695 = vmul.f32 %v630, %v668
        %v696 = vmul.f32 %v631, %v672
        %v697 = vmul.f32 %v632, %v676
        %v698 = vmul.f32 %v633, %v668
        %v699 = vmul.f32 %v634, %v672
        %v700 = vmul.f32 %v635, %v676
        %v701 = vmul.f32 %v636, %v668
        %v702 = vmul.f32 %v637, %v672
        %v703 = vmul.f32 %v638, %v676
        %v704 = vmul.f32 %v639, %v668
        %v705 = vmul.f32 %v640, %v672
        %v706 = vmul.f32 %v641, %v676
        %v707 = vmul.f32 %v642, %v668
        %v708 = vmul.f32 %v643, %v672
        %v709 = vmul.f32 %v644, %v676
        %v710 = vmul.f32 %v645, %v668
        %v711 = vmul.f32 %v646, %v672
        %v712 = vmul.f32 %v647, %v676
        %v713 = vmul.f32 %v648, %v668
        %v714 = vmul.f32 %v649, %v672
        %v715 = vmul.f32 %v650, %v676
        %v716 = vmul.f32 %v651, %v668
        %v717 = vmul.f32 %v652, %v672
        %v718 = vmul.f32 %v653, %v676
        %v719 = vmul.f32 %v654, %v668
        %v720 = vmul.f32 %v655, %v672
        %v721 = vmul.f32 %v656, %v676
        %v722 = vmul.f32 %v657, %v668
        %v723 = vmul.f32 %v658, %v672
        %v724 = vmul.f32 %v659, %v676
        %v725 = vmul.f32 %v660, %v668
        %v726 = vmul.f32 %v661, %v672
        %v727 = vmul.f32 %v662, %v676
        %v728 = vld [vmem:[#allocation7] sm:$0x7]
        %v730 = vlaneseq
        %v731 = vshrl.u32 %v730, 7
        %v732 = vsub.s32 0, %v731
        %v733 = vrot.slane %v728, %v732
        %v734 = vlaneseq
        %v735 = vshrl.u32 %v734, 7
        %v736 = vsub.s32 1, %v735
        %v737 = vrot.slane %v728, %v736
        %v738 = vlaneseq
        %v739 = vshrl.u32 %v738, 7
        %v740 = vsub.s32 2, %v739
        %v741 = vrot.slane %v728, %v740
        %v745 = vadd.f32 %v680, %v733
        %v746 = vadd.f32 %v681, %v737
        %v747 = vadd.f32 %v682, %v741
        %v748 = vadd.f32 %v683, %v733
        %v749 = vadd.f32 %v684, %v737
        %v750 = vadd.f32 %v685, %v741
        %v751 = vadd.f32 %v686, %v733
        %v752 = vadd.f32 %v687, %v737
        %v753 = vadd.f32 %v688, %v741
        %v754 = vadd.f32 %v689, %v733
        %v755 = vadd.f32 %v690, %v737
        %v756 = vadd.f32 %v691, %v741
        %v757 = vadd.f32 %v692, %v733
        %v758 = vadd.f32 %v693, %v737
        %v759 = vadd.f32 %v694, %v741
        %v760 = vadd.f32 %v695, %v733
        %v761 = vadd.f32 %v696, %v737
        %v762 = vadd.f32 %v697, %v741
        %v763 = vadd.f32 %v698, %v733
        %v764 = vadd.f32 %v699, %v737
        %v765 = vadd.f32 %v700, %v741
        %v766 = vadd.f32 %v701, %v733
        %v767 = vadd.f32 %v702, %v737
        %v768 = vadd.f32 %v703, %v741
        %v769 = vadd.f32 %v704, %v733
        %v770 = vadd.f32 %v705, %v737
        %v771 = vadd.f32 %v706, %v741
        %v772 = vadd.f32 %v707, %v733
        %v773 = vadd.f32 %v708, %v737
        %v774 = vadd.f32 %v709, %v741
        %v775 = vadd.f32 %v710, %v733
        %v776 = vadd.f32 %v711, %v737
        %v777 = vadd.f32 %v712, %v741
        %v778 = vadd.f32 %v713, %v733
        %v779 = vadd.f32 %v714, %v737
        %v780 = vadd.f32 %v715, %v741
        %v781 = vadd.f32 %v716, %v733
        %v782 = vadd.f32 %v717, %v737
        %v783 = vadd.f32 %v718, %v741
        %v784 = vadd.f32 %v719, %v733
        %v785 = vadd.f32 %v720, %v737
        %v786 = vadd.f32 %v721, %v741
        %v787 = vadd.f32 %v722, %v733
        %v788 = vadd.f32 %v723, %v737
        %v789 = vadd.f32 %v724, %v741
        %v790 = vadd.f32 %v725, %v733
        %v791 = vadd.f32 %v726, %v737
        %v792 = vadd.f32 %v727, %v741
        %v793 = vpack.c.bf16 %v748, %v745
        %v794 = vpack.c.bf16 %v749, %v746
        %v795 = vpack.c.bf16 %v750, %v747
        %v796 = vpack.c.bf16 %v754, %v751
        %v797 = vpack.c.bf16 %v755, %v752
        %v798 = vpack.c.bf16 %v756, %v753
        %v799 = vpack.c.bf16 %v760, %v757
        %v800 = vpack.c.bf16 %v761, %v758
        %v801 = vpack.c.bf16 %v762, %v759
        %v802 = vpack.c.bf16 %v766, %v763
        %v803 = vpack.c.bf16 %v767, %v764
        %v804 = vpack.c.bf16 %v768, %v765
        %v805 = vpack.c.bf16 %v772, %v769
        %v806 = vpack.c.bf16 %v773, %v770
        %v807 = vpack.c.bf16 %v774, %v771
        %v808 = vpack.c.bf16 %v778, %v775
        %v809 = vpack.c.bf16 %v779, %v776
        %v810 = vpack.c.bf16 %v780, %v777
        %v811 = vpack.c.bf16 %v784, %v781
        %v812 = vpack.c.bf16 %v785, %v782
        %v813 = vpack.c.bf16 %v786, %v783
        %v814 = vpack.c.bf16 %v790, %v787
        %v815 = vpack.c.bf16 %v791, %v788
        %v816 = vpack.c.bf16 %v792, %v789
        %v817 = vld [vmem:[#allocation8] sm:$0xff]
        %v818 = vld [vmem:[#allocation8 + $0x8] sm:$0xff]
        %v819 = vld [vmem:[#allocation8 + $0x10] sm:$0xff]
        %v820 = vld [vmem:[#allocation8 + $0x18] sm:$0xff]
        %v821 = vld [vmem:[#allocation8 + $0x20] sm:$0xf]
        %v822 = vld [vmem:[#allocation8 + $0x24] sm:$0xff]
        %v823 = vld [vmem:[#allocation8 + $0x2c] sm:$0xff]
        %v824 = vld [vmem:[#allocation8 + $0x34] sm:$0xff]
        %v825 = vld [vmem:[#allocation8 + $0x3c] sm:$0xff]
        %v826 = vld [vmem:[#allocation8 + $0x44] sm:$0xf]
        %v827 = vld [vmem:[#allocation8 + $0x48] sm:$0xff]
        %v828 = vld [vmem:[#allocation8 + $0x50] sm:$0xff]
        %v829 = vld [vmem:[#allocation8 + $0x58] sm:$0xff]
        %v830 = vld [vmem:[#allocation8 + $0x60] sm:$0xff]
        %v831 = vld [vmem:[#allocation8 + $0x68] sm:$0xf]
        %v832 = vld [vmem:[#allocation8 + $0x6c] sm:$0xff]
        %v833 = vld [vmem:[#allocation8 + $0x74] sm:$0xff]
        %v834 = vld [vmem:[#allocation8 + $0x7c] sm:$0xff]
        %v835 = vld [vmem:[#allocation8 + $0x84] sm:$0xff]
        %v836 = vld [vmem:[#allocation8 + $0x8c] sm:$0xf]
        %v837 = vld [vmem:[#allocation8 + $0x90] sm:$0xff]
        %v838 = vld [vmem:[#allocation8 + $0x98] sm:$0xff]
        %v839 = vld [vmem:[#allocation8 + $0xa0] sm:$0xff]
        %v840 = vld [vmem:[#allocation8 + $0xa8] sm:$0xff]
        %v841 = vld [vmem:[#allocation8 + $0xb0] sm:$0xf]
        %v842 = vld [vmem:[#allocation8 + $0xb4] sm:$0xff]
        %v843 = vld [vmem:[#allocation8 + $0xbc] sm:$0xff]
        %v844 = vld [vmem:[#allocation8 + $0xc4] sm:$0xff]
        %v845 = vld [vmem:[#allocation8 + $0xcc] sm:$0xff]
        %v846 = vld [vmem:[#allocation8 + $0xd4] sm:$0xf]
        %v847 = vld [vmem:[#allocation8 + $0xd8] sm:$0xff]
        %v848 = vld [vmem:[#allocation8 + $0xe0] sm:$0xff]
        %v849 = vld [vmem:[#allocation8 + $0xe8] sm:$0xff]
        %v850 = vld [vmem:[#allocation8 + $0xf0] sm:$0xff]
        %v851 = vld [vmem:[#allocation8 + $0xf8] sm:$0xf]
        %v852 = vld [vmem:[#allocation8 + $0xfc] sm:$0xff]
        %v853 = vld [vmem:[#allocation8 + $0x104] sm:$0xff]
        %v854 = vld [vmem:[#allocation8 + $0x10c] sm:$0xff]
        %v855 = vld [vmem:[#allocation8 + $0x114] sm:$0xff]
        %v856 = vld [vmem:[#allocation8 + $0x11c] sm:$0xf]
        %v857 = vld [vmem:[#allocation8 + $0x120] sm:$0xff]
        %v858 = vld [vmem:[#allocation8 + $0x128] sm:$0xff]
        %v859 = vld [vmem:[#allocation8 + $0x130] sm:$0xff]
        %v860 = vld [vmem:[#allocation8 + $0x138] sm:$0xff]
        %v861 = vld [vmem:[#allocation8 + $0x140] sm:$0xf]
        %v862 = vld [vmem:[#allocation8 + $0x144] sm:$0xff]
        %v863 = vld [vmem:[#allocation8 + $0x14c] sm:$0xff]
        %v864 = vld [vmem:[#allocation8 + $0x154] sm:$0xff]
        %v865 = vld [vmem:[#allocation8 + $0x15c] sm:$0xff]
        %v866 = vld [vmem:[#allocation8 + $0x164] sm:$0xf]
        %v867 = vld [vmem:[#allocation8 + $0x168] sm:$0xff]
        %v868 = vld [vmem:[#allocation8 + $0x170] sm:$0xff]
        %v869 = vld [vmem:[#allocation8 + $0x178] sm:$0xff]
        %v870 = vld [vmem:[#allocation8 + $0x180] sm:$0xff]
        %v871 = vld [vmem:[#allocation8 + $0x188] sm:$0xf]
        %v872 = vld [vmem:[#allocation8 + $0x18c] sm:$0xff]
        %v873 = vld [vmem:[#allocation8 + $0x194] sm:$0xff]
        %v874 = vld [vmem:[#allocation8 + $0x19c] sm:$0xff]
        %v875 = vld [vmem:[#allocation8 + $0x1a4] sm:$0xff]
        %v876 = vld [vmem:[#allocation8 + $0x1ac] sm:$0xf]
        %v877 = vld [vmem:[#allocation8 + $0x1b0] sm:$0xff]
        %v878 = vld [vmem:[#allocation8 + $0x1b8] sm:$0xff]
        %v879 = vld [vmem:[#allocation8 + $0x1c0] sm:$0xff]
        %v880 = vld [vmem:[#allocation8 + $0x1c8] sm:$0xff]
        %v881 = vld [vmem:[#allocation8 + $0x1d0] sm:$0xf]
        %v882 = vld [vmem:[#allocation8 + $0x1d4] sm:$0xff]
        %v883 = vld [vmem:[#allocation8 + $0x1dc] sm:$0xff]
        %v884 = vld [vmem:[#allocation8 + $0x1e4] sm:$0xff]
        %v885 = vld [vmem:[#allocation8 + $0x1ec] sm:$0xff]
        %v886 = vld [vmem:[#allocation8 + $0x1f4] sm:$0xf]
        %v887 = vld [vmem:[#allocation8 + $0x1f8] sm:$0xff]
        %v888 = vld [vmem:[#allocation8 + $0x200] sm:$0xff]
        %v889 = vld [vmem:[#allocation8 + $0x208] sm:$0xff]
        %v890 = vld [vmem:[#allocation8 + $0x210] sm:$0xff]
        %v891 = vld [vmem:[#allocation8 + $0x218] sm:$0xf]
        %v892 = vld [vmem:[#allocation8 + $0x21c] sm:$0xff]
        %v893 = vld [vmem:[#allocation8 + $0x224] sm:$0xff]
        %v894 = vld [vmem:[#allocation8 + $0x22c] sm:$0xff]
        %v895 = vld [vmem:[#allocation8 + $0x234] sm:$0xff]
        %v896 = vld [vmem:[#allocation8 + $0x23c] sm:$0xf]
        %v897 = vld [vmem:[#allocation8 + $0x240] sm:$0xff]
        %v898 = vld [vmem:[#allocation8 + $0x248] sm:$0xff]
        %v899 = vld [vmem:[#allocation8 + $0x250] sm:$0xff]
        %v900 = vld [vmem:[#allocation8 + $0x258] sm:$0xff]
        %v901 = vld [vmem:[#allocation8 + $0x260] sm:$0xf]
        %v902 = vld [vmem:[#allocation8 + $0x264] sm:$0xff]
        %v903 = vld [vmem:[#allocation8 + $0x26c] sm:$0xff]
        %v904 = vld [vmem:[#allocation8 + $0x274] sm:$0xff]
        %v905 = vld [vmem:[#allocation8 + $0x27c] sm:$0xff]
        %v906 = vld [vmem:[#allocation8 + $0x284] sm:$0xf]
        %v907 = vld [vmem:[#allocation8 + $0x288] sm:$0xff]
        %v908 = vld [vmem:[#allocation8 + $0x290] sm:$0xff]
        %v909 = vld [vmem:[#allocation8 + $0x298] sm:$0xff]
        %v910 = vld [vmem:[#allocation8 + $0x2a0] sm:$0xff]
        %v911 = vld [vmem:[#allocation8 + $0x2a8] sm:$0xf]
        %v912 = vld [vmem:[#allocation8 + $0x2ac] sm:$0xff]
        %v913 = vld [vmem:[#allocation8 + $0x2b4] sm:$0xff]
        %v914 = vld [vmem:[#allocation8 + $0x2bc] sm:$0xff]
        %v915 = vld [vmem:[#allocation8 + $0x2c4] sm:$0xff]
        %v916 = vld [vmem:[#allocation8 + $0x2cc] sm:$0xf]
        %v917 = vld [vmem:[#allocation8 + $0x2d0] sm:$0xff]
        %v918 = vld [vmem:[#allocation8 + $0x2d8] sm:$0xff]
        %v919 = vld [vmem:[#allocation8 + $0x2e0] sm:$0xff]
        %v920 = vld [vmem:[#allocation8 + $0x2e8] sm:$0xff]
        %v921 = vld [vmem:[#allocation8 + $0x2f0] sm:$0xf]
        %v922 = vld [vmem:[#allocation8 + $0x2f4] sm:$0xff]
        %v923 = vld [vmem:[#allocation8 + $0x2fc] sm:$0xff]
        %v924 = vld [vmem:[#allocation8 + $0x304] sm:$0xff]
        %v925 = vld [vmem:[#allocation8 + $0x30c] sm:$0xff]
        %v926 = vld [vmem:[#allocation8 + $0x314] sm:$0xf]
        %v927 = vld [vmem:[#allocation8 + $0x318] sm:$0xff]
        %v928 = vld [vmem:[#allocation8 + $0x320] sm:$0xff]
        %v929 = vld [vmem:[#allocation8 + $0x328] sm:$0xff]
        %v930 = vld [vmem:[#allocation8 + $0x330] sm:$0xff]
        %v931 = vld [vmem:[#allocation8 + $0x338] sm:$0xf]
        %v932 = vld [vmem:[#allocation8 + $0x33c] sm:$0xff]
        %v933 = vld [vmem:[#allocation8 + $0x344] sm:$0xff]
        %v934 = vld [vmem:[#allocation8 + $0x34c] sm:$0xff]
        %v935 = vld [vmem:[#allocation8 + $0x354] sm:$0xff]
        %v936 = vld [vmem:[#allocation8 + $0x35c] sm:$0xf]
        %v937 = vld [vmem:[#allocation8 + $0x360] sm:$0xff]
        %v938 = vld [vmem:[#allocation8 + $0x368] sm:$0xff]
        %v939 = vld [vmem:[#allocation8 + $0x370] sm:$0xff]
        %v940 = vld [vmem:[#allocation8 + $0x378] sm:$0xff]
        %v941 = vld [vmem:[#allocation8 + $0x380] sm:$0xf]
        %v942 = vld [vmem:[#allocation8 + $0x384] sm:$0xff]
        %v943 = vld [vmem:[#allocation8 + $0x38c] sm:$0xff]
        %v944 = vld [vmem:[#allocation8 + $0x394] sm:$0xff]
        %v945 = vld [vmem:[#allocation8 + $0x39c] sm:$0xff]
        %v946 = vld [vmem:[#allocation8 + $0x3a4] sm:$0xf]
        %v947 = vld [vmem:[#allocation8 + $0x3a8] sm:$0xff]
        %v948 = vld [vmem:[#allocation8 + $0x3b0] sm:$0xff]
        %v949 = vld [vmem:[#allocation8 + $0x3b8] sm:$0xff]
        %v950 = vld [vmem:[#allocation8 + $0x3c0] sm:$0xff]
        %v951 = vld [vmem:[#allocation8 + $0x3c8] sm:$0xf]
        %v952 = vld [vmem:[#allocation8 + $0x3cc] sm:$0xff]
        %v953 = vld [vmem:[#allocation8 + $0x3d4] sm:$0xff]
        %v954 = vld [vmem:[#allocation8 + $0x3dc] sm:$0xff]
        %v955 = vld [vmem:[#allocation8 + $0x3e4] sm:$0xff]
        %v956 = vld [vmem:[#allocation8 + $0x3ec] sm:$0xf]
        %v957 = vld [vmem:[#allocation8 + $0x3f0] sm:$0xff]
        %v958 = vld [vmem:[#allocation8 + $0x3f8] sm:$0xff]
        %v959 = vld [vmem:[#allocation8 + $0x400] sm:$0xff]
        %v960 = vld [vmem:[#allocation8 + $0x408] sm:$0xff]
        %v961 = vld [vmem:[#allocation8 + $0x410] sm:$0xf]
        %v962 = vld [vmem:[#allocation8 + $0x414] sm:$0xff]
        %v963 = vld [vmem:[#allocation8 + $0x41c] sm:$0xff]
        %v964 = vld [vmem:[#allocation8 + $0x424] sm:$0xff]
        %v965 = vld [vmem:[#allocation8 + $0x42c] sm:$0xff]
        %v966 = vld [vmem:[#allocation8 + $0x434] sm:$0xf]
        %v967 = vld [vmem:[#allocation8 + $0x438] sm:$0xff]
        %v968 = vld [vmem:[#allocation8 + $0x440] sm:$0xff]
        %v969 = vld [vmem:[#allocation8 + $0x448] sm:$0xff]
        %v970 = vld [vmem:[#allocation8 + $0x450] sm:$0xff]
        %v971 = vld [vmem:[#allocation8 + $0x458] sm:$0xf]
        %v972 = vld [vmem:[#allocation8 + $0x45c] sm:$0xff]
        %v973 = vld [vmem:[#allocation8 + $0x464] sm:$0xff]
        %v974 = vld [vmem:[#allocation8 + $0x46c] sm:$0xff]
        %v975 = vld [vmem:[#allocation8 + $0x474] sm:$0xff]
        %v976 = vld [vmem:[#allocation8 + $0x47c] sm:$0xf]
        %v977 = vld [vmem:[#allocation8 + $0x480] sm:$0xff]
        %v978 = vld [vmem:[#allocation8 + $0x488] sm:$0xff]
        %v979 = vld [vmem:[#allocation8 + $0x490] sm:$0xff]
        %v980 = vld [vmem:[#allocation8 + $0x498] sm:$0xff]
        %v981 = vld [vmem:[#allocation8 + $0x4a0] sm:$0xf]
        %v982 = vld [vmem:[#allocation8 + $0x4a4] sm:$0xff]
        %v983 = vld [vmem:[#allocation8 + $0x4ac] sm:$0xff]
        %v984 = vld [vmem:[#allocation8 + $0x4b4] sm:$0xff]
        %v985 = vld [vmem:[#allocation8 + $0x4bc] sm:$0xff]
        %v986 = vld [vmem:[#allocation8 + $0x4c4] sm:$0xf]
        %v987 = vld [vmem:[#allocation8 + $0x4c8] sm:$0xff]
        %v988 = vld [vmem:[#allocation8 + $0x4d0] sm:$0xff]
        %v989 = vld [vmem:[#allocation8 + $0x4d8] sm:$0xff]
        %v990 = vld [vmem:[#allocation8 + $0x4e0] sm:$0xff]
        %v991 = vld [vmem:[#allocation8 + $0x4e8] sm:$0xf]
        %v992 = vld [vmem:[#allocation8 + $0x4ec] sm:$0xff]
        %v993 = vld [vmem:[#allocation8 + $0x4f4] sm:$0xff]
        %v994 = vld [vmem:[#allocation8 + $0x4fc] sm:$0xff]
        %v995 = vld [vmem:[#allocation8 + $0x504] sm:$0xff]
        %v996 = vld [vmem:[#allocation8 + $0x50c] sm:$0xf]
        %v997 = vld [vmem:[#allocation8 + $0x510] sm:$0xff]
        %v998 = vld [vmem:[#allocation8 + $0x518] sm:$0xff]
        %v999 = vld [vmem:[#allocation8 + $0x520] sm:$0xff]
        %v1000 = vld [vmem:[#allocation8 + $0x528] sm:$0xff]
        %v1001 = vld [vmem:[#allocation8 + $0x530] sm:$0xf]
        %v1002 = vld [vmem:[#allocation8 + $0x534] sm:$0xff]
        %v1003 = vld [vmem:[#allocation8 + $0x53c] sm:$0xff]
        %v1004 = vld [vmem:[#allocation8 + $0x544] sm:$0xff]
        %v1005 = vld [vmem:[#allocation8 + $0x54c] sm:$0xff]
        %v1006 = vld [vmem:[#allocation8 + $0x554] sm:$0xf]
        %v1007 = vld [vmem:[#allocation8 + $0x558] sm:$0xff]
        %v1008 = vld [vmem:[#allocation8 + $0x560] sm:$0xff]
        %v1009 = vld [vmem:[#allocation8 + $0x568] sm:$0xff]
        %v1010 = vld [vmem:[#allocation8 + $0x570] sm:$0xff]
        %v1011 = vld [vmem:[#allocation8 + $0x578] sm:$0xf]
        %v1012 = vld [vmem:[#allocation8 + $0x57c] sm:$0xff]
        %v1013 = vld [vmem:[#allocation8 + $0x584] sm:$0xff]
        %v1014 = vld [vmem:[#allocation8 + $0x58c] sm:$0xff]
        %v1015 = vld [vmem:[#allocation8 + $0x594] sm:$0xff]
        %v1016 = vld [vmem:[#allocation8 + $0x59c] sm:$0xf]
        %v1017 = vld [vmem:[#allocation8 + $0x5a0] sm:$0xff]
        %v1018 = vld [vmem:[#allocation8 + $0x5a8] sm:$0xff]
        %v1019 = vld [vmem:[#allocation8 + $0x5b0] sm:$0xff]
        %v1020 = vld [vmem:[#allocation8 + $0x5b8] sm:$0xff]
        %v1021 = vld [vmem:[#allocation8 + $0x5c0] sm:$0xf]
        %v1022 = vld [vmem:[#allocation8 + $0x5c4] sm:$0xff]
        %v1023 = vld [vmem:[#allocation8 + $0x5cc] sm:$0xff]
        %v1024 = vld [vmem:[#allocation8 + $0x5d4] sm:$0xff]
        %v1025 = vld [vmem:[#allocation8 + $0x5dc] sm:$0xff]
        %v1026 = vld [vmem:[#allocation8 + $0x5e4] sm:$0xf]
        %v1027 = vld [vmem:[#allocation8 + $0x5e8] sm:$0xff]
        %v1028 = vld [vmem:[#allocation8 + $0x5f0] sm:$0xff]
        %v1029 = vld [vmem:[#allocation8 + $0x5f8] sm:$0xff]
        %v1030 = vld [vmem:[#allocation8 + $0x600] sm:$0xff]
        %v1031 = vld [vmem:[#allocation8 + $0x608] sm:$0xf]
        %v1032 = vld [vmem:[#allocation8 + $0x60c] sm:$0xff]
        %v1033 = vld [vmem:[#allocation8 + $0x614] sm:$0xff]
        %v1034 = vld [vmem:[#allocation8 + $0x61c] sm:$0xff]
        %v1035 = vld [vmem:[#allocation8 + $0x624] sm:$0xff]
        %v1036 = vld [vmem:[#allocation8 + $0x62c] sm:$0xf]
        %v1037 = vld [vmem:[#allocation8 + $0x630] sm:$0xff]
        %v1038 = vld [vmem:[#allocation8 + $0x638] sm:$0xff]
        %v1039 = vld [vmem:[#allocation8 + $0x640] sm:$0xff]
        %v1040 = vld [vmem:[#allocation8 + $0x648] sm:$0xff]
        %v1041 = vld [vmem:[#allocation8 + $0x650] sm:$0xf]
        %v1042 = vld [vmem:[#allocation8 + $0x654] sm:$0xff]
        %v1043 = vld [vmem:[#allocation8 + $0x65c] sm:$0xff]
        %v1044 = vld [vmem:[#allocation8 + $0x664] sm:$0xff]
        %v1045 = vld [vmem:[#allocation8 + $0x66c] sm:$0xff]
        %v1046 = vld [vmem:[#allocation8 + $0x674] sm:$0xf]
        %v1047 = vld [vmem:[#allocation8 + $0x678] sm:$0xff]
        %v1048 = vld [vmem:[#allocation8 + $0x680] sm:$0xff]
        %v1049 = vld [vmem:[#allocation8 + $0x688] sm:$0xff]
        %v1050 = vld [vmem:[#allocation8 + $0x690] sm:$0xff]
        %v1051 = vld [vmem:[#allocation8 + $0x698] sm:$0xf]
        %v1052 = vld [vmem:[#allocation8 + $0x69c] sm:$0xff]
        %v1053 = vld [vmem:[#allocation8 + $0x6a4] sm:$0xff]
        %v1054 = vld [vmem:[#allocation8 + $0x6ac] sm:$0xff]
        %v1055 = vld [vmem:[#allocation8 + $0x6b4] sm:$0xff]
        %v1056 = vld [vmem:[#allocation8 + $0x6bc] sm:$0xf]
        %v1297 = vunpack.c.l.b16 %v817
        %v1298 = vunpack.c.h.b16 %v817
        %v1299 = vunpack.c.l.b16 %v818
        %v1300 = vunpack.c.h.b16 %v818
        %v1301 = vunpack.c.l.b16 %v819
        %v1302 = vunpack.c.h.b16 %v819
        %v1303 = vunpack.c.l.b16 %v820
        %v1304 = vunpack.c.h.b16 %v820
        %v1305 = vunpack.c.l.b16 %v821
        %v1306 = vunpack.c.l.b16 %v822
        %v1307 = vunpack.c.h.b16 %v822
        %v1308 = vunpack.c.l.b16 %v823
        %v1309 = vunpack.c.h.b16 %v823
        %v1310 = vunpack.c.l.b16 %v824
        %v1311 = vunpack.c.h.b16 %v824
        %v1312 = vunpack.c.l.b16 %v825
        %v1313 = vunpack.c.h.b16 %v825
        %v1314 = vunpack.c.l.b16 %v826
        %v1315 = vunpack.c.l.b16 %v827
        %v1316 = vunpack.c.h.b16 %v827
        %v1317 = vunpack.c.l.b16 %v828
        %v1318 = vunpack.c.h.b16 %v828
        %v1319 = vunpack.c.l.b16 %v829
        %v1320 = vunpack.c.h.b16 %v829
        %v1321 = vunpack.c.l.b16 %v830
        %v1322 = vunpack.c.h.b16 %v830
        %v1323 = vunpack.c.l.b16 %v831
        %v1324 = vunpack.c.l.b16 %v832
        %v1325 = vunpack.c.h.b16 %v832
        %v1326 = vunpack.c.l.b16 %v833
        %v1327 = vunpack.c.h.b16 %v833
        %v1328 = vunpack.c.l.b16 %v834
        %v1329 = vunpack.c.h.b16 %v834
        %v1330 = vunpack.c.l.b16 %v835
        %v1331 = vunpack.c.h.b16 %v835
        %v1332 = vunpack.c.l.b16 %v836
        %v1333 = vunpack.c.l.b16 %v837
        %v1334 = vunpack.c.h.b16 %v837
        %v1335 = vunpack.c.l.b16 %v838
        %v1336 = vunpack.c.h.b16 %v838
        %v1337 = vunpack.c.l.b16 %v839
        %v1338 = vunpack.c.h.b16 %v839
        %v1339 = vunpack.c.l.b16 %v840
        %v1340 = vunpack.c.h.b16 %v840
        %v1341 = vunpack.c.l.b16 %v841
        %v1342 = vunpack.c.l.b16 %v842
        %v1343 = vunpack.c.h.b16 %v842
        %v1344 = vunpack.c.l.b16 %v843
        %v1345 = vunpack.c.h.b16 %v843
        %v1346 = vunpack.c.l.b16 %v844
        %v1347 = vunpack.c.h.b16 %v844
        %v1348 = vunpack.c.l.b16 %v845
        %v1349 = vunpack.c.h.b16 %v845
        %v1350 = vunpack.c.l.b16 %v846
        %v1351 = vunpack.c.l.b16 %v847
        %v1352 = vunpack.c.h.b16 %v847
        %v1353 = vunpack.c.l.b16 %v848
        %v1354 = vunpack.c.h.b16 %v848
        %v1355 = vunpack.c.l.b16 %v849
        %v1356 = vunpack.c.h.b16 %v849
        %v1357 = vunpack.c.l.b16 %v850
        %v1358 = vunpack.c.h.b16 %v850
        %v1359 = vunpack.c.l.b16 %v851
        %v1360 = vunpack.c.l.b16 %v852
        %v1361 = vunpack.c.h.b16 %v852
        %v1362 = vunpack.c.l.b16 %v853
        %v1363 = vunpack.c.h.b16 %v853
        %v1364 = vunpack.c.l.b16 %v854
        %v1365 = vunpack.c.h.b16 %v854
        %v1366 = vunpack.c.l.b16 %v855
        %v1367 = vunpack.c.h.b16 %v855
        %v1368 = vunpack.c.l.b16 %v856
        %v1369 = vunpack.c.l.b16 %v857
        %v1370 = vunpack.c.h.b16 %v857
        %v1371 = vunpack.c.l.b16 %v858
        %v1372 = vunpack.c.h.b16 %v858
        %v1373 = vunpack.c.l.b16 %v859
        %v1374 = vunpack.c.h.b16 %v859
        %v1375 = vunpack.c.l.b16 %v860
        %v1376 = vunpack.c.h.b16 %v860
        %v1377 = vunpack.c.l.b16 %v861
        %v1378 = vunpack.c.l.b16 %v862
        %v1379 = vunpack.c.h.b16 %v862
        %v1380 = vunpack.c.l.b16 %v863
        %v1381 = vunpack.c.h.b16 %v863
        %v1382 = vunpack.c.l.b16 %v864
        %v1383 = vunpack.c.h.b16 %v864
        %v1384 = vunpack.c.l.b16 %v865
        %v1385 = vunpack.c.h.b16 %v865
        %v1386 = vunpack.c.l.b16 %v866
        %v1387 = vunpack.c.l.b16 %v867
        %v1388 = vunpack.c.h.b16 %v867
        %v1389 = vunpack.c.l.b16 %v868
        %v1390 = vunpack.c.h.b16 %v868
        %v1391 = vunpack.c.l.b16 %v869
        %v1392 = vunpack.c.h.b16 %v869
        %v1393 = vunpack.c.l.b16 %v870
        %v1394 = vunpack.c.h.b16 %v870
        %v1395 = vunpack.c.l.b16 %v871
        %v1396 = vunpack.c.l.b16 %v872
        %v1397 = vunpack.c.h.b16 %v872
        %v1398 = vunpack.c.l.b16 %v873
        %v1399 = vunpack.c.h.b16 %v873
        %v1400 = vunpack.c.l.b16 %v874
        %v1401 = vunpack.c.h.b16 %v874
        %v1402 = vunpack.c.l.b16 %v875
        %v1403 = vunpack.c.h.b16 %v875
        %v1404 = vunpack.c.l.b16 %v876
        %v1405 = vunpack.c.l.b16 %v877
        %v1406 = vunpack.c.h.b16 %v877
        %v1407 = vunpack.c.l.b16 %v878
        %v1408 = vunpack.c.h.b16 %v878
        %v1409 = vunpack.c.l.b16 %v879
        %v1410 = vunpack.c.h.b16 %v879
        %v1411 = vunpack.c.l.b16 %v880
        %v1412 = vunpack.c.h.b16 %v880
        %v1413 = vunpack.c.l.b16 %v881
        %v1414 = vunpack.c.l.b16 %v882
        %v1415 = vunpack.c.h.b16 %v882
        %v1416 = vunpack.c.l.b16 %v883
        %v1417 = vunpack.c.h.b16 %v883
        %v1418 = vunpack.c.l.b16 %v884
        %v1419 = vunpack.c.h.b16 %v884
        %v1420 = vunpack.c.l.b16 %v885
        %v1421 = vunpack.c.h.b16 %v885
        %v1422 = vunpack.c.l.b16 %v886
        %v1423 = vunpack.c.l.b16 %v887
        %v1424 = vunpack.c.h.b16 %v887
        %v1425 = vunpack.c.l.b16 %v888
        %v1426 = vunpack.c.h.b16 %v888
        %v1427 = vunpack.c.l.b16 %v889
        %v1428 = vunpack.c.h.b16 %v889
        %v1429 = vunpack.c.l.b16 %v890
        %v1430 = vunpack.c.h.b16 %v890
        %v1431 = vunpack.c.l.b16 %v891
        %v1432 = vunpack.c.l.b16 %v892
        %v1433 = vunpack.c.h.b16 %v892
        %v1434 = vunpack.c.l.b16 %v893
        %v1435 = vunpack.c.h.b16 %v893
        %v1436 = vunpack.c.l.b16 %v894
        %v1437 = vunpack.c.h.b16 %v894
        %v1438 = vunpack.c.l.b16 %v895
        %v1439 = vunpack.c.h.b16 %v895
        %v1440 = vunpack.c.l.b16 %v896
        %v1441 = vunpack.c.l.b16 %v897
        %v1442 = vunpack.c.h.b16 %v897
        %v1443 = vunpack.c.l.b16 %v898
        %v1444 = vunpack.c.h.b16 %v898
        %v1445 = vunpack.c.l.b16 %v899
        %v1446 = vunpack.c.h.b16 %v899
        %v1447 = vunpack.c.l.b16 %v900
        %v1448 = vunpack.c.h.b16 %v900
        %v1449 = vunpack.c.l.b16 %v901
        %v1450 = vunpack.c.l.b16 %v902
        %v1451 = vunpack.c.h.b16 %v902
        %v1452 = vunpack.c.l.b16 %v903
        %v1453 = vunpack.c.h.b16 %v903
        %v1454 = vunpack.c.l.b16 %v904
        %v1455 = vunpack.c.h.b16 %v904
        %v1456 = vunpack.c.l.b16 %v905
        %v1457 = vunpack.c.h.b16 %v905
        %v1458 = vunpack.c.l.b16 %v906
        %v1459 = vunpack.c.l.b16 %v907
        %v1460 = vunpack.c.h.b16 %v907
        %v1461 = vunpack.c.l.b16 %v908
        %v1462 = vunpack.c.h.b16 %v908
        %v1463 = vunpack.c.l.b16 %v909
        %v1464 = vunpack.c.h.b16 %v909
        %v1465 = vunpack.c.l.b16 %v910
        %v1466 = vunpack.c.h.b16 %v910
        %v1467 = vunpack.c.l.b16 %v911
        %v1468 = vunpack.c.l.b16 %v912
        %v1469 = vunpack.c.h.b16 %v912
        %v1470 = vunpack.c.l.b16 %v913
        %v1471 = vunpack.c.h.b16 %v913
        %v1472 = vunpack.c.l.b16 %v914
        %v1473 = vunpack.c.h.b16 %v914
        %v1474 = vunpack.c.l.b16 %v915
        %v1475 = vunpack.c.h.b16 %v915
        %v1476 = vunpack.c.l.b16 %v916
        %v1477 = vunpack.c.l.b16 %v917
        %v1478 = vunpack.c.h.b16 %v917
        %v1479 = vunpack.c.l.b16 %v918
        %v1480 = vunpack.c.h.b16 %v918
        %v1481 = vunpack.c.l.b16 %v919
        %v1482 = vunpack.c.h.b16 %v919
        %v1483 = vunpack.c.l.b16 %v920
        %v1484 = vunpack.c.h.b16 %v920
        %v1485 = vunpack.c.l.b16 %v921
        %v1486 = vunpack.c.l.b16 %v922
        %v1487 = vunpack.c.h.b16 %v922
        %v1488 = vunpack.c.l.b16 %v923
        %v1489 = vunpack.c.h.b16 %v923
        %v1490 = vunpack.c.l.b16 %v924
        %v1491 = vunpack.c.h.b16 %v924
        %v1492 = vunpack.c.l.b16 %v925
        %v1493 = vunpack.c.h.b16 %v925
        %v1494 = vunpack.c.l.b16 %v926
        %v1495 = vunpack.c.l.b16 %v927
        %v1496 = vunpack.c.h.b16 %v927
        %v1497 = vunpack.c.l.b16 %v928
        %v1498 = vunpack.c.h.b16 %v928
        %v1499 = vunpack.c.l.b16 %v929
        %v1500 = vunpack.c.h.b16 %v929
        %v1501 = vunpack.c.l.b16 %v930
        %v1502 = vunpack.c.h.b16 %v930
        %v1503 = vunpack.c.l.b16 %v931
        %v1504 = vunpack.c.l.b16 %v932
        %v1505 = vunpack.c.h.b16 %v932
        %v1506 = vunpack.c.l.b16 %v933
        %v1507 = vunpack.c.h.b16 %v933
        %v1508 = vunpack.c.l.b16 %v934
        %v1509 = vunpack.c.h.b16 %v934
        %v1510 = vunpack.c.l.b16 %v935
        %v1511 = vunpack.c.h.b16 %v935
        %v1512 = vunpack.c.l.b16 %v936
        %v1513 = vunpack.c.l.b16 %v937
        %v1514 = vunpack.c.h.b16 %v937
        %v1515 = vunpack.c.l.b16 %v938
        %v1516 = vunpack.c.h.b16 %v938
        %v1517 = vunpack.c.l.b16 %v939
        %v1518 = vunpack.c.h.b16 %v939
        %v1519 = vunpack.c.l.b16 %v940
        %v1520 = vunpack.c.h.b16 %v940
        %v1521 = vunpack.c.l.b16 %v941
        %v1522 = vunpack.c.l.b16 %v942
        %v1523 = vunpack.c.h.b16 %v942
        %v1524 = vunpack.c.l.b16 %v943
        %v1525 = vunpack.c.h.b16 %v943
        %v1526 = vunpack.c.l.b16 %v944
        %v1527 = vunpack.c.h.b16 %v944
        %v1528 = vunpack.c.l.b16 %v945
        %v1529 = vunpack.c.h.b16 %v945
        %v1530 = vunpack.c.l.b16 %v946
        %v1531 = vunpack.c.l.b16 %v947
        %v1532 = vunpack.c.h.b16 %v947
        %v1533 = vunpack.c.l.b16 %v948
        %v1534 = vunpack.c.h.b16 %v948
        %v1535 = vunpack.c.l.b16 %v949
        %v1536 = vunpack.c.h.b16 %v949
        %v1537 = vunpack.c.l.b16 %v950
        %v1538 = vunpack.c.h.b16 %v950
        %v1539 = vunpack.c.l.b16 %v951
        %v1540 = vunpack.c.l.b16 %v952
        %v1541 = vunpack.c.h.b16 %v952
        %v1542 = vunpack.c.l.b16 %v953
        %v1543 = vunpack.c.h.b16 %v953
        %v1544 = vunpack.c.l.b16 %v954
        %v1545 = vunpack.c.h.b16 %v954
        %v1546 = vunpack.c.l.b16 %v955
        %v1547 = vunpack.c.h.b16 %v955
        %v1548 = vunpack.c.l.b16 %v956
        %v1549 = vunpack.c.l.b16 %v957
        %v1550 = vunpack.c.h.b16 %v957
        %v1551 = vunpack.c.l.b16 %v958
        %v1552 = vunpack.c.h.b16 %v958
        %v1553 = vunpack.c.l.b16 %v959
        %v1554 = vunpack.c.h.b16 %v959
        %v1555 = vunpack.c.l.b16 %v960
        %v1556 = vunpack.c.h.b16 %v960
        %v1557 = vunpack.c.l.b16 %v961
        %v1558 = vunpack.c.l.b16 %v962
        %v1559 = vunpack.c.h.b16 %v962
        %v1560 = vunpack.c.l.b16 %v963
        %v1561 = vunpack.c.h.b16 %v963
        %v1562 = vunpack.c.l.b16 %v964
        %v1563 = vunpack.c.h.b16 %v964
        %v1564 = vunpack.c.l.b16 %v965
        %v1565 = vunpack.c.h.b16 %v965
        %v1566 = vunpack.c.l.b16 %v966
        %v1567 = vunpack.c.l.b16 %v967
        %v1568 = vunpack.c.h.b16 %v967
        %v1569 = vunpack.c.l.b16 %v968
        %v1570 = vunpack.c.h.b16 %v968
        %v1571 = vunpack.c.l.b16 %v969
        %v1572 = vunpack.c.h.b16 %v969
        %v1573 = vunpack.c.l.b16 %v970
        %v1574 = vunpack.c.h.b16 %v970
        %v1575 = vunpack.c.l.b16 %v971
        %v1576 = vunpack.c.l.b16 %v972
        %v1577 = vunpack.c.h.b16 %v972
        %v1578 = vunpack.c.l.b16 %v973
        %v1579 = vunpack.c.h.b16 %v973
        %v1580 = vunpack.c.l.b16 %v974
        %v1581 = vunpack.c.h.b16 %v974
        %v1582 = vunpack.c.l.b16 %v975
        %v1583 = vunpack.c.h.b16 %v975
        %v1584 = vunpack.c.l.b16 %v976
        %v1585 = vunpack.c.l.b16 %v977
        %v1586 = vunpack.c.h.b16 %v977
        %v1587 = vunpack.c.l.b16 %v978
        %v1588 = vunpack.c.h.b16 %v978
        %v1589 = vunpack.c.l.b16 %v979
        %v1590 = vunpack.c.h.b16 %v979
        %v1591 = vunpack.c.l.b16 %v980
        %v1592 = vunpack.c.h.b16 %v980
        %v1593 = vunpack.c.l.b16 %v981
        %v1594 = vunpack.c.l.b16 %v982
        %v1595 = vunpack.c.h.b16 %v982
        %v1596 = vunpack.c.l.b16 %v983
        %v1597 = vunpack.c.h.b16 %v983
        %v1598 = vunpack.c.l.b16 %v984
        %v1599 = vunpack.c.h.b16 %v984
        %v1600 = vunpack.c.l.b16 %v985
        %v1601 = vunpack.c.h.b16 %v985
        %v1602 = vunpack.c.l.b16 %v986
        %v1603 = vunpack.c.l.b16 %v987
        %v1604 = vunpack.c.h.b16 %v987
        %v1605 = vunpack.c.l.b16 %v988
        %v1606 = vunpack.c.h.b16 %v988
        %v1607 = vunpack.c.l.b16 %v989
        %v1608 = vunpack.c.h.b16 %v989
        %v1609 = vunpack.c.l.b16 %v990
        %v1610 = vunpack.c.h.b16 %v990
        %v1611 = vunpack.c.l.b16 %v991
        %v1612 = vunpack.c.l.b16 %v992
        %v1613 = vunpack.c.h.b16 %v992
        %v1614 = vunpack.c.l.b16 %v993
        %v1615 = vunpack.c.h.b16 %v993
        %v1616 = vunpack.c.l.b16 %v994
        %v1617 = vunpack.c.h.b16 %v994
        %v1618 = vunpack.c.l.b16 %v995
        %v1619 = vunpack.c.h.b16 %v995
        %v1620 = vunpack.c.l.b16 %v996
        %v1621 = vunpack.c.l.b16 %v997
        %v1622 = vunpack.c.h.b16 %v997
        %v1623 = vunpack.c.l.b16 %v998
        %v1624 = vunpack.c.h.b16 %v998
        %v1625 = vunpack.c.l.b16 %v999
        %v1626 = vunpack.c.h.b16 %v999
        %v1627 = vunpack.c.l.b16 %v1000
        %v1628 = vunpack.c.h.b16 %v1000
        %v1629 = vunpack.c.l.b16 %v1001
        %v1630 = vunpack.c.l.b16 %v1002
        %v1631 = vunpack.c.h.b16 %v1002
        %v1632 = vunpack.c.l.b16 %v1003
        %v1633 = vunpack.c.h.b16 %v1003
        %v1634 = vunpack.c.l.b16 %v1004
        %v1635 = vunpack.c.h.b16 %v1004
        %v1636 = vunpack.c.l.b16 %v1005
        %v1637 = vunpack.c.h.b16 %v1005
        %v1638 = vunpack.c.l.b16 %v1006
        %v1639 = vunpack.c.l.b16 %v1007
        %v1640 = vunpack.c.h.b16 %v1007
        %v1641 = vunpack.c.l.b16 %v1008
        %v1642 = vunpack.c.h.b16 %v1008
        %v1643 = vunpack.c.l.b16 %v1009
        %v1644 = vunpack.c.h.b16 %v1009
        %v1645 = vunpack.c.l.b16 %v1010
        %v1646 = vunpack.c.h.b16 %v1010
        %v1647 = vunpack.c.l.b16 %v1011
        %v1648 = vunpack.c.l.b16 %v1012
        %v1649 = vunpack.c.h.b16 %v1012
        %v1650 = vunpack.c.l.b16 %v1013
        %v1651 = vunpack.c.h.b16 %v1013
        %v1652 = vunpack.c.l.b16 %v1014
        %v1653 = vunpack.c.h.b16 %v1014
        %v1654 = vunpack.c.l.b16 %v1015
        %v1655 = vunpack.c.h.b16 %v1015
        %v1656 = vunpack.c.l.b16 %v1016
        %v1657 = vunpack.c.l.b16 %v1017
        %v1658 = vunpack.c.h.b16 %v1017
        %v1659 = vunpack.c.l.b16 %v1018
        %v1660 = vunpack.c.h.b16 %v1018
        %v1661 = vunpack.c.l.b16 %v1019
        %v1662 = vunpack.c.h.b16 %v1019
        %v1663 = vunpack.c.l.b16 %v1020
        %v1664 = vunpack.c.h.b16 %v1020
        %v1665 = vunpack.c.l.b16 %v1021
        %v1666 = vunpack.c.l.b16 %v1022
        %v1667 = vunpack.c.h.b16 %v1022
        %v1668 = vunpack.c.l.b16 %v1023
        %v1669 = vunpack.c.h.b16 %v1023
        %v1670 = vunpack.c.l.b16 %v1024
        %v1671 = vunpack.c.h.b16 %v1024
        %v1672 = vunpack.c.l.b16 %v1025
        %v1673 = vunpack.c.h.b16 %v1025
        %v1674 = vunpack.c.l.b16 %v1026
        %v1675 = vunpack.c.l.b16 %v1027
        %v1676 = vunpack.c.h.b16 %v1027
        %v1677 = vunpack.c.l.b16 %v1028
        %v1678 = vunpack.c.h.b16 %v1028
        %v1679 = vunpack.c.l.b16 %v1029
        %v1680 = vunpack.c.h.b16 %v1029
        %v1681 = vunpack.c.l.b16 %v1030
        %v1682 = vunpack.c.h.b16 %v1030
        %v1683 = vunpack.c.l.b16 %v1031
        %v1684 = vunpack.c.l.b16 %v1032
        %v1685 = vunpack.c.h.b16 %v1032
        %v1686 = vunpack.c.l.b16 %v1033
        %v1687 = vunpack.c.h.b16 %v1033
        %v1688 = vunpack.c.l.b16 %v1034
        %v1689 = vunpack.c.h.b16 %v1034
        %v1690 = vunpack.c.l.b16 %v1035
        %v1691 = vunpack.c.h.b16 %v1035
        %v1692 = vunpack.c.l.b16 %v1036
        %v1693 = vunpack.c.l.b16 %v1037
        %v1694 = vunpack.c.h.b16 %v1037
        %v1695 = vunpack.c.l.b16 %v1038
        %v1696 = vunpack.c.h.b16 %v1038
        %v1697 = vunpack.c.l.b16 %v1039
        %v1698 = vunpack.c.h.b16 %v1039
        %v1699 = vunpack.c.l.b16 %v1040
        %v1700 = vunpack.c.h.b16 %v1040
        %v1701 = vunpack.c.l.b16 %v1041
        %v1702 = vunpack.c.l.b16 %v1042
        %v1703 = vunpack.c.h.b16 %v1042
        %v1704 = vunpack.c.l.b16 %v1043
        %v1705 = vunpack.c.h.b16 %v1043
        %v1706 = vunpack.c.l.b16 %v1044
        %v1707 = vunpack.c.h.b16 %v1044
        %v1708 = vunpack.c.l.b16 %v1045
        %v1709 = vunpack.c.h.b16 %v1045
        %v1710 = vunpack.c.l.b16 %v1046
        %v1711 = vunpack.c.l.b16 %v1047
        %v1712 = vunpack.c.h.b16 %v1047
        %v1713 = vunpack.c.l.b16 %v1048
        %v1714 = vunpack.c.h.b16 %v1048
        %v1715 = vunpack.c.l.b16 %v1049
        %v1716 = vunpack.c.h.b16 %v1049
        %v1717 = vunpack.c.l.b16 %v1050
        %v1718 = vunpack.c.h.b16 %v1050
        %v1719 = vunpack.c.l.b16 %v1051
        %v1720 = vunpack.c.l.b16 %v1052
        %v1721 = vunpack.c.h.b16 %v1052
        %v1722 = vunpack.c.l.b16 %v1053
        %v1723 = vunpack.c.h.b16 %v1053
        %v1724 = vunpack.c.l.b16 %v1054
        %v1725 = vunpack.c.h.b16 %v1054
        %v1726 = vunpack.c.l.b16 %v1055
        %v1727 = vunpack.c.h.b16 %v1055
        %v1728 = vunpack.c.l.b16 %v1056
        %v1729 = vpack.c.b16 %v1306, %v1297
        %v1730 = vpack.c.b16 %v1307, %v1298
        %v1731 = vpack.c.b16 %v1308, %v1299
        %v1732 = vpack.c.b16 %v1309, %v1300
        %v1733 = vpack.c.b16 %v1310, %v1301
        %v1734 = vpack.c.b16 %v1311, %v1302
        %v1735 = vpack.c.b16 %v1312, %v1303
        %v1736 = vpack.c.b16 %v1313, %v1304
        %v1737 = vpack.c.b16 %v1314, %v1305
        %v1738 = vpack.c.b16 %v1324, %v1315
        %v1739 = vpack.c.b16 %v1325, %v1316
        %v1740 = vpack.c.b16 %v1326, %v1317
        %v1741 = vpack.c.b16 %v1327, %v1318
        %v1742 = vpack.c.b16 %v1328, %v1319
        %v1743 = vpack.c.b16 %v1329, %v1320
        %v1744 = vpack.c.b16 %v1330, %v1321
        %v1745 = vpack.c.b16 %v1331, %v1322
        %v1746 = vpack.c.b16 %v1332, %v1323
        %v1747 = vpack.c.b16 %v1342, %v1333
        %v1748 = vpack.c.b16 %v1343, %v1334
        %v1749 = vpack.c.b16 %v1344, %v1335
        %v1750 = vpack.c.b16 %v1345, %v1336
        %v1751 = vpack.c.b16 %v1346, %v1337
        %v1752 = vpack.c.b16 %v1347, %v1338
        %v1753 = vpack.c.b16 %v1348, %v1339
        %v1754 = vpack.c.b16 %v1349, %v1340
        %v1755 = vpack.c.b16 %v1350, %v1341
        %v1756 = vpack.c.b16 %v1360, %v1351
        %v1757 = vpack.c.b16 %v1361, %v1352
        %v1758 = vpack.c.b16 %v1362, %v1353
        %v1759 = vpack.c.b16 %v1363, %v1354
        %v1760 = vpack.c.b16 %v1364, %v1355
        %v1761 = vpack.c.b16 %v1365, %v1356
        %v1762 = vpack.c.b16 %v1366, %v1357
        %v1763 = vpack.c.b16 %v1367, %v1358
        %v1764 = vpack.c.b16 %v1368, %v1359
        %v1765 = vpack.c.b16 %v1378, %v1369
        %v1766 = vpack.c.b16 %v1379, %v1370
        %v1767 = vpack.c.b16 %v1380, %v1371
        %v1768 = vpack.c.b16 %v1381, %v1372
        %v1769 = vpack.c.b16 %v1382, %v1373
        %v1770 = vpack.c.b16 %v1383, %v1374
        %v1771 = vpack.c.b16 %v1384, %v1375
        %v1772 = vpack.c.b16 %v1385, %v1376
        %v1773 = vpack.c.b16 %v1386, %v1377
        %v1774 = vpack.c.b16 %v1396, %v1387
        %v1775 = vpack.c.b16 %v1397, %v1388
        %v1776 = vpack.c.b16 %v1398, %v1389
        %v1777 = vpack.c.b16 %v1399, %v1390
        %v1778 = vpack.c.b16 %v1400, %v1391
        %v1779 = vpack.c.b16 %v1401, %v1392
        %v1780 = vpack.c.b16 %v1402, %v1393
        %v1781 = vpack.c.b16 %v1403, %v1394
        %v1782 = vpack.c.b16 %v1404, %v1395
        %v1783 = vpack.c.b16 %v1414, %v1405
        %v1784 = vpack.c.b16 %v1415, %v1406
        %v1785 = vpack.c.b16 %v1416, %v1407
        %v1786 = vpack.c.b16 %v1417, %v1408
        %v1787 = vpack.c.b16 %v1418, %v1409
        %v1788 = vpack.c.b16 %v1419, %v1410
        %v1789 = vpack.c.b16 %v1420, %v1411
        %v1790 = vpack.c.b16 %v1421, %v1412
        %v1791 = vpack.c.b16 %v1422, %v1413
        %v1792 = vpack.c.b16 %v1432, %v1423
        %v1793 = vpack.c.b16 %v1433, %v1424
        %v1794 = vpack.c.b16 %v1434, %v1425
        %v1795 = vpack.c.b16 %v1435, %v1426
        %v1796 = vpack.c.b16 %v1436, %v1427
        %v1797 = vpack.c.b16 %v1437, %v1428
        %v1798 = vpack.c.b16 %v1438, %v1429
        %v1799 = vpack.c.b16 %v1439, %v1430
        %v1800 = vpack.c.b16 %v1440, %v1431
        %v1801 = vpack.c.b16 %v1450, %v1441
        %v1802 = vpack.c.b16 %v1451, %v1442
        %v1803 = vpack.c.b16 %v1452, %v1443
        %v1804 = vpack.c.b16 %v1453, %v1444
        %v1805 = vpack.c.b16 %v1454, %v1445
        %v1806 = vpack.c.b16 %v1455, %v1446
        %v1807 = vpack.c.b16 %v1456, %v1447
        %v1808 = vpack.c.b16 %v1457, %v1448
        %v1809 = vpack.c.b16 %v1458, %v1449
        %v1810 = vpack.c.b16 %v1468, %v1459
        %v1811 = vpack.c.b16 %v1469, %v1460
        %v1812 = vpack.c.b16 %v1470, %v1461
        %v1813 = vpack.c.b16 %v1471, %v1462
        %v1814 = vpack.c.b16 %v1472, %v1463
        %v1815 = vpack.c.b16 %v1473, %v1464
        %v1816 = vpack.c.b16 %v1474, %v1465
        %v1817 = vpack.c.b16 %v1475, %v1466
        %v1818 = vpack.c.b16 %v1476, %v1467
        %v1819 = vpack.c.b16 %v1486, %v1477
        %v1820 = vpack.c.b16 %v1487, %v1478
        %v1821 = vpack.c.b16 %v1488, %v1479
        %v1822 = vpack.c.b16 %v1489, %v1480
        %v1823 = vpack.c.b16 %v1490, %v1481
        %v1824 = vpack.c.b16 %v1491, %v1482
        %v1825 = vpack.c.b16 %v1492, %v1483
        %v1826 = vpack.c.b16 %v1493, %v1484
        %v1827 = vpack.c.b16 %v1494, %v1485
        %v1828 = vpack.c.b16 %v1504, %v1495
        %v1829 = vpack.c.b16 %v1505, %v1496
        %v1830 = vpack.c.b16 %v1506, %v1497
        %v1831 = vpack.c.b16 %v1507, %v1498
        %v1832 = vpack.c.b16 %v1508, %v1499
        %v1833 = vpack.c.b16 %v1509, %v1500
        %v1834 = vpack.c.b16 %v1510, %v1501
        %v1835 = vpack.c.b16 %v1511, %v1502
        %v1836 = vpack.c.b16 %v1512, %v1503
        %v1837 = vpack.c.b16 %v1522, %v1513
        %v1838 = vpack.c.b16 %v1523, %v1514
        %v1839 = vpack.c.b16 %v1524, %v1515
        %v1840 = vpack.c.b16 %v1525, %v1516
        %v1841 = vpack.c.b16 %v1526, %v1517
        %v1842 = vpack.c.b16 %v1527, %v1518
        %v1843 = vpack.c.b16 %v1528, %v1519
        %v1844 = vpack.c.b16 %v1529, %v1520
        %v1845 = vpack.c.b16 %v1530, %v1521
        %v1846 = vpack.c.b16 %v1540, %v1531
        %v1847 = vpack.c.b16 %v1541, %v1532
        %v1848 = vpack.c.b16 %v1542, %v1533
        %v1849 = vpack.c.b16 %v1543, %v1534
        %v1850 = vpack.c.b16 %v1544, %v1535
        %v1851 = vpack.c.b16 %v1545, %v1536
        %v1852 = vpack.c.b16 %v1546, %v1537
        %v1853 = vpack.c.b16 %v1547, %v1538
        %v1854 = vpack.c.b16 %v1548, %v1539
        %v1855 = vpack.c.b16 %v1558, %v1549
        %v1856 = vpack.c.b16 %v1559, %v1550
        %v1857 = vpack.c.b16 %v1560, %v1551
        %v1858 = vpack.c.b16 %v1561, %v1552
        %v1859 = vpack.c.b16 %v1562, %v1553
        %v1860 = vpack.c.b16 %v1563, %v1554
        %v1861 = vpack.c.b16 %v1564, %v1555
        %v1862 = vpack.c.b16 %v1565, %v1556
        %v1863 = vpack.c.b16 %v1566, %v1557
        %v1864 = vpack.c.b16 %v1576, %v1567
        %v1865 = vpack.c.b16 %v1577, %v1568
        %v1866 = vpack.c.b16 %v1578, %v1569
        %v1867 = vpack.c.b16 %v1579, %v1570
        %v1868 = vpack.c.b16 %v1580, %v1571
        %v1869 = vpack.c.b16 %v1581, %v1572
        %v1870 = vpack.c.b16 %v1582, %v1573
        %v1871 = vpack.c.b16 %v1583, %v1574
        %v1872 = vpack.c.b16 %v1584, %v1575
        %v1873 = vpack.c.b16 %v1594, %v1585
        %v1874 = vpack.c.b16 %v1595, %v1586
        %v1875 = vpack.c.b16 %v1596, %v1587
        %v1876 = vpack.c.b16 %v1597, %v1588
        %v1877 = vpack.c.b16 %v1598, %v1589
        %v1878 = vpack.c.b16 %v1599, %v1590
        %v1879 = vpack.c.b16 %v1600, %v1591
        %v1880 = vpack.c.b16 %v1601, %v1592
        %v1881 = vpack.c.b16 %v1602, %v1593
        %v1882 = vpack.c.b16 %v1612, %v1603
        %v1883 = vpack.c.b16 %v1613, %v1604
        %v1884 = vpack.c.b16 %v1614, %v1605
        %v1885 = vpack.c.b16 %v1615, %v1606
        %v1886 = vpack.c.b16 %v1616, %v1607
        %v1887 = vpack.c.b16 %v1617, %v1608
        %v1888 = vpack.c.b16 %v1618, %v1609
        %v1889 = vpack.c.b16 %v1619, %v1610
        %v1890 = vpack.c.b16 %v1620, %v1611
        %v1891 = vpack.c.b16 %v1630, %v1621
        %v1892 = vpack.c.b16 %v1631, %v1622
        %v1893 = vpack.c.b16 %v1632, %v1623
        %v1894 = vpack.c.b16 %v1633, %v1624
        %v1895 = vpack.c.b16 %v1634, %v1625
        %v1896 = vpack.c.b16 %v1635, %v1626
        %v1897 = vpack.c.b16 %v1636, %v1627
        %v1898 = vpack.c.b16 %v1637, %v1628
        %v1899 = vpack.c.b16 %v1638, %v1629
        %v1900 = vpack.c.b16 %v1648, %v1639
        %v1901 = vpack.c.b16 %v1649, %v1640
        %v1902 = vpack.c.b16 %v1650, %v1641
        %v1903 = vpack.c.b16 %v1651, %v1642
        %v1904 = vpack.c.b16 %v1652, %v1643
        %v1905 = vpack.c.b16 %v1653, %v1644
        %v1906 = vpack.c.b16 %v1654, %v1645
        %v1907 = vpack.c.b16 %v1655, %v1646
        %v1908 = vpack.c.b16 %v1656, %v1647
        %v1909 = vpack.c.b16 %v1666, %v1657
        %v1910 = vpack.c.b16 %v1667, %v1658
        %v1911 = vpack.c.b16 %v1668, %v1659
        %v1912 = vpack.c.b16 %v1669, %v1660
        %v1913 = vpack.c.b16 %v1670, %v1661
        %v1914 = vpack.c.b16 %v1671, %v1662
        %v1915 = vpack.c.b16 %v1672, %v1663
        %v1916 = vpack.c.b16 %v1673, %v1664
        %v1917 = vpack.c.b16 %v1674, %v1665
        %v1918 = vpack.c.b16 %v1684, %v1675
        %v1919 = vpack.c.b16 %v1685, %v1676
        %v1920 = vpack.c.b16 %v1686, %v1677
        %v1921 = vpack.c.b16 %v1687, %v1678
        %v1922 = vpack.c.b16 %v1688, %v1679
        %v1923 = vpack.c.b16 %v1689, %v1680
        %v1924 = vpack.c.b16 %v1690, %v1681
        %v1925 = vpack.c.b16 %v1691, %v1682
        %v1926 = vpack.c.b16 %v1692, %v1683
        %v1927 = vpack.c.b16 %v1702, %v1693
        %v1928 = vpack.c.b16 %v1703, %v1694
        %v1929 = vpack.c.b16 %v1704, %v1695
        %v1930 = vpack.c.b16 %v1705, %v1696
        %v1931 = vpack.c.b16 %v1706, %v1697
        %v1932 = vpack.c.b16 %v1707, %v1698
        %v1933 = vpack.c.b16 %v1708, %v1699
        %v1934 = vpack.c.b16 %v1709, %v1700
        %v1935 = vpack.c.b16 %v1710, %v1701
        %v1936 = vpack.c.b16 %v1720, %v1711
        %v1937 = vpack.c.b16 %v1721, %v1712
        %v1938 = vpack.c.b16 %v1722, %v1713
        %v1939 = vpack.c.b16 %v1723, %v1714
        %v1940 = vpack.c.b16 %v1724, %v1715
        %v1941 = vpack.c.b16 %v1725, %v1716
        %v1942 = vpack.c.b16 %v1726, %v1717
        %v1943 = vpack.c.b16 %v1727, %v1718
        %v1944 = vpack.c.b16 %v1728, %v1719
        %2161 = vmatprep.subr.bf16.mxu0 %v1730
        %2162 = vmatpush1.bf16.msra.mxu0 %v1729
        %2163 = vmatprep.subr.bf16.mxu0 %v1739
        %2164 = vmatpush1.bf16.msra.mxu0 %v1738
        %2165 = vmatprep.subr.bf16.mxu0 %v1748
        %2166 = vmatpush1.bf16.msra.mxu0 %v1747
        %2167 = vmatprep.subr.bf16.mxu0 %v1757
        %2168 = vmatpush1.bf16.msra.mxu0 %v1756
        %2169 = vmatprep.subr.bf16.mxu0 %v1766
        %2170 = vmatpush1.bf16.msra.mxu0 %v1765
        %2171 = vmatprep.subr.bf16.mxu0 %v1775
        %2172 = vmatpush1.bf16.msra.mxu0 %v1774
        %2173 = vmatprep.subr.bf16.mxu0 %v1784
        %2174 = vmatpush1.bf16.msra.mxu0 %v1783
        %2175 = vmatprep.subr.bf16.mxu0 %v1793
        %2176 = vmatpush1.bf16.msra.mxu0 %v1792
        %2177 = vmatprep.subr.bf16.mxu0 %v1802
        %2178 = vmatpush1.bf16.msra.mxu0 %v1801
        %2179 = vmatprep.subr.bf16.mxu0 %v1811
        %2180 = vmatpush1.bf16.msra.mxu0 %v1810
        %2181 = vmatprep.subr.bf16.mxu0 %v1820
        %2182 = vmatpush1.bf16.msra.mxu0 %v1819
        %2183 = vmatprep.subr.bf16.mxu0 %v1829
        %2184 = vmatpush1.bf16.msra.mxu0 %v1828
        %2185 = vmatprep.subr.bf16.mxu0 %v1838
        %2186 = vmatpush1.bf16.msra.mxu0 %v1837
        %2187 = vmatprep.subr.bf16.mxu0 %v1847
        %2188 = vmatpush1.bf16.msra.mxu0 %v1846
        %2189 = vmatprep.subr.bf16.mxu0 %v1856
        %2190 = vmatpush1.bf16.msra.mxu0 %v1855
        %2191 = vmatprep.subr.bf16.mxu0 %v1865
        %2192 = vmatpush1.bf16.msra.mxu0 %v1864
        %2193 = vmatprep.mubr.bf16.mxu0 %v794
        %2194 = vmatmul.mubr.bf16.gmra.mrb[0].mxu0 %v793
        %v2195 = vpop.f32.mrb[0].mxu0
        %v2196 = vadd.f32 0.0, %v2195
        %v2197 = vpop.f32.mrb[0].mxu0
        %v2198 = vadd.f32 0.0, %v2197
        %v2199 = vpop.f32.mrb[0].mxu0
        %v2200 = vadd.f32 0.0, %v2199
        %v2201 = vpop.f32.mrb[0].mxu0
        %v2202 = vadd.f32 0.0, %v2201
        %2203 = vmatprep.mubr.bf16.mxu0 %v797
        %2204 = vmatmul.mubr.bf16.gmra.mrb[0].mxu0 %v796
        %v2205 = vpop.f32.mrb[0].mxu0
        %v2206 = vadd.f32 0.0, %v2205
        %v2207 = vpop.f32.mrb[0].mxu0
        %v2208 = vadd.f32 0.0, %v2207
        %v2209 = vpop.f32.mrb[0].mxu0
        %v2210 = vadd.f32 0.0, %v2209
        %v2211 = vpop.f32.mrb[0].mxu0
        %v2212 = vadd.f32 0.0, %v2211
        %2213 = vmatprep.mubr.bf16.mxu0 %v800
        %2214 = vmatmul.mubr.bf16.gmra.mrb[0].mxu0 %v799
        %v2215 = vpop.f32.mrb[0].mxu0
        %v2216 = vadd.f32 0.0, %v2215
        %v2217 = vpop.f32.mrb[0].mxu0
        %v2218 = vadd.f32 0.0, %v2217
        %v2219 = vpop.f32.mrb[0].mxu0
        %v2220 = vadd.f32 0.0, %v2219
        %v2221 = vpop.f32.mrb[0].mxu0
        %v2222 = vadd.f32 0.0, %v2221
        %2223 = vmatprep.mubr.bf16.mxu0 %v803
        %2224 = vmatmul.mubr.bf16.gmra.mrb[0].mxu0 %v802
        %v2225 = vpop.f32.mrb[0].mxu0
        %v2226 = vadd.f32 0.0, %v2225
        %v2227 = vpop.f32.mrb[0].mxu0
        %v2228 = vadd.f32 0.0, %v2227
        %v2229 = vpop.f32.mrb[0].mxu0
        %v2230 = vadd.f32 0.0, %v2229
        %v2231 = vpop.f32.mrb[0].mxu0
        %v2232 = vadd.f32 0.0, %v2231
        %2233 = vmatprep.mubr.bf16.mxu0 %v806
        %2234 = vmatmul.mubr.bf16.gmra.mrb[0].mxu0 %v805
        %v2235 = vpop.f32.mrb[0].mxu0
        %v2236 = vadd.f32 0.0, %v2235
        %v2237 = vpop.f32.mrb[0].mxu0
        %v2238 = vadd.f32 0.0, %v2237
        %v2239 = vpop.f32.mrb[0].mxu0
        %v2240 = vadd.f32 0.0, %v2239
        %v2241 = vpop.f32.mrb[0].mxu0
        %v2242 = vadd.f32 0.0, %v2241
        %2243 = vmatprep.mubr.bf16.mxu0 %v809
        %2244 = vmatmul.mubr.bf16.gmra.mrb[0].mxu0 %v808
        %v2245 = vpop.f32.mrb[0].mxu0
        %v2246 = vadd.f32 0.0, %v2245
        %v2247 = vpop.f32.mrb[0].mxu0
        %v2248 = vadd.f32 0.0, %v2247
        %v2249 = vpop.f32.mrb[0].mxu0
        %v2250 = vadd.f32 0.0, %v2249
        %v2251 = vpop.f32.mrb[0].mxu0
        %v2252 = vadd.f32 0.0, %v2251
        %2253 = vmatprep.mubr.bf16.mxu0 %v812
        %2254 = vmatmul.mubr.bf16.gmra.mrb[0].mxu0 %v811
        %v2255 = vpop.f32.mrb[0].mxu0
        %v2256 = vadd.f32 0.0, %v2255
        %v2257 = vpop.f32.mrb[0].mxu0
        %v2258 = vadd.f32 0.0, %v2257
        %v2259 = vpop.f32.mrb[0].mxu0
        %v2260 = vadd.f32 0.0, %v2259
        %v2261 = vpop.f32.mrb[0].mxu0
        %v2262 = vadd.f32 0.0, %v2261
        %2263 = vmatprep.mubr.bf16.mxu0 %v815
        %2264 = vmatmul.mubr.bf16.gmra.mrb[0].mxu0 %v814
        %v2265 = vpop.f32.mrb[0].mxu0
        %v2266 = vadd.f32 0.0, %v2265
        %v2267 = vpop.f32.mrb[0].mxu0
        %v2268 = vadd.f32 0.0, %v2267
        %v2269 = vpop.f32.mrb[0].mxu0
        %v2270 = vadd.f32 0.0, %v2269
        %v2271 = vpop.f32.mrb[0].mxu0
        %v2272 = vadd.f32 0.0, %v2271
        %2273 = vdwg.mxu0
        %2274 = vmatprep.subr.bf16.mxu0 %v1874
        %2275 = vmatpush1.bf16.msra.mxu0 %v1873
        %2276 = vmatprep.subr.bf16.mxu0 %v1883
        %2277 = vmatpush1.bf16.msra.mxu0 %v1882
        %2278 = vmatprep.subr.bf16.mxu0 %v1892
        %2279 = vmatpush1.bf16.msra.mxu0 %v1891
        %2280 = vmatprep.subr.bf16.mxu0 %v1901
        %2281 = vmatpush1.bf16.msra.mxu0 %v1900
        %2282 = vmatprep.subr.bf16.mxu0 %v1910
        %2283 = vmatpush1.bf16.msra.mxu0 %v1909
        %2284 = vmatprep.subr.bf16.mxu0 %v1919
        %2285 = vmatpush1.bf16.msra.mxu0 %v1918
        %2286 = vmatprep.subr.bf16.mxu0 %v1928
        %2287 = vmatpush1.bf16.msra.mxu0 %v1927
        %2288 = vmatprep.subr.bf16.mxu0 %v1937
        %2289 = vmatpush1.bf16.msra.mxu0 %v1936
        %2290 = vmatprep.subr.bf16.mxu0 0
        %2291 = vmatpush1.bf16.msra.mxu0 0
        %2292 = vmatprep.subr.bf16.mxu0 0
        %2293 = vmatpush1.bf16.msra.mxu0 0
        %2294 = vmatprep.subr.bf16.mxu0 0
        %2295 = vmatpush1.bf16.msra.mxu0 0
        %2296 = vmatprep.subr.bf16.mxu0 0
        %2297 = vmatpush1.bf16.msra.mxu0 0
        %2298 = vmatprep.subr.bf16.mxu0 0
        %2299 = vmatpush1.bf16.msra.mxu0 0
        %2300 = vmatprep.subr.bf16.mxu0 0
        %2301 = vmatpush1.bf16.msra.mxu0 0
        %2302 = vmatprep.subr.bf16.mxu0 0
        %2303 = vmatpush1.bf16.msra.mxu0 0
        %2304 = vmatprep.subr.bf16.mxu0 0
        %2305 = vmatpush1.bf16.msra.mxu0 0
        %2306 = vmatprep.mubr.bf16.mxu0 0
        %2307 = vmatmul.mubr.bf16.gmra.mrb[0].mxu0 %v795
        %v2308 = vpop.f32.mrb[0].mxu0
        %v2309 = vadd.f32 %v2196, %v2308
        %v2310 = vpop.f32.mrb[0].mxu0
        %v2311 = vadd.f32 %v2198, %v2310
        %v2312 = vpop.f32.mrb[0].mxu0
        %v2313 = vadd.f32 %v2200, %v2312
        %v2314 = vpop.f32.mrb[0].mxu0
        %v2315 = vadd.f32 %v2202, %v2314
        %2316 = vmatprep.mubr.bf16.mxu0 0
        %2317 = vmatmul.mubr.bf16.gmra.mrb[0].mxu0 %v798
        %v2318 = vpop.f32.mrb[0].mxu0
        %v2319 = vadd.f32 %v2206, %v2318
        %v2320 = vpop.f32.mrb[0].mxu0
        %v2321 = vadd.f32 %v2208, %v2320
        %v2322 = vpop.f32.mrb[0].mxu0
        %v2323 = vadd.f32 %v2210, %v2322
        %v2324 = vpop.f32.mrb[0].mxu0
        %v2325 = vadd.f32 %v2212, %v2324
        %2326 = vmatprep.mubr.bf16.mxu0 0
        %2327 = vmatmul.mubr.bf16.gmra.mrb[0].mxu0 %v801
        %v2328 = vpop.f32.mrb[0].mxu0
        %v2329 = vadd.f32 %v2216, %v2328
        %v2330 = vpop.f32.mrb[0].mxu0
        %v2331 = vadd.f32 %v2218, %v2330
        %v2332 = vpop.f32.mrb[0].mxu0
        %v2333 = vadd.f32 %v2220, %v2332
        %v2334 = vpop.f32.mrb[0].mxu0
        %v2335 = vadd.f32 %v2222, %v2334
        %2336 = vmatprep.mubr.bf16.mxu0 0
        %2337 = vmatmul.mubr.bf16.gmra.mrb[0].mxu0 %v804
        %v2338 = vpop.f32.mrb[0].mxu0
        %v2339 = vadd.f32 %v2226, %v2338
        %v2340 = vpop.f32.mrb[0].mxu0
        %v2341 = vadd.f32 %v2228, %v2340
        %v2342 = vpop.f32.mrb[0].mxu0
        %v2343 = vadd.f32 %v2230, %v2342
        %v2344 = vpop.f32.mrb[0].mxu0
        %v2345 = vadd.f32 %v2232, %v2344
        %2346 = vmatprep.mubr.bf16.mxu0 0
        %2347 = vmatmul.mubr.bf16.gmra.mrb[0].mxu0 %v807
        %v2348 = vpop.f32.mrb[0].mxu0
        %v2349 = vadd.f32 %v2236, %v2348
        %v2350 = vpop.f32.mrb[0].mxu0
        %v2351 = vadd.f32 %v2238, %v2350
        %v2352 = vpop.f32.mrb[0].mxu0
        %v2353 = vadd.f32 %v2240, %v2352
        %v2354 = vpop.f32.mrb[0].mxu0
        %v2355 = vadd.f32 %v2242, %v2354
        %2356 = vmatprep.mubr.bf16.mxu0 0
        %2357 = vmatmul.mubr.bf16.gmra.mrb[0].mxu0 %v810
        %v2358 = vpop.f32.mrb[0].mxu0
        %v2359 = vadd.f32 %v2246, %v2358
        %v2360 = vpop.f32.mrb[0].mxu0
        %v2361 = vadd.f32 %v2248, %v2360
        %v2362 = vpop.f32.mrb[0].mxu0
        %v2363 = vadd.f32 %v2250, %v2362
        %v2364 = vpop.f32.mrb[0].mxu0
        %v2365 = vadd.f32 %v2252, %v2364
        %2366 = vmatprep.mubr.bf16.mxu0 0
        %2367 = vmatmul.mubr.bf16.gmra.mrb[0].mxu0 %v813
        %v2368 = vpop.f32.mrb[0].mxu0
        %v2369 = vadd.f32 %v2256, %v2368
        %v2370 = vpop.f32.mrb[0].mxu0
        %v2371 = vadd.f32 %v2258, %v2370
        %v2372 = vpop.f32.mrb[0].mxu0
        %v2373 = vadd.f32 %v2260, %v2372
        %v2374 = vpop.f32.mrb[0].mxu0
        %v2375 = vadd.f32 %v2262, %v2374
        %2376 = vmatprep.mubr.bf16.mxu0 0
        %2377 = vmatmul.mubr.bf16.gmra.mrb[0].mxu0 %v816
        %v2378 = vpop.f32.mrb[0].mxu0
        %v2379 = vadd.f32 %v2266, %v2378
        %v2380 = vpop.f32.mrb[0].mxu0
        %v2381 = vadd.f32 %v2268, %v2380
        %v2382 = vpop.f32.mrb[0].mxu0
        %v2383 = vadd.f32 %v2270, %v2382
        %v2384 = vpop.f32.mrb[0].mxu0
        %v2385 = vadd.f32 %v2272, %v2384
        %2386 = vdwg.mxu0
        %2387 = vmatprep.subr.bf16.mxu0 %v1732
        %2388 = vmatpush1.bf16.msra.mxu0 %v1731
        %2389 = vmatprep.subr.bf16.mxu0 %v1741
        %2390 = vmatpush1.bf16.msra.mxu0 %v1740
        %2391 = vmatprep.subr.bf16.mxu0 %v1750
        %2392 = vmatpush1.bf16.msra.mxu0 %v1749
        %2393 = vmatprep.subr.bf16.mxu0 %v1759
        %2394 = vmatpush1.bf16.msra.mxu0 %v1758
        %2395 = vmatprep.subr.bf16.mxu0 %v1768
        %2396 = vmatpush1.bf16.msra.mxu0 %v1767
        %2397 = vmatprep.subr.bf16.mxu0 %v1777
        %2398 = vmatpush1.bf16.msra.mxu0 %v1776
        %2399 = vmatprep.subr.bf16.mxu0 %v1786
        %2400 = vmatpush1.bf16.msra.mxu0 %v1785
        %2401 = vmatprep.subr.bf16.mxu0 %v1795
        %2402 = vmatpush1.bf16.msra.mxu0 %v1794
        %2403 = vmatprep.subr.bf16.mxu0 %v1804
        %2404 = vmatpush1.bf16.msra.mxu0 %v1803
        %2405 = vmatprep.subr.bf16.mxu0 %v1813
        %2406 = vmatpush1.bf16.msra.mxu0 %v1812
        %2407 = vmatprep.subr.bf16.mxu0 %v1822
        %2408 = vmatpush1.bf16.msra.mxu0 %v1821
        %2409 = vmatprep.subr.bf16.mxu0 %v1831
        %2410 = vmatpush1.bf16.msra.mxu0 %v1830
        %2411 = vmatprep.subr.bf16.mxu0 %v1840
        %2412 = vmatpush1.bf16.msra.mxu0 %v1839
        %2413 = vmatprep.subr.bf16.mxu0 %v1849
        %2414 = vmatpush1.bf16.msra.mxu0 %v1848
        %2415 = vmatprep.subr.bf16.mxu0 %v1858
        %2416 = vmatpush1.bf16.msra.mxu0 %v1857
        %2417 = vmatprep.subr.bf16.mxu0 %v1867
        %2418 = vmatpush1.bf16.msra.mxu0 %v1866
        %2419 = vmatprep.mubr.bf16.mxu0 %v794
        %2420 = vmatmul.mubr.bf16.gmra.mrb[0].mxu0 %v793
        %v2421 = vpop.f32.mrb[0].mxu0
        %v2422 = vadd.f32 0.0, %v2421
        %v2423 = vpop.f32.mrb[0].mxu0
        %v2424 = vadd.f32 0.0, %v2423
        %v2425 = vpop.f32.mrb[0].mxu0
        %v2426 = vadd.f32 0.0, %v2425
        %v2427 = vpop.f32.mrb[0].mxu0
        %v2428 = vadd.f32 0.0, %v2427
        %2429 = vmatprep.mubr.bf16.mxu0 %v797
        %2430 = vmatmul.mubr.bf16.gmra.mrb[0].mxu0 %v796
        %v2431 = vpop.f32.mrb[0].mxu0
        %v2432 = vadd.f32 0.0, %v2431
        %v2433 = vpop.f32.mrb[0].mxu0
        %v2434 = vadd.f32 0.0, %v2433
        %v2435 = vpop.f32.mrb[0].mxu0
        %v2436 = vadd.f32 0.0, %v2435
        %v2437 = vpop.f32.mrb[0].mxu0
        %v2438 = vadd.f32 0.0, %v2437
        %2439 = vmatprep.mubr.bf16.mxu0 %v800
        %2440 = vmatmul.mubr.bf16.gmra.mrb[0].mxu0 %v799
        %v2441 = vpop.f32.mrb[0].mxu0
        %v2442 = vadd.f32 0.0, %v2441
        %v2443 = vpop.f32.mrb[0].mxu0
        %v2444 = vadd.f32 0.0, %v2443
        %v2445 = vpop.f32.mrb[0].mxu0
        %v2446 = vadd.f32 0.0, %v2445
        %v2447 = vpop.f32.mrb[0].mxu0
        %v2448 = vadd.f32 0.0, %v2447
        %2449 = vmatprep.mubr.bf16.mxu0 %v803
        %2450 = vmatmul.mubr.bf16.gmra.mrb[0].mxu0 %v802
        %v2451 = vpop.f32.mrb[0].mxu0
        %v2452 = vadd.f32 0.0, %v2451
        %v2453 = vpop.f32.mrb[0].mxu0
        %v2454 = vadd.f32 0.0, %v2453
        %v2455 = vpop.f32.mrb[0].mxu0
        %v2456 = vadd.f32 0.0, %v2455
        %v2457 = vpop.f32.mrb[0].mxu0
        %v2458 = vadd.f32 0.0, %v2457
        %2459 = vmatprep.mubr.bf16.mxu0 %v806
        %2460 = vmatmul.mubr.bf16.gmra.mrb[0].mxu0 %v805
        %v2461 = vpop.f32.mrb[0].mxu0
        %v2462 = vadd.f32 0.0, %v2461
        %v2463 = vpop.f32.mrb[0].mxu0
        %v2464 = vadd.f32 0.0, %v2463
        %v2465 = vpop.f32.mrb[0].mxu0
        %v2466 = vadd.f32 0.0, %v2465
        %v2467 = vpop.f32.mrb[0].mxu0
        %v2468 = vadd.f32 0.0, %v2467
        %2469 = vmatprep.mubr.bf16.mxu0 %v809
        %2470 = vmatmul.mubr.bf16.gmra.mrb[0].mxu0 %v808
        %v2471 = vpop.f32.mrb[0].mxu0
        %v2472 = vadd.f32 0.0, %v2471
        %v2473 = vpop.f32.mrb[0].mxu0
        %v2474 = vadd.f32 0.0, %v2473
        %v2475 = vpop.f32.mrb[0].mxu0
        %v2476 = vadd.f32 0.0, %v2475
        %v2477 = vpop.f32.mrb[0].mxu0
        %v2478 = vadd.f32 0.0, %v2477
        %2479 = vmatprep.mubr.bf16.mxu0 %v812
        %2480 = vmatmul.mubr.bf16.gmra.mrb[0].mxu0 %v811
        %v2481 = vpop.f32.mrb[0].mxu0
        %v2482 = vadd.f32 0.0, %v2481
        %v2483 = vpop.f32.mrb[0].mxu0
        %v2484 = vadd.f32 0.0, %v2483
        %v2485 = vpop.f32.mrb[0].mxu0
        %v2486 = vadd.f32 0.0, %v2485
        %v2487 = vpop.f32.mrb[0].mxu0
        %v2488 = vadd.f32 0.0, %v2487
        %2489 = vmatprep.mubr.bf16.mxu0 %v815
        %2490 = vmatmul.mubr.bf16.gmra.mrb[0].mxu0 %v814
        %v2491 = vpop.f32.mrb[0].mxu0
        %v2492 = vadd.f32 0.0, %v2491
        %v2493 = vpop.f32.mrb[0].mxu0
        %v2494 = vadd.f32 0.0, %v2493
        %v2495 = vpop.f32.mrb[0].mxu0
        %v2496 = vadd.f32 0.0, %v2495
        %v2497 = vpop.f32.mrb[0].mxu0
        %v2498 = vadd.f32 0.0, %v2497
        %2499 = vdwg.mxu0
        %2500 = vmatprep.subr.bf16.mxu0 %v1876
        %2501 = vmatpush1.bf16.msra.mxu0 %v1875
        %2502 = vmatprep.subr.bf16.mxu0 %v1885
        %2503 = vmatpush1.bf16.msra.mxu0 %v1884
        %2504 = vmatprep.subr.bf16.mxu0 %v1894
        %2505 = vmatpush1.bf16.msra.mxu0 %v1893
        %2506 = vmatprep.subr.bf16.mxu0 %v1903
        %2507 = vmatpush1.bf16.msra.mxu0 %v1902
        %2508 = vmatprep.subr.bf16.mxu0 %v1912
        %2509 = vmatpush1.bf16.msra.mxu0 %v1911
        %2510 = vmatprep.subr.bf16.mxu0 %v1921
        %2511 = vmatpush1.bf16.msra.mxu0 %v1920
        %2512 = vmatprep.subr.bf16.mxu0 %v1930
        %2513 = vmatpush1.bf16.msra.mxu0 %v1929
        %2514 = vmatprep.subr.bf16.mxu0 %v1939
        %2515 = vmatpush1.bf16.msra.mxu0 %v1938
        %2516 = vmatprep.subr.bf16.mxu0 0
        %2517 = vmatpush1.bf16.msra.mxu0 0
        %2518 = vmatprep.subr.bf16.mxu0 0
        %2519 = vmatpush1.bf16.msra.mxu0 0
        %2520 = vmatprep.subr.bf16.mxu0 0
        %2521 = vmatpush1.bf16.msra.mxu0 0
        %2522 = vmatprep.subr.bf16.mxu0 0
        %2523 = vmatpush1.bf16.msra.mxu0 0
        %2524 = vmatprep.subr.bf16.mxu0 0
        %2525 = vmatpush1.bf16.msra.mxu0 0
        %2526 = vmatprep.subr.bf16.mxu0 0
        %2527 = vmatpush1.bf16.msra.mxu0 0
        %2528 = vmatprep.subr.bf16.mxu0 0
        %2529 = vmatpush1.bf16.msra.mxu0 0
        %2530 = vmatprep.subr.bf16.mxu0 0
        %2531 = vmatpush1.bf16.msra.mxu0 0
        %2532 = vmatprep.mubr.bf16.mxu0 0
        %2533 = vmatmul.mubr.bf16.gmra.mrb[0].mxu0 %v795
        %v2534 = vpop.f32.mrb[0].mxu0
        %v2535 = vadd.f32 %v2422, %v2534
        %v2536 = vpop.f32.mrb[0].mxu0
        %v2537 = vadd.f32 %v2424, %v2536
        %v2538 = vpop.f32.mrb[0].mxu0
        %v2539 = vadd.f32 %v2426, %v2538
        %v2540 = vpop.f32.mrb[0].mxu0
        %v2541 = vadd.f32 %v2428, %v2540
        %2542 = vmatprep.mubr.bf16.mxu0 0
        %2543 = vmatmul.mubr.bf16.gmra.mrb[0].mxu0 %v798
        %v2544 = vpop.f32.mrb[0].mxu0
        %v2545 = vadd.f32 %v2432, %v2544
        %v2546 = vpop.f32.mrb[0].mxu0
        %v2547 = vadd.f32 %v2434, %v2546
        %v2548 = vpop.f32.mrb[0].mxu0
        %v2549 = vadd.f32 %v2436, %v2548
        %v2550 = vpop.f32.mrb[0].mxu0
        %v2551 = vadd.f32 %v2438, %v2550
        %2552 = vmatprep.mubr.bf16.mxu0 0
        %2553 = vmatmul.mubr.bf16.gmra.mrb[0].mxu0 %v801
        %v2554 = vpop.f32.mrb[0].mxu0
        %v2555 = vadd.f32 %v2442, %v2554
        %v2556 = vpop.f32.mrb[0].mxu0
        %v2557 = vadd.f32 %v2444, %v2556
        %v2558 = vpop.f32.mrb[0].mxu0
        %v2559 = vadd.f32 %v2446, %v2558
        %v2560 = vpop.f32.mrb[0].mxu0
        %v2561 = vadd.f32 %v2448, %v2560
        %2562 = vmatprep.mubr.bf16.mxu0 0
        %2563 = vmatmul.mubr.bf16.gmra.mrb[0].mxu0 %v804
        %v2564 = vpop.f32.mrb[0].mxu0
        %v2565 = vadd.f32 %v2452, %v2564
        %v2566 = vpop.f32.mrb[0].mxu0
        %v2567 = vadd.f32 %v2454, %v2566
        %v2568 = vpop.f32.mrb[0].mxu0
        %v2569 = vadd.f32 %v2456, %v2568
        %v2570 = vpop.f32.mrb[0].mxu0
        %v2571 = vadd.f32 %v2458, %v2570
        %2572 = vmatprep.mubr.bf16.mxu0 0
        %2573 = vmatmul.mubr.bf16.gmra.mrb[0].mxu0 %v807
        %v2574 = vpop.f32.mrb[0].mxu0
        %v2575 = vadd.f32 %v2462, %v2574
        %v2576 = vpop.f32.mrb[0].mxu0
        %v2577 = vadd.f32 %v2464, %v2576
        %v2578 = vpop.f32.mrb[0].mxu0
        %v2579 = vadd.f32 %v2466, %v2578
        %v2580 = vpop.f32.mrb[0].mxu0
        %v2581 = vadd.f32 %v2468, %v2580
        %2582 = vmatprep.mubr.bf16.mxu0 0
        %2583 = vmatmul.mubr.bf16.gmra.mrb[0].mxu0 %v810
        %v2584 = vpop.f32.mrb[0].mxu0
        %v2585 = vadd.f32 %v2472, %v2584
        %v2586 = vpop.f32.mrb[0].mxu0
        %v2587 = vadd.f32 %v2474, %v2586
        %v2588 = vpop.f32.mrb[0].mxu0
        %v2589 = vadd.f32 %v2476, %v2588
        %v2590 = vpop.f32.mrb[0].mxu0
        %v2591 = vadd.f32 %v2478, %v2590
        %2592 = vmatprep.mubr.bf16.mxu0 0
        %2593 = vmatmul.mubr.bf16.gmra.mrb[0].mxu0 %v813
        %v2594 = vpop.f32.mrb[0].mxu0
        %v2595 = vadd.f32 %v2482, %v2594
        %v2596 = vpop.f32.mrb[0].mxu0
        %v2597 = vadd.f32 %v2484, %v2596
        %v2598 = vpop.f32.mrb[0].mxu0
        %v2599 = vadd.f32 %v2486, %v2598
        %v2600 = vpop.f32.mrb[0].mxu0
        %v2601 = vadd.f32 %v2488, %v2600
        %2602 = vmatprep.mubr.bf16.mxu0 0
        %2603 = vmatmul.mubr.bf16.gmra.mrb[0].mxu0 %v816
        %v2604 = vpop.f32.mrb[0].mxu0
        %v2605 = vadd.f32 %v2492, %v2604
        %v2606 = vpop.f32.mrb[0].mxu0
        %v2607 = vadd.f32 %v2494, %v2606
        %v2608 = vpop.f32.mrb[0].mxu0
        %v2609 = vadd.f32 %v2496, %v2608
        %v2610 = vpop.f32.mrb[0].mxu0
        %v2611 = vadd.f32 %v2498, %v2610
        %2612 = vdwg.mxu0
        %2613 = vmatprep.subr.bf16.mxu0 %v1734
        %2614 = vmatpush1.bf16.msra.mxu0 %v1733
        %2615 = vmatprep.subr.bf16.mxu0 %v1743
        %2616 = vmatpush1.bf16.msra.mxu0 %v1742
        %2617 = vmatprep.subr.bf16.mxu0 %v1752
        %2618 = vmatpush1.bf16.msra.mxu0 %v1751
        %2619 = vmatprep.subr.bf16.mxu0 %v1761
        %2620 = vmatpush1.bf16.msra.mxu0 %v1760
        %2621 = vmatprep.subr.bf16.mxu0 %v1770
        %2622 = vmatpush1.bf16.msra.mxu0 %v1769
        %2623 = vmatprep.subr.bf16.mxu0 %v1779
        %2624 = vmatpush1.bf16.msra.mxu0 %v1778
        %2625 = vmatprep.subr.bf16.mxu0 %v1788
        %2626 = vmatpush1.bf16.msra.mxu0 %v1787
        %2627 = vmatprep.subr.bf16.mxu0 %v1797
        %2628 = vmatpush1.bf16.msra.mxu0 %v1796
        %2629 = vmatprep.subr.bf16.mxu0 %v1806
        %2630 = vmatpush1.bf16.msra.mxu0 %v1805
        %2631 = vmatprep.subr.bf16.mxu0 %v1815
        %2632 = vmatpush1.bf16.msra.mxu0 %v1814
        %2633 = vmatprep.subr.bf16.mxu0 %v1824
        %2634 = vmatpush1.bf16.msra.mxu0 %v1823
        %2635 = vmatprep.subr.bf16.mxu0 %v1833
        %2636 = vmatpush1.bf16.msra.mxu0 %v1832
        %2637 = vmatprep.subr.bf16.mxu0 %v1842
        %2638 = vmatpush1.bf16.msra.mxu0 %v1841
        %2639 = vmatprep.subr.bf16.mxu0 %v1851
        %2640 = vmatpush1.bf16.msra.mxu0 %v1850
        %2641 = vmatprep.subr.bf16.mxu0 %v1860
        %2642 = vmatpush1.bf16.msra.mxu0 %v1859
        %2643 = vmatprep.subr.bf16.mxu0 %v1869
        %2644 = vmatpush1.bf16.msra.mxu0 %v1868
        %2645 = vmatprep.mubr.bf16.mxu0 %v794
        %2646 = vmatmul.mubr.bf16.gmra.mrb[0].mxu0 %v793
        %v2647 = vpop.f32.mrb[0].mxu0
        %v2648 = vadd.f32 0.0, %v2647
        %v2649 = vpop.f32.mrb[0].mxu0
        %v2650 = vadd.f32 0.0, %v2649
        %v2651 = vpop.f32.mrb[0].mxu0
        %v2652 = vadd.f32 0.0, %v2651
        %v2653 = vpop.f32.mrb[0].mxu0
        %v2654 = vadd.f32 0.0, %v2653
        %2655 = vmatprep.mubr.bf16.mxu0 %v797
        %2656 = vmatmul.mubr.bf16.gmra.mrb[0].mxu0 %v796
        %v2657 = vpop.f32.mrb[0].mxu0
        %v2658 = vadd.f32 0.0, %v2657
        %v2659 = vpop.f32.mrb[0].mxu0
        %v2660 = vadd.f32 0.0, %v2659
        %v2661 = vpop.f32.mrb[0].mxu0
        %v2662 = vadd.f32 0.0, %v2661
        %v2663 = vpop.f32.mrb[0].mxu0
        %v2664 = vadd.f32 0.0, %v2663
        %2665 = vmatprep.mubr.bf16.mxu0 %v800
        %2666 = vmatmul.mubr.bf16.gmra.mrb[0].mxu0 %v799
        %v2667 = vpop.f32.mrb[0].mxu0
        %v2668 = vadd.f32 0.0, %v2667
        %v2669 = vpop.f32.mrb[0].mxu0
        %v2670 = vadd.f32 0.0, %v2669
        %v2671 = vpop.f32.mrb[0].mxu0
        %v2672 = vadd.f32 0.0, %v2671
        %v2673 = vpop.f32.mrb[0].mxu0
        %v2674 = vadd.f32 0.0, %v2673
        %2675 = vmatprep.mubr.bf16.mxu0 %v803
        %2676 = vmatmul.mubr.bf16.gmra.mrb[0].mxu0 %v802
        %v2677 = vpop.f32.mrb[0].mxu0
        %v2678 = vadd.f32 0.0, %v2677
        %v2679 = vpop.f32.mrb[0].mxu0
        %v2680 = vadd.f32 0.0, %v2679
        %v2681 = vpop.f32.mrb[0].mxu0
        %v2682 = vadd.f32 0.0, %v2681
        %v2683 = vpop.f32.mrb[0].mxu0
        %v2684 = vadd.f32 0.0, %v2683
        %2685 = vmatprep.mubr.bf16.mxu0 %v806
        %2686 = vmatmul.mubr.bf16.gmra.mrb[0].mxu0 %v805
        %v2687 = vpop.f32.mrb[0].mxu0
        %v2688 = vadd.f32 0.0, %v2687
        %v2689 = vpop.f32.mrb[0].mxu0
        %v2690 = vadd.f32 0.0, %v2689
        %v2691 = vpop.f32.mrb[0].mxu0
        %v2692 = vadd.f32 0.0, %v2691
        %v2693 = vpop.f32.mrb[0].mxu0
        %v2694 = vadd.f32 0.0, %v2693
        %2695 = vmatprep.mubr.bf16.mxu0 %v809
        %2696 = vmatmul.mubr.bf16.gmra.mrb[0].mxu0 %v808
        %v2697 = vpop.f32.mrb[0].mxu0
        %v2698 = vadd.f32 0.0, %v2697
        %v2699 = vpop.f32.mrb[0].mxu0
        %v2700 = vadd.f32 0.0, %v2699
        %v2701 = vpop.f32.mrb[0].mxu0
        %v2702 = vadd.f32 0.0, %v2701
        %v2703 = vpop.f32.mrb[0].mxu0
        %v2704 = vadd.f32 0.0, %v2703
        %2705 = vmatprep.mubr.bf16.mxu0 %v812
        %2706 = vmatmul.mubr.bf16.gmra.mrb[0].mxu0 %v811
        %v2707 = vpop.f32.mrb[0].mxu0
        %v2708 = vadd.f32 0.0, %v2707
        %v2709 = vpop.f32.mrb[0].mxu0
        %v2710 = vadd.f32 0.0, %v2709
        %v2711 = vpop.f32.mrb[0].mxu0
        %v2712 = vadd.f32 0.0, %v2711
        %v2713 = vpop.f32.mrb[0].mxu0
        %v2714 = vadd.f32 0.0, %v2713
        %2715 = vmatprep.mubr.bf16.mxu0 %v815
        %2716 = vmatmul.mubr.bf16.gmra.mrb[0].mxu0 %v814
        %v2717 = vpop.f32.mrb[0].mxu0
        %v2718 = vadd.f32 0.0, %v2717
        %v2719 = vpop.f32.mrb[0].mxu0
        %v2720 = vadd.f32 0.0, %v2719
        %v2721 = vpop.f32.mrb[0].mxu0
        %v2722 = vadd.f32 0.0, %v2721
        %v2723 = vpop.f32.mrb[0].mxu0
        %v2724 = vadd.f32 0.0, %v2723
        %2725 = vdwg.mxu0
        %2726 = vmatprep.subr.bf16.mxu0 %v1878
        %2727 = vmatpush1.bf16.msra.mxu0 %v1877
        %2728 = vmatprep.subr.bf16.mxu0 %v1887
        %2729 = vmatpush1.bf16.msra.mxu0 %v1886
        %2730 = vmatprep.subr.bf16.mxu0 %v1896
        %2731 = vmatpush1.bf16.msra.mxu0 %v1895
        %2732 = vmatprep.subr.bf16.mxu0 %v1905
        %2733 = vmatpush1.bf16.msra.mxu0 %v1904
        %2734 = vmatprep.subr.bf16.mxu0 %v1914
        %2735 = vmatpush1.bf16.msra.mxu0 %v1913
        %2736 = vmatprep.subr.bf16.mxu0 %v1923
        %2737 = vmatpush1.bf16.msra.mxu0 %v1922
        %2738 = vmatprep.subr.bf16.mxu0 %v1932
        %2739 = vmatpush1.bf16.msra.mxu0 %v1931
        %2740 = vmatprep.subr.bf16.mxu0 %v1941
        %2741 = vmatpush1.bf16.msra.mxu0 %v1940
        %2742 = vmatprep.subr.bf16.mxu0 0
        %2743 = vmatpush1.bf16.msra.mxu0 0
        %2744 = vmatprep.subr.bf16.mxu0 0
        %2745 = vmatpush1.bf16.msra.mxu0 0
        %2746 = vmatprep.subr.bf16.mxu0 0
        %2747 = vmatpush1.bf16.msra.mxu0 0
        %2748 = vmatprep.subr.bf16.mxu0 0
        %2749 = vmatpush1.bf16.msra.mxu0 0
        %2750 = vmatprep.subr.bf16.mxu0 0
        %2751 = vmatpush1.bf16.msra.mxu0 0
        %2752 = vmatprep.subr.bf16.mxu0 0
        %2753 = vmatpush1.bf16.msra.mxu0 0
        %2754 = vmatprep.subr.bf16.mxu0 0
        %2755 = vmatpush1.bf16.msra.mxu0 0
        %2756 = vmatprep.subr.bf16.mxu0 0
        %2757 = vmatpush1.bf16.msra.mxu0 0
        %2758 = vmatprep.mubr.bf16.mxu0 0
        %2759 = vmatmul.mubr.bf16.gmra.mrb[0].mxu0 %v795
        %v2760 = vpop.f32.mrb[0].mxu0
        %v2761 = vadd.f32 %v2648, %v2760
        %v2762 = vpop.f32.mrb[0].mxu0
        %v2763 = vadd.f32 %v2650, %v2762
        %v2764 = vpop.f32.mrb[0].mxu0
        %v2765 = vadd.f32 %v2652, %v2764
        %v2766 = vpop.f32.mrb[0].mxu0
        %v2767 = vadd.f32 %v2654, %v2766
        %2768 = vmatprep.mubr.bf16.mxu0 0
        %2769 = vmatmul.mubr.bf16.gmra.mrb[0].mxu0 %v798
        %v2770 = vpop.f32.mrb[0].mxu0
        %v2771 = vadd.f32 %v2658, %v2770
        %v2772 = vpop.f32.mrb[0].mxu0
        %v2773 = vadd.f32 %v2660, %v2772
        %v2774 = vpop.f32.mrb[0].mxu0
        %v2775 = vadd.f32 %v2662, %v2774
        %v2776 = vpop.f32.mrb[0].mxu0
        %v2777 = vadd.f32 %v2664, %v2776
        %2778 = vmatprep.mubr.bf16.mxu0 0
        %2779 = vmatmul.mubr.bf16.gmra.mrb[0].mxu0 %v801
        %v2780 = vpop.f32.mrb[0].mxu0
        %v2781 = vadd.f32 %v2668, %v2780
        %v2782 = vpop.f32.mrb[0].mxu0
        %v2783 = vadd.f32 %v2670, %v2782
        %v2784 = vpop.f32.mrb[0].mxu0
        %v2785 = vadd.f32 %v2672, %v2784
        %v2786 = vpop.f32.mrb[0].mxu0
        %v2787 = vadd.f32 %v2674, %v2786
        %2788 = vmatprep.mubr.bf16.mxu0 0
        %2789 = vmatmul.mubr.bf16.gmra.mrb[0].mxu0 %v804
        %v2790 = vpop.f32.mrb[0].mxu0
        %v2791 = vadd.f32 %v2678, %v2790
        %v2792 = vpop.f32.mrb[0].mxu0
        %v2793 = vadd.f32 %v2680, %v2792
        %v2794 = vpop.f32.mrb[0].mxu0
        %v2795 = vadd.f32 %v2682, %v2794
        %v2796 = vpop.f32.mrb[0].mxu0
        %v2797 = vadd.f32 %v2684, %v2796
        %2798 = vmatprep.mubr.bf16.mxu0 0
        %2799 = vmatmul.mubr.bf16.gmra.mrb[0].mxu0 %v807
        %v2800 = vpop.f32.mrb[0].mxu0
        %v2801 = vadd.f32 %v2688, %v2800
        %v2802 = vpop.f32.mrb[0].mxu0
        %v2803 = vadd.f32 %v2690, %v2802
        %v2804 = vpop.f32.mrb[0].mxu0
        %v2805 = vadd.f32 %v2692, %v2804
        %v2806 = vpop.f32.mrb[0].mxu0
        %v2807 = vadd.f32 %v2694, %v2806
        %2808 = vmatprep.mubr.bf16.mxu0 0
        %2809 = vmatmul.mubr.bf16.gmra.mrb[0].mxu0 %v810
        %v2810 = vpop.f32.mrb[0].mxu0
        %v2811 = vadd.f32 %v2698, %v2810
        %v2812 = vpop.f32.mrb[0].mxu0
        %v2813 = vadd.f32 %v2700, %v2812
        %v2814 = vpop.f32.mrb[0].mxu0
        %v2815 = vadd.f32 %v2702, %v2814
        %v2816 = vpop.f32.mrb[0].mxu0
        %v2817 = vadd.f32 %v2704, %v2816
        %2818 = vmatprep.mubr.bf16.mxu0 0
        %2819 = vmatmul.mubr.bf16.gmra.mrb[0].mxu0 %v813
        %v2820 = vpop.f32.mrb[0].mxu0
        %v2821 = vadd.f32 %v2708, %v2820
        %v2822 = vpop.f32.mrb[0].mxu0
        %v2823 = vadd.f32 %v2710, %v2822
        %v2824 = vpop.f32.mrb[0].mxu0
        %v2825 = vadd.f32 %v2712, %v2824
        %v2826 = vpop.f32.mrb[0].mxu0
        %v2827 = vadd.f32 %v2714, %v2826
        %2828 = vmatprep.mubr.bf16.mxu0 0
        %2829 = vmatmul.mubr.bf16.gmra.mrb[0].mxu0 %v816
        %v2830 = vpop.f32.mrb[0].mxu0
        %v2831 = vadd.f32 %v2718, %v2830
        %v2832 = vpop.f32.mrb[0].mxu0
        %v2833 = vadd.f32 %v2720, %v2832
        %v2834 = vpop.f32.mrb[0].mxu0
        %v2835 = vadd.f32 %v2722, %v2834
        %v2836 = vpop.f32.mrb[0].mxu0
        %v2837 = vadd.f32 %v2724, %v2836
        %2838 = vdwg.mxu0
        %2839 = vmatprep.subr.bf16.mxu0 %v1736
        %2840 = vmatpush1.bf16.msra.mxu0 %v1735
        %2841 = vmatprep.subr.bf16.mxu0 %v1745
        %2842 = vmatpush1.bf16.msra.mxu0 %v1744
        %2843 = vmatprep.subr.bf16.mxu0 %v1754
        %2844 = vmatpush1.bf16.msra.mxu0 %v1753
        %2845 = vmatprep.subr.bf16.mxu0 %v1763
        %2846 = vmatpush1.bf16.msra.mxu0 %v1762
        %2847 = vmatprep.subr.bf16.mxu0 %v1772
        %2848 = vmatpush1.bf16.msra.mxu0 %v1771
        %2849 = vmatprep.subr.bf16.mxu0 %v1781
        %2850 = vmatpush1.bf16.msra.mxu0 %v1780
        %2851 = vmatprep.subr.bf16.mxu0 %v1790
        %2852 = vmatpush1.bf16.msra.mxu0 %v1789
        %2853 = vmatprep.subr.bf16.mxu0 %v1799
        %2854 = vmatpush1.bf16.msra.mxu0 %v1798
        %2855 = vmatprep.subr.bf16.mxu0 %v1808
        %2856 = vmatpush1.bf16.msra.mxu0 %v1807
        %2857 = vmatprep.subr.bf16.mxu0 %v1817
        %2858 = vmatpush1.bf16.msra.mxu0 %v1816
        %2859 = vmatprep.subr.bf16.mxu0 %v1826
        %2860 = vmatpush1.bf16.msra.mxu0 %v1825
        %2861 = vmatprep.subr.bf16.mxu0 %v1835
        %2862 = vmatpush1.bf16.msra.mxu0 %v1834
        %2863 = vmatprep.subr.bf16.mxu0 %v1844
        %2864 = vmatpush1.bf16.msra.mxu0 %v1843
        %2865 = vmatprep.subr.bf16.mxu0 %v1853
        %2866 = vmatpush1.bf16.msra.mxu0 %v1852
        %2867 = vmatprep.subr.bf16.mxu0 %v1862
        %2868 = vmatpush1.bf16.msra.mxu0 %v1861
        %2869 = vmatprep.subr.bf16.mxu0 %v1871
        %2870 = vmatpush1.bf16.msra.mxu0 %v1870
        %2871 = vmatprep.mubr.bf16.mxu0 %v794
        %2872 = vmatmul.mubr.bf16.gmra.mrb[0].mxu0 %v793
        %v2873 = vpop.f32.mrb[0].mxu0
        %v2874 = vadd.f32 0.0, %v2873
        %v2875 = vpop.f32.mrb[0].mxu0
        %v2876 = vadd.f32 0.0, %v2875
        %v2877 = vpop.f32.mrb[0].mxu0
        %v2878 = vadd.f32 0.0, %v2877
        %v2879 = vpop.f32.mrb[0].mxu0
        %v2880 = vadd.f32 0.0, %v2879
        %2881 = vmatprep.mubr.bf16.mxu0 %v797
        %2882 = vmatmul.mubr.bf16.gmra.mrb[0].mxu0 %v796
        %v2883 = vpop.f32.mrb[0].mxu0
        %v2884 = vadd.f32 0.0, %v2883
        %v2885 = vpop.f32.mrb[0].mxu0
        %v2886 = vadd.f32 0.0, %v2885
        %v2887 = vpop.f32.mrb[0].mxu0
        %v2888 = vadd.f32 0.0, %v2887
        %v2889 = vpop.f32.mrb[0].mxu0
        %v2890 = vadd.f32 0.0, %v2889
        %2891 = vmatprep.mubr.bf16.mxu0 %v800
        %2892 = vmatmul.mubr.bf16.gmra.mrb[0].mxu0 %v799
        %v2893 = vpop.f32.mrb[0].mxu0
        %v2894 = vadd.f32 0.0, %v2893
        %v2895 = vpop.f32.mrb[0].mxu0
        %v2896 = vadd.f32 0.0, %v2895
        %v2897 = vpop.f32.mrb[0].mxu0
        %v2898 = vadd.f32 0.0, %v2897
        %v2899 = vpop.f32.mrb[0].mxu0
        %v2900 = vadd.f32 0.0, %v2899
        %2901 = vmatprep.mubr.bf16.mxu0 %v803
        %2902 = vmatmul.mubr.bf16.gmra.mrb[0].mxu0 %v802
        %v2903 = vpop.f32.mrb[0].mxu0
        %v2904 = vadd.f32 0.0, %v2903
        %v2905 = vpop.f32.mrb[0].mxu0
        %v2906 = vadd.f32 0.0, %v2905
        %v2907 = vpop.f32.mrb[0].mxu0
        %v2908 = vadd.f32 0.0, %v2907
        %v2909 = vpop.f32.mrb[0].mxu0
        %v2910 = vadd.f32 0.0, %v2909
        %2911 = vmatprep.mubr.bf16.mxu0 %v806
        %2912 = vmatmul.mubr.bf16.gmra.mrb[0].mxu0 %v805
        %v2913 = vpop.f32.mrb[0].mxu0
        %v2914 = vadd.f32 0.0, %v2913
        %v2915 = vpop.f32.mrb[0].mxu0
        %v2916 = vadd.f32 0.0, %v2915
        %v2917 = vpop.f32.mrb[0].mxu0
        %v2918 = vadd.f32 0.0, %v2917
        %v2919 = vpop.f32.mrb[0].mxu0
        %v2920 = vadd.f32 0.0, %v2919
        %2921 = vmatprep.mubr.bf16.mxu0 %v809
        %2922 = vmatmul.mubr.bf16.gmra.mrb[0].mxu0 %v808
        %v2923 = vpop.f32.mrb[0].mxu0
        %v2924 = vadd.f32 0.0, %v2923
        %v2925 = vpop.f32.mrb[0].mxu0
        %v2926 = vadd.f32 0.0, %v2925
        %v2927 = vpop.f32.mrb[0].mxu0
        %v2928 = vadd.f32 0.0, %v2927
        %v2929 = vpop.f32.mrb[0].mxu0
        %v2930 = vadd.f32 0.0, %v2929
        %2931 = vmatprep.mubr.bf16.mxu0 %v812
        %2932 = vmatmul.mubr.bf16.gmra.mrb[0].mxu0 %v811
        %v2933 = vpop.f32.mrb[0].mxu0
        %v2934 = vadd.f32 0.0, %v2933
        %v2935 = vpop.f32.mrb[0].mxu0
        %v2936 = vadd.f32 0.0, %v2935
        %v2937 = vpop.f32.mrb[0].mxu0
        %v2938 = vadd.f32 0.0, %v2937
        %v2939 = vpop.f32.mrb[0].mxu0
        %v2940 = vadd.f32 0.0, %v2939
        %2941 = vmatprep.mubr.bf16.mxu0 %v815
        %2942 = vmatmul.mubr.bf16.gmra.mrb[0].mxu0 %v814
        %v2943 = vpop.f32.mrb[0].mxu0
        %v2944 = vadd.f32 0.0, %v2943
        %v2945 = vpop.f32.mrb[0].mxu0
        %v2946 = vadd.f32 0.0, %v2945
        %v2947 = vpop.f32.mrb[0].mxu0
        %v2948 = vadd.f32 0.0, %v2947
        %v2949 = vpop.f32.mrb[0].mxu0
        %v2950 = vadd.f32 0.0, %v2949
        %2951 = vdwg.mxu0
        %2952 = vmatprep.subr.bf16.mxu0 %v1880
        %2953 = vmatpush1.bf16.msra.mxu0 %v1879
        %2954 = vmatprep.subr.bf16.mxu0 %v1889
        %2955 = vmatpush1.bf16.msra.mxu0 %v1888
        %2956 = vmatprep.subr.bf16.mxu0 %v1898
        %2957 = vmatpush1.bf16.msra.mxu0 %v1897
        %2958 = vmatprep.subr.bf16.mxu0 %v1907
        %2959 = vmatpush1.bf16.msra.mxu0 %v1906
        %2960 = vmatprep.subr.bf16.mxu0 %v1916
        %2961 = vmatpush1.bf16.msra.mxu0 %v1915
        %2962 = vmatprep.subr.bf16.mxu0 %v1925
        %2963 = vmatpush1.bf16.msra.mxu0 %v1924
        %2964 = vmatprep.subr.bf16.mxu0 %v1934
        %2965 = vmatpush1.bf16.msra.mxu0 %v1933
        %2966 = vmatprep.subr.bf16.mxu0 %v1943
        %2967 = vmatpush1.bf16.msra.mxu0 %v1942
        %2968 = vmatprep.subr.bf16.mxu0 0
        %2969 = vmatpush1.bf16.msra.mxu0 0
        %2970 = vmatprep.subr.bf16.mxu0 0
        %2971 = vmatpush1.bf16.msra.mxu0 0
        %2972 = vmatprep.subr.bf16.mxu0 0
        %2973 = vmatpush1.bf16.msra.mxu0 0
        %2974 = vmatprep.subr.bf16.mxu0 0
        %2975 = vmatpush1.bf16.msra.mxu0 0
        %2976 = vmatprep.subr.bf16.mxu0 0
        %2977 = vmatpush1.bf16.msra.mxu0 0
        %2978 = vmatprep.subr.bf16.mxu0 0
        %2979 = vmatpush1.bf16.msra.mxu0 0
        %2980 = vmatprep.subr.bf16.mxu0 0
        %2981 = vmatpush1.bf16.msra.mxu0 0
        %2982 = vmatprep.subr.bf16.mxu0 0
        %2983 = vmatpush1.bf16.msra.mxu0 0
        %2984 = vmatprep.mubr.bf16.mxu0 0
        %2985 = vmatmul.mubr.bf16.gmra.mrb[0].mxu0 %v795
        %v2986 = vpop.f32.mrb[0].mxu0
        %v2987 = vadd.f32 %v2874, %v2986
        %v2988 = vpop.f32.mrb[0].mxu0
        %v2989 = vadd.f32 %v2876, %v2988
        %v2990 = vpop.f32.mrb[0].mxu0
        %v2991 = vadd.f32 %v2878, %v2990
        %v2992 = vpop.f32.mrb[0].mxu0
        %v2993 = vadd.f32 %v2880, %v2992
        %2994 = vmatprep.mubr.bf16.mxu0 0
        %2995 = vmatmul.mubr.bf16.gmra.mrb[0].mxu0 %v798
        %v2996 = vpop.f32.mrb[0].mxu0
        %v2997 = vadd.f32 %v2884, %v2996
        %v2998 = vpop.f32.mrb[0].mxu0
        %v2999 = vadd.f32 %v2886, %v2998
        %v3000 = vpop.f32.mrb[0].mxu0
        %v3001 = vadd.f32 %v2888, %v3000
        %v3002 = vpop.f32.mrb[0].mxu0
        %v3003 = vadd.f32 %v2890, %v3002
        %3004 = vmatprep.mubr.bf16.mxu0 0
        %3005 = vmatmul.mubr.bf16.gmra.mrb[0].mxu0 %v801
        %v3006 = vpop.f32.mrb[0].mxu0
        %v3007 = vadd.f32 %v2894, %v3006
        %v3008 = vpop.f32.mrb[0].mxu0
        %v3009 = vadd.f32 %v2896, %v3008
        %v3010 = vpop.f32.mrb[0].mxu0
        %v3011 = vadd.f32 %v2898, %v3010
        %v3012 = vpop.f32.mrb[0].mxu0
        %v3013 = vadd.f32 %v2900, %v3012
        %3014 = vmatprep.mubr.bf16.mxu0 0
        %3015 = vmatmul.mubr.bf16.gmra.mrb[0].mxu0 %v804
        %v3016 = vpop.f32.mrb[0].mxu0
        %v3017 = vadd.f32 %v2904, %v3016
        %v3018 = vpop.f32.mrb[0].mxu0
        %v3019 = vadd.f32 %v2906, %v3018
        %v3020 = vpop.f32.mrb[0].mxu0
        %v3021 = vadd.f32 %v2908, %v3020
        %v3022 = vpop.f32.mrb[0].mxu0
        %v3023 = vadd.f32 %v2910, %v3022
        %3024 = vmatprep.mubr.bf16.mxu0 0
        %3025 = vmatmul.mubr.bf16.gmra.mrb[0].mxu0 %v807
        %v3026 = vpop.f32.mrb[0].mxu0
        %v3027 = vadd.f32 %v2914, %v3026
        %v3028 = vpop.f32.mrb[0].mxu0
        %v3029 = vadd.f32 %v2916, %v3028
        %v3030 = vpop.f32.mrb[0].mxu0
        %v3031 = vadd.f32 %v2918, %v3030
        %v3032 = vpop.f32.mrb[0].mxu0
        %v3033 = vadd.f32 %v2920, %v3032
        %3034 = vmatprep.mubr.bf16.mxu0 0
        %3035 = vmatmul.mubr.bf16.gmra.mrb[0].mxu0 %v810
        %v3036 = vpop.f32.mrb[0].mxu0
        %v3037 = vadd.f32 %v2924, %v3036
        %v3038 = vpop.f32.mrb[0].mxu0
        %v3039 = vadd.f32 %v2926, %v3038
        %v3040 = vpop.f32.mrb[0].mxu0
        %v3041 = vadd.f32 %v2928, %v3040
        %v3042 = vpop.f32.mrb[0].mxu0
        %v3043 = vadd.f32 %v2930, %v3042
        %3044 = vmatprep.mubr.bf16.mxu0 0
        %3045 = vmatmul.mubr.bf16.gmra.mrb[0].mxu0 %v813
        %v3046 = vpop.f32.mrb[0].mxu0
        %v3047 = vadd.f32 %v2934, %v3046
        %v3048 = vpop.f32.mrb[0].mxu0
        %v3049 = vadd.f32 %v2936, %v3048
        %v3050 = vpop.f32.mrb[0].mxu0
        %v3051 = vadd.f32 %v2938, %v3050
        %v3052 = vpop.f32.mrb[0].mxu0
        %v3053 = vadd.f32 %v2940, %v3052
        %3054 = vmatprep.mubr.bf16.mxu0 0
        %3055 = vmatmul.mubr.bf16.gmra.mrb[0].mxu0 %v816
        %v3056 = vpop.f32.mrb[0].mxu0
        %v3057 = vadd.f32 %v2944, %v3056
        %v3058 = vpop.f32.mrb[0].mxu0
        %v3059 = vadd.f32 %v2946, %v3058
        %v3060 = vpop.f32.mrb[0].mxu0
        %v3061 = vadd.f32 %v2948, %v3060
        %v3062 = vpop.f32.mrb[0].mxu0
        %v3063 = vadd.f32 %v2950, %v3062
        %3064 = vdwg.mxu0
        %3065 = vmatprep.subr.bf16.mxu0 0
        %3066 = vmatpush1.bf16.msra.mxu0 %v1737
        %3067 = vmatprep.subr.bf16.mxu0 0
        %3068 = vmatpush1.bf16.msra.mxu0 %v1746
        %3069 = vmatprep.subr.bf16.mxu0 0
        %3070 = vmatpush1.bf16.msra.mxu0 %v1755
        %3071 = vmatprep.subr.bf16.mxu0 0
        %3072 = vmatpush1.bf16.msra.mxu0 %v1764
        %3073 = vmatprep.subr.bf16.mxu0 0
        %3074 = vmatpush1.bf16.msra.mxu0 %v1773
        %3075 = vmatprep.subr.bf16.mxu0 0
        %3076 = vmatpush1.bf16.msra.mxu0 %v1782
        %3077 = vmatprep.subr.bf16.mxu0 0
        %3078 = vmatpush1.bf16.msra.mxu0 %v1791
        %3079 = vmatprep.subr.bf16.mxu0 0
        %3080 = vmatpush1.bf16.msra.mxu0 %v1800
        %3081 = vmatprep.subr.bf16.mxu0 0
        %3082 = vmatpush1.bf16.msra.mxu0 %v1809
        %3083 = vmatprep.subr.bf16.mxu0 0
        %3084 = vmatpush1.bf16.msra.mxu0 %v1818
        %3085 = vmatprep.subr.bf16.mxu0 0
        %3086 = vmatpush1.bf16.msra.mxu0 %v1827
        %3087 = vmatprep.subr.bf16.mxu0 0
        %3088 = vmatpush1.bf16.msra.mxu0 %v1836
        %3089 = vmatprep.subr.bf16.mxu0 0
        %3090 = vmatpush1.bf16.msra.mxu0 %v1845
        %3091 = vmatprep.subr.bf16.mxu0 0
        %3092 = vmatpush1.bf16.msra.mxu0 %v1854
        %3093 = vmatprep.subr.bf16.mxu0 0
        %3094 = vmatpush1.bf16.msra.mxu0 %v1863
        %3095 = vmatprep.subr.bf16.mxu0 0
        %3096 = vmatpush1.bf16.msra.mxu0 %v1872
        %3097 = vmatprep.mubr.bf16.mxu0 %v794
        %3098 = vmatmul.mubr.bf16.gmra.mrb[0].mxu0 %v793
        %v3099 = vpop.f32.mrb[0].mxu0
        %v3100 = vadd.f32 0.0, %v3099
        %v3101 = vpop.f32.mrb[0].mxu0
        %v3102 = vpop.f32.mrb[0].mxu0
        %v3103 = vadd.f32 0.0, %v3102
        %v3104 = vpop.f32.mrb[0].mxu0
        %3105 = vmatprep.mubr.bf16.mxu0 %v797
        %3106 = vmatmul.mubr.bf16.gmra.mrb[0].mxu0 %v796
        %v3107 = vpop.f32.mrb[0].mxu0
        %v3108 = vadd.f32 0.0, %v3107
        %v3109 = vpop.f32.mrb[0].mxu0
        %v3110 = vpop.f32.mrb[0].mxu0
        %v3111 = vadd.f32 0.0, %v3110
        %v3112 = vpop.f32.mrb[0].mxu0
        %3113 = vmatprep.mubr.bf16.mxu0 %v800
        %3114 = vmatmul.mubr.bf16.gmra.mrb[0].mxu0 %v799
        %v3115 = vpop.f32.mrb[0].mxu0
        %v3116 = vadd.f32 0.0, %v3115
        %v3117 = vpop.f32.mrb[0].mxu0
        %v3118 = vpop.f32.mrb[0].mxu0
        %v3119 = vadd.f32 0.0, %v3118
        %v3120 = vpop.f32.mrb[0].mxu0
        %3121 = vmatprep.mubr.bf16.mxu0 %v803
        %3122 = vmatmul.mubr.bf16.gmra.mrb[0].mxu0 %v802
        %v3123 = vpop.f32.mrb[0].mxu0
        %v3124 = vadd.f32 0.0, %v3123
        %v3125 = vpop.f32.mrb[0].mxu0
        %v3126 = vpop.f32.mrb[0].mxu0
        %v3127 = vadd.f32 0.0, %v3126
        %v3128 = vpop.f32.mrb[0].mxu0
        %3129 = vmatprep.mubr.bf16.mxu0 %v806
        %3130 = vmatmul.mubr.bf16.gmra.mrb[0].mxu0 %v805
        %v3131 = vpop.f32.mrb[0].mxu0
        %v3132 = vadd.f32 0.0, %v3131
        %v3133 = vpop.f32.mrb[0].mxu0
        %v3134 = vpop.f32.mrb[0].mxu0
        %v3135 = vadd.f32 0.0, %v3134
        %v3136 = vpop.f32.mrb[0].mxu0
        %3137 = vmatprep.mubr.bf16.mxu0 %v809
        %3138 = vmatmul.mubr.bf16.gmra.mrb[0].mxu0 %v808
        %v3139 = vpop.f32.mrb[0].mxu0
        %v3140 = vadd.f32 0.0, %v3139
        %v3141 = vpop.f32.mrb[0].mxu0
        %v3142 = vpop.f32.mrb[0].mxu0
        %v3143 = vadd.f32 0.0, %v3142
        %v3144 = vpop.f32.mrb[0].mxu0
        %3145 = vmatprep.mubr.bf16.mxu0 %v812
        %3146 = vmatmul.mubr.bf16.gmra.mrb[0].mxu0 %v811
        %v3147 = vpop.f32.mrb[0].mxu0
        %v3148 = vadd.f32 0.0, %v3147
        %v3149 = vpop.f32.mrb[0].mxu0
        %v3150 = vpop.f32.mrb[0].mxu0
        %v3151 = vadd.f32 0.0, %v3150
        %v3152 = vpop.f32.mrb[0].mxu0
        %3153 = vmatprep.mubr.bf16.mxu0 %v815
        %3154 = vmatmul.mubr.bf16.gmra.mrb[0].mxu0 %v814
        %v3155 = vpop.f32.mrb[0].mxu0
        %v3156 = vadd.f32 0.0, %v3155
        %v3157 = vpop.f32.mrb[0].mxu0
        %v3158 = vpop.f32.mrb[0].mxu0
        %v3159 = vadd.f32 0.0, %v3158
        %v3160 = vpop.f32.mrb[0].mxu0
        %3161 = vdwg.mxu0
        %3162 = vmatprep.subr.bf16.mxu0 0
        %3163 = vmatpush1.bf16.msra.mxu0 %v1881
        %3164 = vmatprep.subr.bf16.mxu0 0
        %3165 = vmatpush1.bf16.msra.mxu0 %v1890
        %3166 = vmatprep.subr.bf16.mxu0 0
        %3167 = vmatpush1.bf16.msra.mxu0 %v1899
        %3168 = vmatprep.subr.bf16.mxu0 0
        %3169 = vmatpush1.bf16.msra.mxu0 %v1908
        %3170 = vmatprep.subr.bf16.mxu0 0
        %3171 = vmatpush1.bf16.msra.mxu0 %v1917
        %3172 = vmatprep.subr.bf16.mxu0 0
        %3173 = vmatpush1.bf16.msra.mxu0 %v1926
        %3174 = vmatprep.subr.bf16.mxu0 0
        %3175 = vmatpush1.bf16.msra.mxu0 %v1935
        %3176 = vmatprep.subr.bf16.mxu0 0
        %3177 = vmatpush1.bf16.msra.mxu0 %v1944
        %3178 = vmatprep.subr.bf16.mxu0 0
        %3179 = vmatpush1.bf16.msra.mxu0 0
        %3180 = vmatprep.subr.bf16.mxu0 0
        %3181 = vmatpush1.bf16.msra.mxu0 0
        %3182 = vmatprep.subr.bf16.mxu0 0
        %3183 = vmatpush1.bf16.msra.mxu0 0
        %3184 = vmatprep.subr.bf16.mxu0 0
        %3185 = vmatpush1.bf16.msra.mxu0 0
        %3186 = vmatprep.subr.bf16.mxu0 0
        %3187 = vmatpush1.bf16.msra.mxu0 0
        %3188 = vmatprep.subr.bf16.mxu0 0
        %3189 = vmatpush1.bf16.msra.mxu0 0
        %3190 = vmatprep.subr.bf16.mxu0 0
        %3191 = vmatpush1.bf16.msra.mxu0 0
        %3192 = vmatprep.subr.bf16.mxu0 0
        %3193 = vmatpush1.bf16.msra.mxu0 0
        %3194 = vmatprep.mubr.bf16.mxu0 0
        %3195 = vmatmul.mubr.bf16.gmra.mrb[0].mxu0 %v795
        %v3196 = vpop.f32.mrb[0].mxu0
        %v3197 = vadd.f32 %v3100, %v3196
        %v3198 = vpop.f32.mrb[0].mxu0
        %v3199 = vpop.f32.mrb[0].mxu0
        %v3200 = vadd.f32 %v3103, %v3199
        %v3201 = vpop.f32.mrb[0].mxu0
        %3202 = vmatprep.mubr.bf16.mxu0 0
        %3203 = vmatmul.mubr.bf16.gmra.mrb[0].mxu0 %v798
        %v3204 = vpop.f32.mrb[0].mxu0
        %v3205 = vadd.f32 %v3108, %v3204
        %v3206 = vpop.f32.mrb[0].mxu0
        %v3207 = vpop.f32.mrb[0].mxu0
        %v3208 = vadd.f32 %v3111, %v3207
        %v3209 = vpop.f32.mrb[0].mxu0
        %3210 = vmatprep.mubr.bf16.mxu0 0
        %3211 = vmatmul.mubr.bf16.gmra.mrb[0].mxu0 %v801
        %v3212 = vpop.f32.mrb[0].mxu0
        %v3213 = vadd.f32 %v3116, %v3212
        %v3214 = vpop.f32.mrb[0].mxu0
        %v3215 = vpop.f32.mrb[0].mxu0
        %v3216 = vadd.f32 %v3119, %v3215
        %v3217 = vpop.f32.mrb[0].mxu0
        %3218 = vmatprep.mubr.bf16.mxu0 0
        %3219 = vmatmul.mubr.bf16.gmra.mrb[0].mxu0 %v804
        %v3220 = vpop.f32.mrb[0].mxu0
        %v3221 = vadd.f32 %v3124, %v3220
        %v3222 = vpop.f32.mrb[0].mxu0
        %v3223 = vpop.f32.mrb[0].mxu0
        %v3224 = vadd.f32 %v3127, %v3223
        %v3225 = vpop.f32.mrb[0].mxu0
        %3226 = vmatprep.mubr.bf16.mxu0 0
        %3227 = vmatmul.mubr.bf16.gmra.mrb[0].mxu0 %v807
        %v3228 = vpop.f32.mrb[0].mxu0
        %v3229 = vadd.f32 %v3132, %v3228
        %v3230 = vpop.f32.mrb[0].mxu0
        %v3231 = vpop.f32.mrb[0].mxu0
        %v3232 = vadd.f32 %v3135, %v3231
        %v3233 = vpop.f32.mrb[0].mxu0
        %3234 = vmatprep.mubr.bf16.mxu0 0
        %3235 = vmatmul.mubr.bf16.gmra.mrb[0].mxu0 %v810
        %v3236 = vpop.f32.mrb[0].mxu0
        %v3237 = vadd.f32 %v3140, %v3236
        %v3238 = vpop.f32.mrb[0].mxu0
        %v3239 = vpop.f32.mrb[0].mxu0
        %v3240 = vadd.f32 %v3143, %v3239
        %v3241 = vpop.f32.mrb[0].mxu0
        %3242 = vmatprep.mubr.bf16.mxu0 0
        %3243 = vmatmul.mubr.bf16.gmra.mrb[0].mxu0 %v813
        %v3244 = vpop.f32.mrb[0].mxu0
        %v3245 = vadd.f32 %v3148, %v3244
        %v3246 = vpop.f32.mrb[0].mxu0
        %v3247 = vpop.f32.mrb[0].mxu0
        %v3248 = vadd.f32 %v3151, %v3247
        %v3249 = vpop.f32.mrb[0].mxu0
        %3250 = vmatprep.mubr.bf16.mxu0 0
        %3251 = vmatmul.mubr.bf16.gmra.mrb[0].mxu0 %v816
        %v3252 = vpop.f32.mrb[0].mxu0
        %v3253 = vadd.f32 %v3156, %v3252
        %v3254 = vpop.f32.mrb[0].mxu0
        %v3255 = vpop.f32.mrb[0].mxu0
        %v3256 = vadd.f32 %v3159, %v3255
        %v3257 = vpop.f32.mrb[0].mxu0
        %3258 = vdwg.mxu0
        %v3259 = vpack.c.bf16 %v2313, %v2309
        %v3260 = vpack.c.bf16 %v2315, %v2311
        %v3261 = vpack.c.bf16 %v2539, %v2535
        %v3262 = vpack.c.bf16 %v2541, %v2537
        %v3263 = vpack.c.bf16 %v2765, %v2761
        %v3264 = vpack.c.bf16 %v2767, %v2763
        %v3265 = vpack.c.bf16 %v2991, %v2987
        %v3266 = vpack.c.bf16 %v2993, %v2989
        %v3267 = vpack.c.bf16 %v3200, %v3197
        %v3268 = vpack.c.bf16 %v2323, %v2319
        %v3269 = vpack.c.bf16 %v2325, %v2321
        %v3270 = vpack.c.bf16 %v2549, %v2545
        %v3271 = vpack.c.bf16 %v2551, %v2547
        %v3272 = vpack.c.bf16 %v2775, %v2771
        %v3273 = vpack.c.bf16 %v2777, %v2773
        %v3274 = vpack.c.bf16 %v3001, %v2997
        %v3275 = vpack.c.bf16 %v3003, %v2999
        %v3276 = vpack.c.bf16 %v3208, %v3205
        %v3277 = vpack.c.bf16 %v2333, %v2329
        %v3278 = vpack.c.bf16 %v2335, %v2331
        %v3279 = vpack.c.bf16 %v2559, %v2555
        %v3280 = vpack.c.bf16 %v2561, %v2557
        %v3281 = vpack.c.bf16 %v2785, %v2781
        %v3282 = vpack.c.bf16 %v2787, %v2783
        %v3283 = vpack.c.bf16 %v3011, %v3007
        %v3284 = vpack.c.bf16 %v3013, %v3009
        %v3285 = vpack.c.bf16 %v3216, %v3213
        %v3286 = vpack.c.bf16 %v2343, %v2339
        %v3287 = vpack.c.bf16 %v2345, %v2341
        %v3288 = vpack.c.bf16 %v2569, %v2565
        %v3289 = vpack.c.bf16 %v2571, %v2567
        %v3290 = vpack.c.bf16 %v2795, %v2791
        %v3291 = vpack.c.bf16 %v2797, %v2793
        %v3292 = vpack.c.bf16 %v3021, %v3017
        %v3293 = vpack.c.bf16 %v3023, %v3019
        %v3294 = vpack.c.bf16 %v3224, %v3221
        %v3295 = vpack.c.bf16 %v2353, %v2349
        %v3296 = vpack.c.bf16 %v2355, %v2351
        %v3297 = vpack.c.bf16 %v2579, %v2575
        %v3298 = vpack.c.bf16 %v2581, %v2577
        %v3299 = vpack.c.bf16 %v2805, %v2801
        %v3300 = vpack.c.bf16 %v2807, %v2803
        %v3301 = vpack.c.bf16 %v3031, %v3027
        %v3302 = vpack.c.bf16 %v3033, %v3029
        %v3303 = vpack.c.bf16 %v3232, %v3229
        %v3304 = vpack.c.bf16 %v2363, %v2359
        %v3305 = vpack.c.bf16 %v2365, %v2361
        %v3306 = vpack.c.bf16 %v2589, %v2585
        %v3307 = vpack.c.bf16 %v2591, %v2587
        %v3308 = vpack.c.bf16 %v2815, %v2811
        %v3309 = vpack.c.bf16 %v2817, %v2813
        %v3310 = vpack.c.bf16 %v3041, %v3037
        %v3311 = vpack.c.bf16 %v3043, %v3039
        %v3312 = vpack.c.bf16 %v3240, %v3237
        %v3313 = vpack.c.bf16 %v2373, %v2369
        %v3314 = vpack.c.bf16 %v2375, %v2371
        %v3315 = vpack.c.bf16 %v2599, %v2595
        %v3316 = vpack.c.bf16 %v2601, %v2597
        %v3317 = vpack.c.bf16 %v2825, %v2821
        %v3318 = vpack.c.bf16 %v2827, %v2823
        %v3319 = vpack.c.bf16 %v3051, %v3047
        %v3320 = vpack.c.bf16 %v3053, %v3049
        %v3321 = vpack.c.bf16 %v3248, %v3245
        %v3322 = vpack.c.bf16 %v2383, %v2379
        %v3323 = vpack.c.bf16 %v2385, %v2381
        %v3324 = vpack.c.bf16 %v2609, %v2605
        %v3325 = vpack.c.bf16 %v2611, %v2607
        %v3326 = vpack.c.bf16 %v2835, %v2831
        %v3327 = vpack.c.bf16 %v2837, %v2833
        %v3328 = vpack.c.bf16 %v3061, %v3057
        %v3329 = vpack.c.bf16 %v3063, %v3059
        %v3330 = vpack.c.bf16 %v3256, %v3253
        %v3403 = vunpack.c.l.b16 %v3259
        %v3404 = vunpack.c.l.b16 %v3260
        %v3405 = vunpack.c.l.b16 %v3261
        %v3406 = vunpack.c.l.b16 %v3262
        %v3407 = vunpack.c.l.b16 %v3263
        %v3408 = vunpack.c.l.b16 %v3264
        %v3409 = vunpack.c.l.b16 %v3265
        %v3410 = vunpack.c.l.b16 %v3266
        %v3411 = vunpack.c.l.b16 %v3267
        %v3412 = vunpack.c.h.b16 %v3259
        %v3413 = vunpack.c.h.b16 %v3260
        %v3414 = vunpack.c.h.b16 %v3261
        %v3415 = vunpack.c.h.b16 %v3262
        %v3416 = vunpack.c.h.b16 %v3263
        %v3417 = vunpack.c.h.b16 %v3264
        %v3418 = vunpack.c.h.b16 %v3265
        %v3419 = vunpack.c.h.b16 %v3266
        %v3420 = vunpack.c.h.b16 %v3267
        %v3421 = vunpack.c.l.b16 %v3268
        %v3422 = vunpack.c.l.b16 %v3269
        %v3423 = vunpack.c.l.b16 %v3270
        %v3424 = vunpack.c.l.b16 %v3271
        %v3425 = vunpack.c.l.b16 %v3272
        %v3426 = vunpack.c.l.b16 %v3273
        %v3427 = vunpack.c.l.b16 %v3274
        %v3428 = vunpack.c.l.b16 %v3275
        %v3429 = vunpack.c.l.b16 %v3276
        %v3430 = vunpack.c.h.b16 %v3268
        %v3431 = vunpack.c.h.b16 %v3269
        %v3432 = vunpack.c.h.b16 %v3270
        %v3433 = vunpack.c.h.b16 %v3271
        %v3434 = vunpack.c.h.b16 %v3272
        %v3435 = vunpack.c.h.b16 %v3273
        %v3436 = vunpack.c.h.b16 %v3274
        %v3437 = vunpack.c.h.b16 %v3275
        %v3438 = vunpack.c.h.b16 %v3276
        %v3439 = vunpack.c.l.b16 %v3277
        %v3440 = vunpack.c.l.b16 %v3278
        %v3441 = vunpack.c.l.b16 %v3279
        %v3442 = vunpack.c.l.b16 %v3280
        %v3443 = vunpack.c.l.b16 %v3281
        %v3444 = vunpack.c.l.b16 %v3282
        %v3445 = vunpack.c.l.b16 %v3283
        %v3446 = vunpack.c.l.b16 %v3284
        %v3447 = vunpack.c.l.b16 %v3285
        %v3448 = vunpack.c.h.b16 %v3277
        %v3449 = vunpack.c.h.b16 %v3278
        %v3450 = vunpack.c.h.b16 %v3279
        %v3451 = vunpack.c.h.b16 %v3280
        %v3452 = vunpack.c.h.b16 %v3281
        %v3453 = vunpack.c.h.b16 %v3282
        %v3454 = vunpack.c.h.b16 %v3283
        %v3455 = vunpack.c.h.b16 %v3284
        %v3456 = vunpack.c.h.b16 %v3285
        %v3457 = vunpack.c.l.b16 %v3286
        %v3458 = vunpack.c.l.b16 %v3287
        %v3459 = vunpack.c.l.b16 %v3288
        %v3460 = vunpack.c.l.b16 %v3289
        %v3461 = vunpack.c.l.b16 %v3290
        %v3462 = vunpack.c.l.b16 %v3291
        %v3463 = vunpack.c.l.b16 %v3292
        %v3464 = vunpack.c.l.b16 %v3293
        %v3465 = vunpack.c.l.b16 %v3294
        %v3466 = vunpack.c.h.b16 %v3286
        %v3467 = vunpack.c.h.b16 %v3287
        %v3468 = vunpack.c.h.b16 %v3288
        %v3469 = vunpack.c.h.b16 %v3289
        %v3470 = vunpack.c.h.b16 %v3290
        %v3471 = vunpack.c.h.b16 %v3291
        %v3472 = vunpack.c.h.b16 %v3292
        %v3473 = vunpack.c.h.b16 %v3293
        %v3474 = vunpack.c.h.b16 %v3294
        %v3475 = vunpack.c.l.b16 %v3295
        %v3476 = vunpack.c.l.b16 %v3296
        %v3477 = vunpack.c.l.b16 %v3297
        %v3478 = vunpack.c.l.b16 %v3298
        %v3479 = vunpack.c.l.b16 %v3299
        %v3480 = vunpack.c.l.b16 %v3300
        %v3481 = vunpack.c.l.b16 %v3301
        %v3482 = vunpack.c.l.b16 %v3302
        %v3483 = vunpack.c.l.b16 %v3303
        %v3484 = vunpack.c.h.b16 %v3295
        %v3485 = vunpack.c.h.b16 %v3296
        %v3486 = vunpack.c.h.b16 %v3297
        %v3487 = vunpack.c.h.b16 %v3298
        %v3488 = vunpack.c.h.b16 %v3299
        %v3489 = vunpack.c.h.b16 %v3300
        %v3490 = vunpack.c.h.b16 %v3301
        %v3491 = vunpack.c.h.b16 %v3302
        %v3492 = vunpack.c.h.b16 %v3303
        %v3493 = vunpack.c.l.b16 %v3304
        %v3494 = vunpack.c.l.b16 %v3305
        %v3495 = vunpack.c.l.b16 %v3306
        %v3496 = vunpack.c.l.b16 %v3307
        %v3497 = vunpack.c.l.b16 %v3308
        %v3498 = vunpack.c.l.b16 %v3309
        %v3499 = vunpack.c.l.b16 %v3310
        %v3500 = vunpack.c.l.b16 %v3311
        %v3501 = vunpack.c.l.b16 %v3312
        %v3502 = vunpack.c.h.b16 %v3304
        %v3503 = vunpack.c.h.b16 %v3305
        %v3504 = vunpack.c.h.b16 %v3306
        %v3505 = vunpack.c.h.b16 %v3307
        %v3506 = vunpack.c.h.b16 %v3308
        %v3507 = vunpack.c.h.b16 %v3309
        %v3508 = vunpack.c.h.b16 %v3310
        %v3509 = vunpack.c.h.b16 %v3311
        %v3510 = vunpack.c.h.b16 %v3312
        %v3511 = vunpack.c.l.b16 %v3313
        %v3512 = vunpack.c.l.b16 %v3314
        %v3513 = vunpack.c.l.b16 %v3315
        %v3514 = vunpack.c.l.b16 %v3316
        %v3515 = vunpack.c.l.b16 %v3317
        %v3516 = vunpack.c.l.b16 %v3318
        %v3517 = vunpack.c.l.b16 %v3319
        %v3518 = vunpack.c.l.b16 %v3320
        %v3519 = vunpack.c.l.b16 %v3321
        %v3520 = vunpack.c.h.b16 %v3313
        %v3521 = vunpack.c.h.b16 %v3314
        %v3522 = vunpack.c.h.b16 %v3315
        %v3523 = vunpack.c.h.b16 %v3316
        %v3524 = vunpack.c.h.b16 %v3317
        %v3525 = vunpack.c.h.b16 %v3318
        %v3526 = vunpack.c.h.b16 %v3319
        %v3527 = vunpack.c.h.b16 %v3320
        %v3528 = vunpack.c.h.b16 %v3321
        %v3529 = vunpack.c.l.b16 %v3322
        %v3530 = vunpack.c.l.b16 %v3323
        %v3531 = vunpack.c.l.b16 %v3324
        %v3532 = vunpack.c.l.b16 %v3325
        %v3533 = vunpack.c.l.b16 %v3326
        %v3534 = vunpack.c.l.b16 %v3327
        %v3535 = vunpack.c.l.b16 %v3328
        %v3536 = vunpack.c.l.b16 %v3329
        %v3537 = vunpack.c.l.b16 %v3330
        %v3538 = vunpack.c.h.b16 %v3322
        %v3539 = vunpack.c.h.b16 %v3323
        %v3540 = vunpack.c.h.b16 %v3324
        %v3541 = vunpack.c.h.b16 %v3325
        %v3542 = vunpack.c.h.b16 %v3326
        %v3543 = vunpack.c.h.b16 %v3327
        %v3544 = vunpack.c.h.b16 %v3328
        %v3545 = vunpack.c.h.b16 %v3329
        %v3546 = vunpack.c.h.b16 %v3330
        %v3547 = vpack.c.b16 %v3404, %v3403
        %v3548 = vpack.c.b16 %v3406, %v3405
        %v3549 = vpack.c.b16 %v3408, %v3407
        %v3550 = vpack.c.b16 %v3410, %v3409
        %v3551 = vpack.c.b16 %v3411, %v3411
        %v3552 = vpack.c.b16 %v3413, %v3412
        %v3553 = vpack.c.b16 %v3415, %v3414
        %v3554 = vpack.c.b16 %v3417, %v3416
        %v3555 = vpack.c.b16 %v3419, %v3418
        %v3556 = vpack.c.b16 %v3420, %v3420
        %v3557 = vpack.c.b16 %v3422, %v3421
        %v3558 = vpack.c.b16 %v3424, %v3423
        %v3559 = vpack.c.b16 %v3426, %v3425
        %v3560 = vpack.c.b16 %v3428, %v3427
        %v3561 = vpack.c.b16 %v3429, %v3429
        %v3562 = vpack.c.b16 %v3431, %v3430
        %v3563 = vpack.c.b16 %v3433, %v3432
        %v3564 = vpack.c.b16 %v3435, %v3434
        %v3565 = vpack.c.b16 %v3437, %v3436
        %v3566 = vpack.c.b16 %v3438, %v3438
        %v3567 = vpack.c.b16 %v3440, %v3439
        %v3568 = vpack.c.b16 %v3442, %v3441
        %v3569 = vpack.c.b16 %v3444, %v3443
        %v3570 = vpack.c.b16 %v3446, %v3445
        %v3571 = vpack.c.b16 %v3447, %v3447
        %v3572 = vpack.c.b16 %v3449, %v3448
        %v3573 = vpack.c.b16 %v3451, %v3450
        %v3574 = vpack.c.b16 %v3453, %v3452
        %v3575 = vpack.c.b16 %v3455, %v3454
        %v3576 = vpack.c.b16 %v3456, %v3456
        %v3577 = vpack.c.b16 %v3458, %v3457
        %v3578 = vpack.c.b16 %v3460, %v3459
        %v3579 = vpack.c.b16 %v3462, %v3461
        %v3580 = vpack.c.b16 %v3464, %v3463
        %v3581 = vpack.c.b16 %v3465, %v3465
        %v3582 = vpack.c.b16 %v3467, %v3466
        %v3583 = vpack.c.b16 %v3469, %v3468
        %v3584 = vpack.c.b16 %v3471, %v3470
        %v3585 = vpack.c.b16 %v3473, %v3472
        %v3586 = vpack.c.b16 %v3474, %v3474
        %v3587 = vpack.c.b16 %v3476, %v3475
        %v3588 = vpack.c.b16 %v3478, %v3477
        %v3589 = vpack.c.b16 %v3480, %v3479
        %v3590 = vpack.c.b16 %v3482, %v3481
        %v3591 = vpack.c.b16 %v3483, %v3483
        %v3592 = vpack.c.b16 %v3485, %v3484
        %v3593 = vpack.c.b16 %v3487, %v3486
        %v3594 = vpack.c.b16 %v3489, %v3488
        %v3595 = vpack.c.b16 %v3491, %v3490
        %v3596 = vpack.c.b16 %v3492, %v3492
        %v3597 = vpack.c.b16 %v3494, %v3493
        %v3598 = vpack.c.b16 %v3496, %v3495
        %v3599 = vpack.c.b16 %v3498, %v3497
        %v3600 = vpack.c.b16 %v3500, %v3499
        %v3601 = vpack.c.b16 %v3501, %v3501
        %v3602 = vpack.c.b16 %v3503, %v3502
        %v3603 = vpack.c.b16 %v3505, %v3504
        %v3604 = vpack.c.b16 %v3507, %v3506
        %v3605 = vpack.c.b16 %v3509, %v3508
        %v3606 = vpack.c.b16 %v3510, %v3510
        %v3607 = vpack.c.b16 %v3512, %v3511
        %v3608 = vpack.c.b16 %v3514, %v3513
        %v3609 = vpack.c.b16 %v3516, %v3515
        %v3610 = vpack.c.b16 %v3518, %v3517
        %v3611 = vpack.c.b16 %v3519, %v3519
        %v3612 = vpack.c.b16 %v3521, %v3520
        %v3613 = vpack.c.b16 %v3523, %v3522
        %v3614 = vpack.c.b16 %v3525, %v3524
        %v3615 = vpack.c.b16 %v3527, %v3526
        %v3616 = vpack.c.b16 %v3528, %v3528
        %v3617 = vpack.c.b16 %v3530, %v3529
        %v3618 = vpack.c.b16 %v3532, %v3531
        %v3619 = vpack.c.b16 %v3534, %v3533
        %v3620 = vpack.c.b16 %v3536, %v3535
        %v3621 = vpack.c.b16 %v3537, %v3537
        %v3622 = vpack.c.b16 %v3539, %v3538
        %v3623 = vpack.c.b16 %v3541, %v3540
        %v3624 = vpack.c.b16 %v3543, %v3542
        %v3625 = vpack.c.b16 %v3545, %v3544
        %v3626 = vpack.c.b16 %v3546, %v3546
        %3707 = vst [vmem:[%s274] sm:$0xff] %v3547
        %3708 = vst [vmem:[%s274 + $0x8] sm:$0xff] %v3548
        %3709 = vst [vmem:[%s274 + $0x10] sm:$0xff] %v3549
        %3710 = vst [vmem:[%s274 + $0x18] sm:$0xff] %v3550
        %3711 = vst [vmem:[%s274 + $0x20] sm:$0xf] %v3551
        %3712 = vst [vmem:[%s274 + $0x24] sm:$0xff] %v3552
        %3713 = vst [vmem:[%s274 + $0x2c] sm:$0xff] %v3553
        %3714 = vst [vmem:[%s274 + $0x34] sm:$0xff] %v3554
        %3715 = vst [vmem:[%s274 + $0x3c] sm:$0xff] %v3555
        %3716 = vst [vmem:[%s274 + $0x44] sm:$0xf] %v3556
        %3717 = vst [vmem:[%s274 + $0x48] sm:$0xff] %v3557
        %3718 = vst [vmem:[%s274 + $0x50] sm:$0xff] %v3558
        %3719 = vst [vmem:[%s274 + $0x58] sm:$0xff] %v3559
        %3720 = vst [vmem:[%s274 + $0x60] sm:$0xff] %v3560
        %3721 = vst [vmem:[%s274 + $0x68] sm:$0xf] %v3561
        %3722 = vst [vmem:[%s274 + $0x6c] sm:$0xff] %v3562
        %3723 = vst [vmem:[%s274 + $0x74] sm:$0xff] %v3563
        %3724 = vst [vmem:[%s274 + $0x7c] sm:$0xff] %v3564
        %3725 = vst [vmem:[%s274 + $0x84] sm:$0xff] %v3565
        %3726 = vst [vmem:[%s274 + $0x8c] sm:$0xf] %v3566
        %3727 = vst [vmem:[%s274 + $0x90] sm:$0xff] %v3567
        %3728 = vst [vmem:[%s274 + $0x98] sm:$0xff] %v3568
        %3729 = vst [vmem:[%s274 + $0xa0] sm:$0xff] %v3569
        %3730 = vst [vmem:[%s274 + $0xa8] sm:$0xff] %v3570
        %3731 = vst [vmem:[%s274 + $0xb0] sm:$0xf] %v3571
        %3732 = vst [vmem:[%s274 + $0xb4] sm:$0xff] %v3572
        %3733 = vst [vmem:[%s274 + $0xbc] sm:$0xff] %v3573
        %3734 = vst [vmem:[%s274 + $0xc4] sm:$0xff] %v3574
        %3735 = vst [vmem:[%s274 + $0xcc] sm:$0xff] %v3575
        %3736 = vst [vmem:[%s274 + $0xd4] sm:$0xf] %v3576
        %3737 = vst [vmem:[%s274 + $0xd8] sm:$0xff] %v3577
        %3738 = vst [vmem:[%s274 + $0xe0] sm:$0xff] %v3578
        %3739 = vst [vmem:[%s274 + $0xe8] sm:$0xff] %v3579
        %3740 = vst [vmem:[%s274 + $0xf0] sm:$0xff] %v3580
        %3741 = vst [vmem:[%s274 + $0xf8] sm:$0xf] %v3581
        %3742 = vst [vmem:[%s274 + $0xfc] sm:$0xff] %v3582
        %3743 = vst [vmem:[%s274 + $0x104] sm:$0xff] %v3583
        %3744 = vst [vmem:[%s274 + $0x10c] sm:$0xff] %v3584
        %3745 = vst [vmem:[%s274 + $0x114] sm:$0xff] %v3585
        %3746 = vst [vmem:[%s274 + $0x11c] sm:$0xf] %v3586
        %3747 = vst [vmem:[%s274 + $0x120] sm:$0xff] %v3587
        %3748 = vst [vmem:[%s274 + $0x128] sm:$0xff] %v3588
        %3749 = vst [vmem:[%s274 + $0x130] sm:$0xff] %v3589
        %3750 = vst [vmem:[%s274 + $0x138] sm:$0xff] %v3590
        %3751 = vst [vmem:[%s274 + $0x140] sm:$0xf] %v3591
        %3752 = vst [vmem:[%s274 + $0x144] sm:$0xff] %v3592
        %3753 = vst [vmem:[%s274 + $0x14c] sm:$0xff] %v3593
        %3754 = vst [vmem:[%s274 + $0x154] sm:$0xff] %v3594
        %3755 = vst [vmem:[%s274 + $0x15c] sm:$0xff] %v3595
        %3756 = vst [vmem:[%s274 + $0x164] sm:$0xf] %v3596
        %3757 = vst [vmem:[%s274 + $0x168] sm:$0xff] %v3597
        %3758 = vst [vmem:[%s274 + $0x170] sm:$0xff] %v3598
        %3759 = vst [vmem:[%s274 + $0x178] sm:$0xff] %v3599
        %3760 = vst [vmem:[%s274 + $0x180] sm:$0xff] %v3600
        %3761 = vst [vmem:[%s274 + $0x188] sm:$0xf] %v3601
        %3762 = vst [vmem:[%s274 + $0x18c] sm:$0xff] %v3602
        %3763 = vst [vmem:[%s274 + $0x194] sm:$0xff] %v3603
        %3764 = vst [vmem:[%s274 + $0x19c] sm:$0xff] %v3604
        %3765 = vst [vmem:[%s274 + $0x1a4] sm:$0xff] %v3605
        %3766 = vst [vmem:[%s274 + $0x1ac] sm:$0xf] %v3606
        %3767 = vst [vmem:[%s274 + $0x1b0] sm:$0xff] %v3607
        %3768 = vst [vmem:[%s274 + $0x1b8] sm:$0xff] %v3608
        %3769 = vst [vmem:[%s274 + $0x1c0] sm:$0xff] %v3609
        %3770 = vst [vmem:[%s274 + $0x1c8] sm:$0xff] %v3610
        %3771 = vst [vmem:[%s274 + $0x1d0] sm:$0xf] %v3611
        %3772 = vst [vmem:[%s274 + $0x1d4] sm:$0xff] %v3612
        %3773 = vst [vmem:[%s274 + $0x1dc] sm:$0xff] %v3613
        %3774 = vst [vmem:[%s274 + $0x1e4] sm:$0xff] %v3614
        %3775 = vst [vmem:[%s274 + $0x1ec] sm:$0xff] %v3615
        %3776 = vst [vmem:[%s274 + $0x1f4] sm:$0xf] %v3616
        %3777 = vst [vmem:[%s274 + $0x1f8] sm:$0xff] %v3617
        %3778 = vst [vmem:[%s274 + $0x200] sm:$0xff] %v3618
        %3779 = vst [vmem:[%s274 + $0x208] sm:$0xff] %v3619
        %3780 = vst [vmem:[%s274 + $0x210] sm:$0xff] %v3620
        %3781 = vst [vmem:[%s274 + $0x218] sm:$0xf] %v3621
        %3782 = vst [vmem:[%s274 + $0x21c] sm:$0xff] %v3622
        %3783 = vst [vmem:[%s274 + $0x224] sm:$0xff] %v3623
        %3784 = vst [vmem:[%s274 + $0x22c] sm:$0xff] %v3624
        %3785 = vst [vmem:[%s274 + $0x234] sm:$0xff] %v3625
        %3786 = vst [vmem:[%s274 + $0x23c] sm:$0xf] %v3626
        %s3787 = sand.u32 %s136, 1
        %s3788 = scalar_lea.sflag [#allocation4], %s3787
        %s3789 = sand.u32 %s136, 1
        %s3790 = smul.addr %s3789, 576
        %s3791 = scalar_lea.vmem [#allocation10], %s3790
        // Predicated region
        $region53: #{tpu_custom_call.1} parent=35 // pred_check
          %p3792 = pneg %p146
        $region54: #{tpu_custom_call.1} parent=35 // pred_check_branch
          %3794 = sbr.rel (%p3792) target = $region56
        $region55: #{tpu_custom_call.1} parent=35 // pred_region
          %s3795 = smul.u32 16, %s28
          %s3797 = ssub.s32 9216, 9216
          %3798 = vsyncadd %s3788, %s3797
          %s3799 = smul.addr %s3795, 9
          %s3800 = smul.addr %s27, 288
          %s3801 = sadd.s32 %s3799, %s3800
          %s3802 = smul.addr %s3801, 64
          %s3803 = scalar_lea.hbm %s4, %s3802
          %s3804 = sshll.u32 %s3791, 4
          %s3805 = int_to_ptr.vmem [resolvable:$true] %s3804
          %3810 = dma.vmem_to_hbm [thread:$0]  %s3805, 9216, %s3803, %s3788, 576, 576, 36
        $region56: #{tpu_custom_call.1} parent=35 // pred_fallthru
          _
      $region36: #{tpu_custom_call.1} parent=5 // pred_fallthru
        _
      %p3811 = scmp.le.s32.totalorder 2, %s18
      // Predicated region
      $region57: #{tpu_custom_call.1} parent=5 // pred_check
        %p3812 = pneg %p3811
      $region58: #{tpu_custom_call.1} parent=5 // pred_check_branch
        %3814 = sbr.rel (%p3812) target = $region60
      $region59: #{tpu_custom_call.1} parent=5 // pred_region
        %s3815 = ssub.s32 %s18, 2
        // Predicated region
        $region61: #{tpu_custom_call.1} parent=59 // pred_check
          %p3816 = pneg %p152
        $region62: #{tpu_custom_call.1} parent=59 // pred_check_branch
          %3818 = sbr.rel (%p3816) target = $region64
        $region63: #{tpu_custom_call.1} parent=59 // pred_region
          %s3819 = sand.u32 %s137, 1
          %s3820 = scalar_lea.sflag [#allocation4], %s3819
          %s3821 = sand.u32 %s137, 1
          %s3822 = smul.addr %s3821, 576
          %s3823 = scalar_lea.vmem [#allocation10], %s3822
          %3824 = dma.done %s3820, 9216
        $region64: #{tpu_custom_call.1} parent=59 // pred_fallthru
          _
      $region60: #{tpu_custom_call.1} parent=5 // pred_fallthru
        _
    $region6: #{tpu_custom_call.1} parent=1 // loop_footer
      %s22 = sadd.s32 1, %s18
    $region7: #{tpu_custom_call.1} parent=1 // loop_footer_branch
      %17 = sbr.rel target = $region3
    $region8: #{tpu_custom_call.1} parent=1 // loop_exit
      _
    %3825 = vsyncpa [#allocation3], 1
    %s3826 = scalar_lea.sflag [#allocation3], 1
    %3827 = vsyncpa %s3826, 1
    %3828 = vsyncpa [#allocation6], 1
    %3829 = vsyncpa [#allocation9], 1
    %3830 = vsyncpa [#allocation4], 1
    %s3831 = scalar_lea.sflag [#allocation4], 1
    %3832 = vsyncpa %s3831, 1

</llo_original>
